<compile_context>
chip_gen: v7x
topology: tpu7x:2x2x1
jax: 0.10.0
libtpu: 0.0.40
codegen_flags: <defaults>
</compile_context>

<pallas_src>
import functools
import math

import jax
import jax.numpy as jnp
from jax.experimental import pallas as pl
from jax.experimental.pallas import tpu as pltpu


B_TILE = 8       # batch rows per grid step (one sublane tile)
OUT_PAD = 128    # FC output padded to a full lane width


def fused_nn_kernel(n_layers, hidden_dim, seq_len, x_ref, *rest):
    """Fused forward pass for one B_TILE batch tile.

    x_ref     : (1, S*B_TILE, E)   bf16   rows ordered (t, b) = t*B_TILE + b
    per layer : wih  (in, 8H)      bf16   cols [fwd i,f,g,o | bwd i,f,g,o]
                whh  (2H, 8H)      bf16   block_diag(whh_f, whh_b)
                bias (1, 8H)       f32    (b_ih + b_hh, fwd then bwd)
    wfc       : (2H, OUT_PAD)      bf16   rows [fwd H | bwd H]
    bfc       : (1, OUT_PAD)       f32
    y_ref     : (B_TILE, OUT_PAD)  f32    (output)
    xproj_ref : (S*B_TILE, 8H)     f32    scratch (hoisted input projection)
    hs_ref    : (S*B_TILE, 2H)     bf16   scratch (layer outputs, [fwd | bwd])
    """
    H = hidden_dim
    S = seq_len
    B = B_TILE

    layer_refs = [rest[3 * l:3 * l + 3] for l in range(n_layers)]
    wfc_ref, bfc_ref, y_ref, xproj_ref, hs_ref = rest[3 * n_layers:]

    h_f = h_b = None
    for layer in range(n_layers):
        wih_ref, whh_ref, bias_ref = layer_refs[layer]

        # ---- hoisted input projection (off the serial path): ONE MXU matmul
        # covering the whole sequence and BOTH directions.  Stored to an
        # aligned (S*B, 8H) scratch so per-step reads are full sublane slabs
        # and xproj is not a live traced value across the unrolled loop.
        inp = x_ref[0] if layer == 0 else hs_ref[...]
        xproj_ref[...] = (jnp.dot(inp, wih_ref[...],
                                  preferred_element_type=jnp.float32)
                          + bias_ref[...])

        whh = whh_ref[...]                                  # (2H, 8H) block-diag

        h_cat = jnp.zeros((B, 2 * H), jnp.float32)
        c_f = jnp.zeros((B, H), jnp.float32)
        c_b = jnp.zeros((B, H), jnp.float32)

        # ---- serial recurrence, statically unrolled (S is small & static).
        # Forward walks t = 0..S-1, backward walks tb = S-1..0 in the same loop.
        # TODO(synk): switch to lax.fori_loop(..., unroll=2-4) if S grows > ~32.
        for t in range(S):
            tb = S - 1 - t

            # single fused MXU push for both directions' recurrent gates
            gz = jnp.dot(h_cat.astype(jnp.bfloat16), whh,
                         preferred_element_type=jnp.float32)        # (B, 8H)
            gx = jnp.concatenate(
                [xproj_ref[t * B:(t + 1) * B, 0:4 * H],              # fwd @ t
                 xproj_ref[tb * B:(tb + 1) * B, 4 * H:8 * H]],       # bwd @ tb
                axis=-1)
            gates = gx + gz                                          # (B, 8H)

            # two full-width activations over the gate vregs, then cheap
            # VPU slice extraction (gate order per direction: i, f, g, o)
            sg = jax.nn.sigmoid(gates)
            tg = jnp.tanh(gates)
            c_f = sg[:, 1 * H:2 * H] * c_f + sg[:, 0 * H:1 * H] * tg[:, 2 * H:3 * H]
            c_b = sg[:, 5 * H:6 * H] * c_b + sg[:, 4 * H:5 * H] * tg[:, 6 * H:7 * H]
            h_f = sg[:, 3 * H:4 * H] * jnp.tanh(c_f)
            h_b = sg[:, 7 * H:8 * H] * jnp.tanh(c_b)
            h_cat = jnp.concatenate([h_f, h_b], axis=-1)

            # layer outputs -> time-consistent bf16 scratch (off the
            # dependence chain; sublane-aligned row slabs)
            hs_ref[t * B:(t + 1) * B, 0:H] = h_f.astype(jnp.bfloat16)
            hs_ref[tb * B:(tb + 1) * B, H:2 * H] = h_b.astype(jnp.bfloat16)

    # ---- attention over the last layer's outputs (f32 math) ----------------
    # lstm_output[t] = [fwd_t | bwd_t];  hidden_cat = [hidden[-1], hidden[-2]]
    #                                               = [bwd_final | fwd_final]
    hvec = jnp.concatenate([h_b, h_f], axis=-1)             # (B, 2H) f32

    scores = []
    for s in range(S):
        o_s = hs_ref[s * B:(s + 1) * B, :].astype(jnp.float32)      # (B, 2H)
        scores.append(jnp.sum(o_s * hvec, axis=-1, keepdims=True))  # (B, 1)
    attn = jnp.concatenate(scores, axis=-1)                          # (B, S)
    attn = attn - jnp.max(attn, axis=-1, keepdims=True)
    e = jnp.exp(attn)
    soft = e * pl.reciprocal(jnp.sum(e, axis=-1, keepdims=True), approx=True)

    ctx = jnp.zeros((B, 2 * H), jnp.float32)
    for s in range(S):
        o_s = hs_ref[s * B:(s + 1) * B, :].astype(jnp.float32)
        ctx = ctx + o_s * soft[:, s:s + 1]                           # (B, 2H)

    y = (jnp.dot(ctx.astype(jnp.bfloat16), wfc_ref[...],
                 preferred_element_type=jnp.float32) + bfc_ref[...])
    y_ref[...] = jax.nn.sigmoid(y)


# ----------------------------------------------------------------------------
# Wrapper
# ----------------------------------------------------------------------------
def nn_forward(text, params, *, n_layers, hidden_dim, output_dim):
    """text: (B, S) int32 token ids -> (B, output_dim) sigmoid scores."""
    emb_table = params["emb"]
    B, S = text.shape
    H = hidden_dim
    E = emb_table.shape[1]
    nb = pl.cdiv(B, B_TILE)
    b_pad = nb * B_TILE

    # Embedding lookup stays in XLA (data-dependent gather).
    # TODO(synk): nn.Dropout is identity (eval-mode semantics); no RNG masking.
    x = jnp.take(emb_table, text, axis=0)                    # (B, S, E)
    x = jnp.transpose(x, (1, 0, 2))                          # (S, B, E)
    x = jnp.pad(x, ((0, 0), (0, b_pad - B), (0, 0)))         # pad batch to 8k
    # -> (nb, S*B_TILE, E), rows inside a tile ordered (t, b_local)
    x = (x.reshape(S, nb, B_TILE, E)
          .transpose(1, 0, 2, 3)
          .reshape(nb, S * B_TILE, E)
          .astype(jnp.bfloat16))

    inputs = [x]
    for lp in params["lstm"]:
        inputs += list(lp)
    inputs += [params["wfc"], params["bfc"]]

    def full2d(a):
        return pl.BlockSpec(a.shape, lambda b: (0, 0))

    in_specs = [pl.BlockSpec((1, S * B_TILE, E), lambda b: (b, 0, 0))]
    in_specs += [full2d(a) for a in inputs[1:]]

    y_pad = pl.pallas_call(
        functools.partial(fused_nn_kernel, n_layers, H, S),
        grid=(nb,),
        out_shape=jax.ShapeDtypeStruct((b_pad, OUT_PAD), jnp.float32),
        in_specs=in_specs,
        out_specs=pl.BlockSpec((B_TILE, OUT_PAD), lambda b: (b, 0)),
        scratch_shapes=[
            pltpu.VMEM((S * B_TILE, 8 * H), jnp.float32),    # xproj
            pltpu.VMEM((S * B_TILE, 2 * H), jnp.bfloat16),   # layer outputs
        ],
        compiler_params=pltpu.CompilerParams(
            dimension_semantics=("parallel",)),
    )(*inputs)
    return y_pad[:B, :output_dim]


# ----------------------------------------------------------------------------
# Parameter init (mirrors the PyTorch module's shapes; gate order i, f, g, o)
# ----------------------------------------------------------------------------
def init_params(key, vocab_size, embedding_dim, hidden_dim, output_dim,
                n_layers, pad_idx, out_pad=OUT_PAD):
    H = hidden_dim
    k = 1.0 / math.sqrt(H)

    def uni(key, shape):
        return jax.random.uniform(key, shape, jnp.float32, -k, k)

    keys = iter(jax.random.split(key, 3 + n_layers * 8))

    emb = jax.random.normal(next(keys), (vocab_size, embedding_dim),
                            jnp.float32) * 0.1
    emb = emb.at[pad_idx].set(0.0)           # padding_idx row is zeros

    lstm = []
    for layer in range(n_layers):
        in_dim = embedding_dim if layer == 0 else 2 * H
        wih_t, whh_t, biases = [], [], []
        for _direction in range(2):          # forward, backward
            w_ih = uni(next(keys), (4 * H, in_dim))   # PyTorch layout (i,f,g,o)
            w_hh = uni(next(keys), (4 * H, H))
            b_ih = uni(next(keys), (4 * H,))
            b_hh = uni(next(keys), (4 * H,))
            wih_t.append(w_ih.T)                      # (in, 4H)
            whh_t.append(w_hh.T)                      # (H, 4H)
            biases.append(b_ih + b_hh)
        wih = jnp.concatenate(wih_t, axis=1).astype(jnp.bfloat16)   # (in, 8H)
        whh_bd = jnp.zeros((2 * H, 8 * H), jnp.float32)             # block-diag
        whh_bd = whh_bd.at[:H, :4 * H].set(whh_t[0])
        whh_bd = whh_bd.at[H:, 4 * H:].set(whh_t[1])
        bias = jnp.concatenate(biases).reshape(1, 8 * H)            # f32
        lstm.append((wih, whh_bd.astype(jnp.bfloat16), bias))

    w_fc = uni(next(keys), (output_dim, 2 * H))
    b_fc = uni(next(keys), (output_dim,))
    wfc = jnp.zeros((2 * H, out_pad), jnp.float32).at[:, :output_dim].set(w_fc.T)
    bfc = jnp.zeros((1, out_pad), jnp.float32).at[0, :output_dim].set(b_fc)

    return {"emb": emb, "lstm": lstm,
            "wfc": wfc.astype(jnp.bfloat16), "bfc": bfc}


# ----------------------------------------------------------------------------
if __name__ == "__main__":
    VOCAB, EMB, HID, OUT = 50, 32, 32, 1
    N_LAYERS, PAD_IDX = 2, 0
    BATCH, SEQ = 2, 8

    key = jax.random.PRNGKey(0)
    k_param, k_text = jax.random.split(key)

    params = init_params(k_param, VOCAB, EMB, HID, OUT, N_LAYERS, PAD_IDX)
    text = jax.random.randint(k_text, (BATCH, SEQ), 0, VOCAB, jnp.int32)

    fwd = jax.jit(functools.partial(nn_forward, n_layers=N_LAYERS,
                                    hidden_dim=HID, output_dim=OUT))
    out = jax.block_until_ready(fwd(text, params))

    assert out.shape == (BATCH, OUT)
    assert bool(jnp.all(jnp.isfinite(out)))
    assert bool(jnp.all((out >= 0.0) & (out <= 1.0)))
    print("KERNEL_OK")
</pallas_src>

<mosaic_0001>
module attributes {stable_mosaic.version = 11 : i64} {
  func.func @fused_nn_kernel(%arg0: i32, %arg1: memref<1x64x32xbf16, #tpu.memory_space<vmem>>, %arg2: memref<32x256xbf16, #tpu.memory_space<vmem>>, %arg3: memref<64x256xbf16, #tpu.memory_space<vmem>>, %arg4: memref<1x256xf32, #tpu.memory_space<vmem>>, %arg5: memref<64x256xbf16, #tpu.memory_space<vmem>>, %arg6: memref<64x256xbf16, #tpu.memory_space<vmem>>, %arg7: memref<1x256xf32, #tpu.memory_space<vmem>>, %arg8: memref<64x128xbf16, #tpu.memory_space<vmem>>, %arg9: memref<1x128xf32, #tpu.memory_space<vmem>>, %arg10: memref<8x128xf32, #tpu.memory_space<vmem>>, %arg11: memref<64x256xf32, #tpu.memory_space<vmem>>, %arg12: memref<64x64xbf16, #tpu.memory_space<vmem>>) attributes {dimension_semantics = [#tpu.dimension_semantics<parallel>], iteration_bounds = array<i64: 1>, scalar_prefetch = 0 : i64, scratch_operands = 2 : i64, tpu.core_type = #tpu.core_type<tc>, window_params = [{transform_indices = @transform_0, window_bounds = array<i64: 1, 64, 32>}, {pipeline_mode = #tpu.pipeline_mode<synchronous>, transform_indices = @transform_1, window_bounds = array<i64: 32, 256>}, {pipeline_mode = #tpu.pipeline_mode<synchronous>, transform_indices = @transform_2, window_bounds = array<i64: 64, 256>}, {pipeline_mode = #tpu.pipeline_mode<synchronous>, transform_indices = @transform_3, window_bounds = array<i64: 1, 256>}, {pipeline_mode = #tpu.pipeline_mode<synchronous>, transform_indices = @transform_4, window_bounds = array<i64: 64, 256>}, {pipeline_mode = #tpu.pipeline_mode<synchronous>, transform_indices = @transform_5, window_bounds = array<i64: 64, 256>}, {pipeline_mode = #tpu.pipeline_mode<synchronous>, transform_indices = @transform_6, window_bounds = array<i64: 1, 256>}, {pipeline_mode = #tpu.pipeline_mode<synchronous>, transform_indices = @transform_7, window_bounds = array<i64: 64, 128>}, {pipeline_mode = #tpu.pipeline_mode<synchronous>, transform_indices = @transform_8, window_bounds = array<i64: 1, 128>}, {transform_indices = @transform_9, window_bounds = array<i64: 8, 128>}]} {
    %c0 = arith.constant 0 : index
    %c0_0 = arith.constant 0 : index
    %c0_1 = arith.constant 0 : index
    %0 = vector.load %arg1[%c0, %c0_0, %c0_1] : memref<1x64x32xbf16, #tpu.memory_space<vmem>>, vector<1x64x32xbf16>
    %1 = vector.shape_cast %0 : vector<1x64x32xbf16> to vector<64x32xbf16>
    %c0_2 = arith.constant 0 : index
    %c0_3 = arith.constant 0 : index
    %2 = vector.load %arg2[%c0_2, %c0_3] : memref<32x256xbf16, #tpu.memory_space<vmem>>, vector<32x256xbf16>
    %cst = arith.constant dense<0.000000e+00> : vector<64x256xf32>
    %3 = tpu.matmul %1, %2, %cst {dimension_numbers = #tpu.dot_dimension_numbers<[1], [0], [0], [1], [0, 0, 1, 1], [], []>} : vector<64x32xbf16>, vector<32x256xbf16>, vector<64x256xf32> -> vector<64x256xf32>
    %c0_4 = arith.constant 0 : index
    %c0_5 = arith.constant 0 : index
    %4 = vector.load %arg4[%c0_4, %c0_5] : memref<1x256xf32, #tpu.memory_space<vmem>>, vector<1x256xf32>
    %5 = vector.broadcast %4 : vector<1x256xf32> to vector<64x256xf32>
    %6 = arith.addf %3, %5 : vector<64x256xf32>
    %c0_6 = arith.constant 0 : index
    %c0_7 = arith.constant 0 : index
    %7 = vector.load %arg11[%c0_6, %c0_7] : memref<64x256xf32, #tpu.memory_space<vmem>>, vector<64x256xf32>
    tpu.vector_store %arg11[%c0_6, %c0_7], %6 {strides = array<i32>} : memref<64x256xf32, #tpu.memory_space<vmem>>, vector<64x256xf32>,
    %c0_8 = arith.constant 0 : index
    %c0_9 = arith.constant 0 : index
    %8 = vector.load %arg3[%c0_8, %c0_9] : memref<64x256xbf16, #tpu.memory_space<vmem>>, vector<64x256xbf16>
    %cst_10 = arith.constant 0.000000e+00 : f32
    %9 = vector.broadcast %cst_10 : f32 to vector<8x64xf32>
    %cst_11 = arith.constant 0.000000e+00 : f32
    %10 = vector.broadcast %cst_11 : f32 to vector<8x32xf32>
    %cst_12 = arith.constant 0.000000e+00 : f32
    %11 = vector.broadcast %cst_12 : f32 to vector<8x32xf32>
    %12 = arith.truncf %9 : vector<8x64xf32> to vector<8x64xbf16>
    %cst_13 = arith.constant dense<0.000000e+00> : vector<8x256xf32>
    %13 = tpu.matmul %12, %8, %cst_13 {dimension_numbers = #tpu.dot_dimension_numbers<[1], [0], [0], [1], [0, 0, 1, 1], [], []>} : vector<8x64xbf16>, vector<64x256xbf16>, vector<8x256xf32> -> vector<8x256xf32>
    %c0_14 = arith.constant 0 : index
    %c0_15 = arith.constant 0 : index
    %14 = vector.load %arg11[%c0_14, %c0_15] : memref<64x256xf32, #tpu.memory_space<vmem>>, vector<8x128xf32>
    %c56 = arith.constant 56 : index
    %c128 = arith.constant 128 : index
    %15 = vector.load %arg11[%c56, %c128] : memref<64x256xf32, #tpu.memory_space<vmem>>, vector<8x128xf32>
    %16 = tpu.concatenate %14, %15 in 1 : vector<8x128xf32>, vector<8x128xf32> -> vector<8x256xf32>
    %17 = arith.addf %16, %13 : vector<8x256xf32>
    %18 = arith.negf %17 : vector<8x256xf32>
    %19 = math.exp %18 : vector<8x256xf32>
    %cst_16 = arith.constant 1.000000e+00 : f32
    %20 = vector.broadcast %cst_16 : f32 to vector<8x256xf32>
    %21 = arith.addf %20, %19 : vector<8x256xf32>
    %22 = arith.divf %20, %21 : vector<8x256xf32>
    %23 = math.tanh %17 : vector<8x256xf32>
    %24 = vector.extract_strided_slice %22 {offsets = [0, 32], sizes = [8, 32], strides = [1, 1]} : vector<8x256xf32> to vector<8x32xf32>
    %25 = arith.mulf %24, %10 : vector<8x32xf32>
    %26 = vector.extract_strided_slice %22 {offsets = [0, 0], sizes = [8, 32], strides = [1, 1]} : vector<8x256xf32> to vector<8x32xf32>
    %27 = vector.extract_strided_slice %23 {offsets = [0, 64], sizes = [8, 32], strides = [1, 1]} : vector<8x256xf32> to vector<8x32xf32>
    %28 = arith.mulf %26, %27 : vector<8x32xf32>
    %29 = arith.addf %25, %28 : vector<8x32xf32>
    %30 = vector.extract_strided_slice %22 {offsets = [0, 160], sizes = [8, 32], strides = [1, 1]} : vector<8x256xf32> to vector<8x32xf32>
    %31 = arith.mulf %30, %11 : vector<8x32xf32>
    %32 = vector.extract_strided_slice %22 {offsets = [0, 128], sizes = [8, 32], strides = [1, 1]} : vector<8x256xf32> to vector<8x32xf32>
    %33 = vector.extract_strided_slice %23 {offsets = [0, 192], sizes = [8, 32], strides = [1, 1]} : vector<8x256xf32> to vector<8x32xf32>
    %34 = arith.mulf %32, %33 : vector<8x32xf32>
    %35 = arith.addf %31, %34 : vector<8x32xf32>
    %36 = vector.extract_strided_slice %22 {offsets = [0, 96], sizes = [8, 32], strides = [1, 1]} : vector<8x256xf32> to vector<8x32xf32>
    %37 = math.tanh %29 : vector<8x32xf32>
    %38 = arith.mulf %36, %37 : vector<8x32xf32>
    %39 = vector.extract_strided_slice %22 {offsets = [0, 224], sizes = [8, 32], strides = [1, 1]} : vector<8x256xf32> to vector<8x32xf32>
    %40 = math.tanh %35 : vector<8x32xf32>
    %41 = arith.mulf %39, %40 : vector<8x32xf32>
    %42 = tpu.concatenate %38, %41 in 1 : vector<8x32xf32>, vector<8x32xf32> -> vector<8x64xf32>
    %43 = arith.truncf %38 : vector<8x32xf32> to vector<8x32xbf16>
    %c0_17 = arith.constant 0 : index
    %c0_18 = arith.constant 0 : index
    %44 = vector.load %arg12[%c0_17, %c0_18] : memref<64x64xbf16, #tpu.memory_space<vmem>>, vector<8x32xbf16>
    tpu.vector_store %arg12[%c0_17, %c0_18], %43 {strides = array<i32>} : memref<64x64xbf16, #tpu.memory_space<vmem>>, vector<8x32xbf16>,
    %45 = arith.truncf %41 : vector<8x32xf32> to vector<8x32xbf16>
    %c56_19 = arith.constant 56 : index
    %c32 = arith.constant 32 : index
    %46 = vector.load %arg12[%c56_19, %c32] : memref<64x64xbf16, #tpu.memory_space<vmem>>, vector<8x32xbf16>
    tpu.vector_store %arg12[%c56_19, %c32], %45 {strides = array<i32>} : memref<64x64xbf16, #tpu.memory_space<vmem>>, vector<8x32xbf16>,
    %47 = arith.truncf %42 : vector<8x64xf32> to vector<8x64xbf16>
    %cst_20 = arith.constant dense<0.000000e+00> : vector<8x256xf32>
    %48 = tpu.matmul %47, %8, %cst_20 {dimension_numbers = #tpu.dot_dimension_numbers<[1], [0], [0], [1], [0, 0, 1, 1], [], []>} : vector<8x64xbf16>, vector<64x256xbf16>, vector<8x256xf32> -> vector<8x256xf32>
    %c8 = arith.constant 8 : index
    %c0_21 = arith.constant 0 : index
    %49 = vector.load %arg11[%c8, %c0_21] : memref<64x256xf32, #tpu.memory_space<vmem>>, vector<8x128xf32>
    %c48 = arith.constant 48 : index
    %c128_22 = arith.constant 128 : index
    %50 = vector.load %arg11[%c48, %c128_22] : memref<64x256xf32, #tpu.memory_space<vmem>>, vector<8x128xf32>
    %51 = tpu.concatenate %49, %50 in 1 : vector<8x128xf32>, vector<8x128xf32> -> vector<8x256xf32>
    %52 = arith.addf %51, %48 : vector<8x256xf32>
    %53 = arith.negf %52 : vector<8x256xf32>
    %54 = math.exp %53 : vector<8x256xf32>
    %cst_23 = arith.constant 1.000000e+00 : f32
    %55 = vector.broadcast %cst_23 : f32 to vector<8x256xf32>
    %56 = arith.addf %55, %54 : vector<8x256xf32>
    %57 = arith.divf %55, %56 : vector<8x256xf32>
    %58 = math.tanh %52 : vector<8x256xf32>
    %59 = vector.extract_strided_slice %57 {offsets = [0, 32], sizes = [8, 32], strides = [1, 1]} : vector<8x256xf32> to vector<8x32xf32>
    %60 = arith.mulf %59, %29 : vector<8x32xf32>
    %61 = vector.extract_strided_slice %57 {offsets = [0, 0], sizes = [8, 32], strides = [1, 1]} : vector<8x256xf32> to vector<8x32xf32>
    %62 = vector.extract_strided_slice %58 {offsets = [0, 64], sizes = [8, 32], strides = [1, 1]} : vector<8x256xf32> to vector<8x32xf32>
    %63 = arith.mulf %61, %62 : vector<8x32xf32>
    %64 = arith.addf %60, %63 : vector<8x32xf32>
    %65 = vector.extract_strided_slice %57 {offsets = [0, 160], sizes = [8, 32], strides = [1, 1]} : vector<8x256xf32> to vector<8x32xf32>
    %66 = arith.mulf %65, %35 : vector<8x32xf32>
    %67 = vector.extract_strided_slice %57 {offsets = [0, 128], sizes = [8, 32], strides = [1, 1]} : vector<8x256xf32> to vector<8x32xf32>
    %68 = vector.extract_strided_slice %58 {offsets = [0, 192], sizes = [8, 32], strides = [1, 1]} : vector<8x256xf32> to vector<8x32xf32>
    %69 = arith.mulf %67, %68 : vector<8x32xf32>
    %70 = arith.addf %66, %69 : vector<8x32xf32>
    %71 = vector.extract_strided_slice %57 {offsets = [0, 96], sizes = [8, 32], strides = [1, 1]} : vector<8x256xf32> to vector<8x32xf32>
    %72 = math.tanh %64 : vector<8x32xf32>
    %73 = arith.mulf %71, %72 : vector<8x32xf32>
    %74 = vector.extract_strided_slice %57 {offsets = [0, 224], sizes = [8, 32], strides = [1, 1]} : vector<8x256xf32> to vector<8x32xf32>
    %75 = math.tanh %70 : vector<8x32xf32>
    %76 = arith.mulf %74, %75 : vector<8x32xf32>
    %77 = tpu.concatenate %73, %76 in 1 : vector<8x32xf32>, vector<8x32xf32> -> vector<8x64xf32>
    %78 = arith.truncf %73 : vector<8x32xf32> to vector<8x32xbf16>
    %c8_24 = arith.constant 8 : index
    %c0_25 = arith.constant 0 : index
    %79 = vector.load %arg12[%c8_24, %c0_25] : memref<64x64xbf16, #tpu.memory_space<vmem>>, vector<8x32xbf16>
    tpu.vector_store %arg12[%c8_24, %c0_25], %78 {strides = array<i32>} : memref<64x64xbf16, #tpu.memory_space<vmem>>, vector<8x32xbf16>,
    %80 = arith.truncf %76 : vector<8x32xf32> to vector<8x32xbf16>
    %c48_26 = arith.constant 48 : index
    %c32_27 = arith.constant 32 : index
    %81 = vector.load %arg12[%c48_26, %c32_27] : memref<64x64xbf16, #tpu.memory_space<vmem>>, vector<8x32xbf16>
    tpu.vector_store %arg12[%c48_26, %c32_27], %80 {strides = array<i32>} : memref<64x64xbf16, #tpu.memory_space<vmem>>, vector<8x32xbf16>,
    %82 = arith.truncf %77 : vector<8x64xf32> to vector<8x64xbf16>
    %cst_28 = arith.constant dense<0.000000e+00> : vector<8x256xf32>
    %83 = tpu.matmul %82, %8, %cst_28 {dimension_numbers = #tpu.dot_dimension_numbers<[1], [0], [0], [1], [0, 0, 1, 1], [], []>} : vector<8x64xbf16>, vector<64x256xbf16>, vector<8x256xf32> -> vector<8x256xf32>
    %c16 = arith.constant 16 : index
    %c0_29 = arith.constant 0 : index
    %84 = vector.load %arg11[%c16, %c0_29] : memref<64x256xf32, #tpu.memory_space<vmem>>, vector<8x128xf32>
    %c40 = arith.constant 40 : index
    %c128_30 = arith.constant 128 : index
    %85 = vector.load %arg11[%c40, %c128_30] : memref<64x256xf32, #tpu.memory_space<vmem>>, vector<8x128xf32>
    %86 = tpu.concatenate %84, %85 in 1 : vector<8x128xf32>, vector<8x128xf32> -> vector<8x256xf32>
    %87 = arith.addf %86, %83 : vector<8x256xf32>
    %88 = arith.negf %87 : vector<8x256xf32>
    %89 = math.exp %88 : vector<8x256xf32>
    %cst_31 = arith.constant 1.000000e+00 : f32
    %90 = vector.broadcast %cst_31 : f32 to vector<8x256xf32>
    %91 = arith.addf %90, %89 : vector<8x256xf32>
    %92 = arith.divf %90, %91 : vector<8x256xf32>
    %93 = math.tanh %87 : vector<8x256xf32>
    %94 = vector.extract_strided_slice %92 {offsets = [0, 32], sizes = [8, 32], strides = [1, 1]} : vector<8x256xf32> to vector<8x32xf32>
    %95 = arith.mulf %94, %64 : vector<8x32xf32>
    %96 = vector.extract_strided_slice %92 {offsets = [0, 0], sizes = [8, 32], strides = [1, 1]} : vector<8x256xf32> to vector<8x32xf32>
    %97 = vector.extract_strided_slice %93 {offsets = [0, 64], sizes = [8, 32], strides = [1, 1]} : vector<8x256xf32> to vector<8x32xf32>
    %98 = arith.mulf %96, %97 : vector<8x32xf32>
    %99 = arith.addf %95, %98 : vector<8x32xf32>
    %100 = vector.extract_strided_slice %92 {offsets = [0, 160], sizes = [8, 32], strides = [1, 1]} : vector<8x256xf32> to vector<8x32xf32>
    %101 = arith.mulf %100, %70 : vector<8x32xf32>
    %102 = vector.extract_strided_slice %92 {offsets = [0, 128], sizes = [8, 32], strides = [1, 1]} : vector<8x256xf32> to vector<8x32xf32>
    %103 = vector.extract_strided_slice %93 {offsets = [0, 192], sizes = [8, 32], strides = [1, 1]} : vector<8x256xf32> to vector<8x32xf32>
    %104 = arith.mulf %102, %103 : vector<8x32xf32>
    %105 = arith.addf %101, %104 : vector<8x32xf32>
    %106 = vector.extract_strided_slice %92 {offsets = [0, 96], sizes = [8, 32], strides = [1, 1]} : vector<8x256xf32> to vector<8x32xf32>
    %107 = math.tanh %99 : vector<8x32xf32>
    %108 = arith.mulf %106, %107 : vector<8x32xf32>
    %109 = vector.extract_strided_slice %92 {offsets = [0, 224], sizes = [8, 32], strides = [1, 1]} : vector<8x256xf32> to vector<8x32xf32>
    %110 = math.tanh %105 : vector<8x32xf32>
    %111 = arith.mulf %109, %110 : vector<8x32xf32>
    %112 = tpu.concatenate %108, %111 in 1 : vector<8x32xf32>, vector<8x32xf32> -> vector<8x64xf32>
    %113 = arith.truncf %108 : vector<8x32xf32> to vector<8x32xbf16>
    %c16_32 = arith.constant 16 : index
    %c0_33 = arith.constant 0 : index
    %114 = vector.load %arg12[%c16_32, %c0_33] : memref<64x64xbf16, #tpu.memory_space<vmem>>, vector<8x32xbf16>
    tpu.vector_store %arg12[%c16_32, %c0_33], %113 {strides = array<i32>} : memref<64x64xbf16, #tpu.memory_space<vmem>>, vector<8x32xbf16>,
    %115 = arith.truncf %111 : vector<8x32xf32> to vector<8x32xbf16>
    %c40_34 = arith.constant 40 : index
    %c32_35 = arith.constant 32 : index
    %116 = vector.load %arg12[%c40_34, %c32_35] : memref<64x64xbf16, #tpu.memory_space<vmem>>, vector<8x32xbf16>
    tpu.vector_store %arg12[%c40_34, %c32_35], %115 {strides = array<i32>} : memref<64x64xbf16, #tpu.memory_space<vmem>>, vector<8x32xbf16>,
    %117 = arith.truncf %112 : vector<8x64xf32> to vector<8x64xbf16>
    %cst_36 = arith.constant dense<0.000000e+00> : vector<8x256xf32>
    %118 = tpu.matmul %117, %8, %cst_36 {dimension_numbers = #tpu.dot_dimension_numbers<[1], [0], [0], [1], [0, 0, 1, 1], [], []>} : vector<8x64xbf16>, vector<64x256xbf16>, vector<8x256xf32> -> vector<8x256xf32>
    %c24 = arith.constant 24 : index
    %c0_37 = arith.constant 0 : index
    %119 = vector.load %arg11[%c24, %c0_37] : memref<64x256xf32, #tpu.memory_space<vmem>>, vector<8x128xf32>
    %c32_38 = arith.constant 32 : index
    %c128_39 = arith.constant 128 : index
    %120 = vector.load %arg11[%c32_38, %c128_39] : memref<64x256xf32, #tpu.memory_space<vmem>>, vector<8x128xf32>
    %121 = tpu.concatenate %119, %120 in 1 : vector<8x128xf32>, vector<8x128xf32> -> vector<8x256xf32>
    %122 = arith.addf %121, %118 : vector<8x256xf32>
    %123 = arith.negf %122 : vector<8x256xf32>
    %124 = math.exp %123 : vector<8x256xf32>
    %cst_40 = arith.constant 1.000000e+00 : f32
    %125 = vector.broadcast %cst_40 : f32 to vector<8x256xf32>
    %126 = arith.addf %125, %124 : vector<8x256xf32>
    %127 = arith.divf %125, %126 : vector<8x256xf32>
    %128 = math.tanh %122 : vector<8x256xf32>
    %129 = vector.extract_strided_slice %127 {offsets = [0, 32], sizes = [8, 32], strides = [1, 1]} : vector<8x256xf32> to vector<8x32xf32>
    %130 = arith.mulf %129, %99 : vector<8x32xf32>
    %131 = vector.extract_strided_slice %127 {offsets = [0, 0], sizes = [8, 32], strides = [1, 1]} : vector<8x256xf32> to vector<8x32xf32>
    %132 = vector.extract_strided_slice %128 {offsets = [0, 64], sizes = [8, 32], strides = [1, 1]} : vector<8x256xf32> to vector<8x32xf32>
    %133 = arith.mulf %131, %132 : vector<8x32xf32>
    %134 = arith.addf %130, %133 : vector<8x32xf32>
    %135 = vector.extract_strided_slice %127 {offsets = [0, 160], sizes = [8, 32], strides = [1, 1]} : vector<8x256xf32> to vector<8x32xf32>
    %136 = arith.mulf %135, %105 : vector<8x32xf32>
    %137 = vector.extract_strided_slice %127 {offsets = [0, 128], sizes = [8, 32], strides = [1, 1]} : vector<8x256xf32> to vector<8x32xf32>
    %138 = vector.extract_strided_slice %128 {offsets = [0, 192], sizes = [8, 32], strides = [1, 1]} : vector<8x256xf32> to vector<8x32xf32>
    %139 = arith.mulf %137, %138 : vector<8x32xf32>
    %140 = arith.addf %136, %139 : vector<8x32xf32>
    %141 = vector.extract_strided_slice %127 {offsets = [0, 96], sizes = [8, 32], strides = [1, 1]} : vector<8x256xf32> to vector<8x32xf32>
    %142 = math.tanh %134 : vector<8x32xf32>
    %143 = arith.mulf %141, %142 : vector<8x32xf32>
    %144 = vector.extract_strided_slice %127 {offsets = [0, 224], sizes = [8, 32], strides = [1, 1]} : vector<8x256xf32> to vector<8x32xf32>
    %145 = math.tanh %140 : vector<8x32xf32>
    %146 = arith.mulf %144, %145 : vector<8x32xf32>
    %147 = tpu.concatenate %143, %146 in 1 : vector<8x32xf32>, vector<8x32xf32> -> vector<8x64xf32>
    %148 = arith.truncf %143 : vector<8x32xf32> to vector<8x32xbf16>
    %c24_41 = arith.constant 24 : index
    %c0_42 = arith.constant 0 : index
    %149 = vector.load %arg12[%c24_41, %c0_42] : memref<64x64xbf16, #tpu.memory_space<vmem>>, vector<8x32xbf16>
    tpu.vector_store %arg12[%c24_41, %c0_42], %148 {strides = array<i32>} : memref<64x64xbf16, #tpu.memory_space<vmem>>, vector<8x32xbf16>,
    %150 = arith.truncf %146 : vector<8x32xf32> to vector<8x32xbf16>
    %c32_43 = arith.constant 32 : index
    %c32_44 = arith.constant 32 : index
    %151 = vector.load %arg12[%c32_43, %c32_44] : memref<64x64xbf16, #tpu.memory_space<vmem>>, vector<8x32xbf16>
    tpu.vector_store %arg12[%c32_43, %c32_44], %150 {strides = array<i32>} : memref<64x64xbf16, #tpu.memory_space<vmem>>, vector<8x32xbf16>,
    %152 = arith.truncf %147 : vector<8x64xf32> to vector<8x64xbf16>
    %cst_45 = arith.constant dense<0.000000e+00> : vector<8x256xf32>
    %153 = tpu.matmul %152, %8, %cst_45 {dimension_numbers = #tpu.dot_dimension_numbers<[1], [0], [0], [1], [0, 0, 1, 1], [], []>} : vector<8x64xbf16>, vector<64x256xbf16>, vector<8x256xf32> -> vector<8x256xf32>
    %c32_46 = arith.constant 32 : index
    %c0_47 = arith.constant 0 : index
    %154 = vector.load %arg11[%c32_46, %c0_47] : memref<64x256xf32, #tpu.memory_space<vmem>>, vector<8x128xf32>
    %c24_48 = arith.constant 24 : index
    %c128_49 = arith.constant 128 : index
    %155 = vector.load %arg11[%c24_48, %c128_49] : memref<64x256xf32, #tpu.memory_space<vmem>>, vector<8x128xf32>
    %156 = tpu.concatenate %154, %155 in 1 : vector<8x128xf32>, vector<8x128xf32> -> vector<8x256xf32>
    %157 = arith.addf %156, %153 : vector<8x256xf32>
    %158 = arith.negf %157 : vector<8x256xf32>
    %159 = math.exp %158 : vector<8x256xf32>
    %cst_50 = arith.constant 1.000000e+00 : f32
    %160 = vector.broadcast %cst_50 : f32 to vector<8x256xf32>
    %161 = arith.addf %160, %159 : vector<8x256xf32>
    %162 = arith.divf %160, %161 : vector<8x256xf32>
    %163 = math.tanh %157 : vector<8x256xf32>
    %164 = vector.extract_strided_slice %162 {offsets = [0, 32], sizes = [8, 32], strides = [1, 1]} : vector<8x256xf32> to vector<8x32xf32>
    %165 = arith.mulf %164, %134 : vector<8x32xf32>
    %166 = vector.extract_strided_slice %162 {offsets = [0, 0], sizes = [8, 32], strides = [1, 1]} : vector<8x256xf32> to vector<8x32xf32>
    %167 = vector.extract_strided_slice %163 {offsets = [0, 64], sizes = [8, 32], strides = [1, 1]} : vector<8x256xf32> to vector<8x32xf32>
    %168 = arith.mulf %166, %167 : vector<8x32xf32>
    %169 = arith.addf %165, %168 : vector<8x32xf32>
    %170 = vector.extract_strided_slice %162 {offsets = [0, 160], sizes = [8, 32], strides = [1, 1]} : vector<8x256xf32> to vector<8x32xf32>
    %171 = arith.mulf %170, %140 : vector<8x32xf32>
    %172 = vector.extract_strided_slice %162 {offsets = [0, 128], sizes = [8, 32], strides = [1, 1]} : vector<8x256xf32> to vector<8x32xf32>
    %173 = vector.extract_strided_slice %163 {offsets = [0, 192], sizes = [8, 32], strides = [1, 1]} : vector<8x256xf32> to vector<8x32xf32>
    %174 = arith.mulf %172, %173 : vector<8x32xf32>
    %175 = arith.addf %171, %174 : vector<8x32xf32>
    %176 = vector.extract_strided_slice %162 {offsets = [0, 96], sizes = [8, 32], strides = [1, 1]} : vector<8x256xf32> to vector<8x32xf32>
    %177 = math.tanh %169 : vector<8x32xf32>
    %178 = arith.mulf %176, %177 : vector<8x32xf32>
    %179 = vector.extract_strided_slice %162 {offsets = [0, 224], sizes = [8, 32], strides = [1, 1]} : vector<8x256xf32> to vector<8x32xf32>
    %180 = math.tanh %175 : vector<8x32xf32>
    %181 = arith.mulf %179, %180 : vector<8x32xf32>
    %182 = tpu.concatenate %178, %181 in 1 : vector<8x32xf32>, vector<8x32xf32> -> vector<8x64xf32>
    %183 = arith.truncf %178 : vector<8x32xf32> to vector<8x32xbf16>
    %c32_51 = arith.constant 32 : index
    %c0_52 = arith.constant 0 : index
    %184 = vector.load %arg12[%c32_51, %c0_52] : memref<64x64xbf16, #tpu.memory_space<vmem>>, vector<8x32xbf16>
    tpu.vector_store %arg12[%c32_51, %c0_52], %183 {strides = array<i32>} : memref<64x64xbf16, #tpu.memory_space<vmem>>, vector<8x32xbf16>,
    %185 = arith.truncf %181 : vector<8x32xf32> to vector<8x32xbf16>
    %c24_53 = arith.constant 24 : index
    %c32_54 = arith.constant 32 : index
    %186 = vector.load %arg12[%c24_53, %c32_54] : memref<64x64xbf16, #tpu.memory_space<vmem>>, vector<8x32xbf16>
    tpu.vector_store %arg12[%c24_53, %c32_54], %185 {strides = array<i32>} : memref<64x64xbf16, #tpu.memory_space<vmem>>, vector<8x32xbf16>,
    %187 = arith.truncf %182 : vector<8x64xf32> to vector<8x64xbf16>
    %cst_55 = arith.constant dense<0.000000e+00> : vector<8x256xf32>
    %188 = tpu.matmul %187, %8, %cst_55 {dimension_numbers = #tpu.dot_dimension_numbers<[1], [0], [0], [1], [0, 0, 1, 1], [], []>} : vector<8x64xbf16>, vector<64x256xbf16>, vector<8x256xf32> -> vector<8x256xf32>
    %c40_56 = arith.constant 40 : index
    %c0_57 = arith.constant 0 : index
    %189 = vector.load %arg11[%c40_56, %c0_57] : memref<64x256xf32, #tpu.memory_space<vmem>>, vector<8x128xf32>
    %c16_58 = arith.constant 16 : index
    %c128_59 = arith.constant 128 : index
    %190 = vector.load %arg11[%c16_58, %c128_59] : memref<64x256xf32, #tpu.memory_space<vmem>>, vector<8x128xf32>
    %191 = tpu.concatenate %189, %190 in 1 : vector<8x128xf32>, vector<8x128xf32> -> vector<8x256xf32>
    %192 = arith.addf %191, %188 : vector<8x256xf32>
    %193 = arith.negf %192 : vector<8x256xf32>
    %194 = math.exp %193 : vector<8x256xf32>
    %cst_60 = arith.constant 1.000000e+00 : f32
    %195 = vector.broadcast %cst_60 : f32 to vector<8x256xf32>
    %196 = arith.addf %195, %194 : vector<8x256xf32>
    %197 = arith.divf %195, %196 : vector<8x256xf32>
    %198 = math.tanh %192 : vector<8x256xf32>
    %199 = vector.extract_strided_slice %197 {offsets = [0, 32], sizes = [8, 32], strides = [1, 1]} : vector<8x256xf32> to vector<8x32xf32>
    %200 = arith.mulf %199, %169 : vector<8x32xf32>
    %201 = vector.extract_strided_slice %197 {offsets = [0, 0], sizes = [8, 32], strides = [1, 1]} : vector<8x256xf32> to vector<8x32xf32>
    %202 = vector.extract_strided_slice %198 {offsets = [0, 64], sizes = [8, 32], strides = [1, 1]} : vector<8x256xf32> to vector<8x32xf32>
    %203 = arith.mulf %201, %202 : vector<8x32xf32>
    %204 = arith.addf %200, %203 : vector<8x32xf32>
    %205 = vector.extract_strided_slice %197 {offsets = [0, 160], sizes = [8, 32], strides = [1, 1]} : vector<8x256xf32> to vector<8x32xf32>
    %206 = arith.mulf %205, %175 : vector<8x32xf32>
    %207 = vector.extract_strided_slice %197 {offsets = [0, 128], sizes = [8, 32], strides = [1, 1]} : vector<8x256xf32> to vector<8x32xf32>
    %208 = vector.extract_strided_slice %198 {offsets = [0, 192], sizes = [8, 32], strides = [1, 1]} : vector<8x256xf32> to vector<8x32xf32>
    %209 = arith.mulf %207, %208 : vector<8x32xf32>
    %210 = arith.addf %206, %209 : vector<8x32xf32>
    %211 = vector.extract_strided_slice %197 {offsets = [0, 96], sizes = [8, 32], strides = [1, 1]} : vector<8x256xf32> to vector<8x32xf32>
    %212 = math.tanh %204 : vector<8x32xf32>
    %213 = arith.mulf %211, %212 : vector<8x32xf32>
    %214 = vector.extract_strided_slice %197 {offsets = [0, 224], sizes = [8, 32], strides = [1, 1]} : vector<8x256xf32> to vector<8x32xf32>
    %215 = math.tanh %210 : vector<8x32xf32>
    %216 = arith.mulf %214, %215 : vector<8x32xf32>
    %217 = tpu.concatenate %213, %216 in 1 : vector<8x32xf32>, vector<8x32xf32> -> vector<8x64xf32>
    %218 = arith.truncf %213 : vector<8x32xf32> to vector<8x32xbf16>
    %c40_61 = arith.constant 40 : index
    %c0_62 = arith.constant 0 : index
    %219 = vector.load %arg12[%c40_61, %c0_62] : memref<64x64xbf16, #tpu.memory_space<vmem>>, vector<8x32xbf16>
    tpu.vector_store %arg12[%c40_61, %c0_62], %218 {strides = array<i32>} : memref<64x64xbf16, #tpu.memory_space<vmem>>, vector<8x32xbf16>,
    %220 = arith.truncf %216 : vector<8x32xf32> to vector<8x32xbf16>
    %c16_63 = arith.constant 16 : index
    %c32_64 = arith.constant 32 : index
    %221 = vector.load %arg12[%c16_63, %c32_64] : memref<64x64xbf16, #tpu.memory_space<vmem>>, vector<8x32xbf16>
    tpu.vector_store %arg12[%c16_63, %c32_64], %220 {strides = array<i32>} : memref<64x64xbf16, #tpu.memory_space<vmem>>, vector<8x32xbf16>,
    %222 = arith.truncf %217 : vector<8x64xf32> to vector<8x64xbf16>
    %cst_65 = arith.constant dense<0.000000e+00> : vector<8x256xf32>
    %223 = tpu.matmul %222, %8, %cst_65 {dimension_numbers = #tpu.dot_dimension_numbers<[1], [0], [0], [1], [0, 0, 1, 1], [], []>} : vector<8x64xbf16>, vector<64x256xbf16>, vector<8x256xf32> -> vector<8x256xf32>
    %c48_66 = arith.constant 48 : index
    %c0_67 = arith.constant 0 : index
    %224 = vector.load %arg11[%c48_66, %c0_67] : memref<64x256xf32, #tpu.memory_space<vmem>>, vector<8x128xf32>
    %c8_68 = arith.constant 8 : index
    %c128_69 = arith.constant 128 : index
    %225 = vector.load %arg11[%c8_68, %c128_69] : memref<64x256xf32, #tpu.memory_space<vmem>>, vector<8x128xf32>
    %226 = tpu.concatenate %224, %225 in 1 : vector<8x128xf32>, vector<8x128xf32> -> vector<8x256xf32>
    %227 = arith.addf %226, %223 : vector<8x256xf32>
    %228 = arith.negf %227 : vector<8x256xf32>
    %229 = math.exp %228 : vector<8x256xf32>
    %cst_70 = arith.constant 1.000000e+00 : f32
    %230 = vector.broadcast %cst_70 : f32 to vector<8x256xf32>
    %231 = arith.addf %230, %229 : vector<8x256xf32>
    %232 = arith.divf %230, %231 : vector<8x256xf32>
    %233 = math.tanh %227 : vector<8x256xf32>
    %234 = vector.extract_strided_slice %232 {offsets = [0, 32], sizes = [8, 32], strides = [1, 1]} : vector<8x256xf32> to vector<8x32xf32>
    %235 = arith.mulf %234, %204 : vector<8x32xf32>
    %236 = vector.extract_strided_slice %232 {offsets = [0, 0], sizes = [8, 32], strides = [1, 1]} : vector<8x256xf32> to vector<8x32xf32>
    %237 = vector.extract_strided_slice %233 {offsets = [0, 64], sizes = [8, 32], strides = [1, 1]} : vector<8x256xf32> to vector<8x32xf32>
    %238 = arith.mulf %236, %237 : vector<8x32xf32>
    %239 = arith.addf %235, %238 : vector<8x32xf32>
    %240 = vector.extract_strided_slice %232 {offsets = [0, 160], sizes = [8, 32], strides = [1, 1]} : vector<8x256xf32> to vector<8x32xf32>
    %241 = arith.mulf %240, %210 : vector<8x32xf32>
    %242 = vector.extract_strided_slice %232 {offsets = [0, 128], sizes = [8, 32], strides = [1, 1]} : vector<8x256xf32> to vector<8x32xf32>
    %243 = vector.extract_strided_slice %233 {offsets = [0, 192], sizes = [8, 32], strides = [1, 1]} : vector<8x256xf32> to vector<8x32xf32>
    %244 = arith.mulf %242, %243 : vector<8x32xf32>
    %245 = arith.addf %241, %244 : vector<8x32xf32>
    %246 = vector.extract_strided_slice %232 {offsets = [0, 96], sizes = [8, 32], strides = [1, 1]} : vector<8x256xf32> to vector<8x32xf32>
    %247 = math.tanh %239 : vector<8x32xf32>
    %248 = arith.mulf %246, %247 : vector<8x32xf32>
    %249 = vector.extract_strided_slice %232 {offsets = [0, 224], sizes = [8, 32], strides = [1, 1]} : vector<8x256xf32> to vector<8x32xf32>
    %250 = math.tanh %245 : vector<8x32xf32>
    %251 = arith.mulf %249, %250 : vector<8x32xf32>
    %252 = tpu.concatenate %248, %251 in 1 : vector<8x32xf32>, vector<8x32xf32> -> vector<8x64xf32>
    %253 = arith.truncf %248 : vector<8x32xf32> to vector<8x32xbf16>
    %c48_71 = arith.constant 48 : index
    %c0_72 = arith.constant 0 : index
    %254 = vector.load %arg12[%c48_71, %c0_72] : memref<64x64xbf16, #tpu.memory_space<vmem>>, vector<8x32xbf16>
    tpu.vector_store %arg12[%c48_71, %c0_72], %253 {strides = array<i32>} : memref<64x64xbf16, #tpu.memory_space<vmem>>, vector<8x32xbf16>,
    %255 = arith.truncf %251 : vector<8x32xf32> to vector<8x32xbf16>
    %c8_73 = arith.constant 8 : index
    %c32_74 = arith.constant 32 : index
    %256 = vector.load %arg12[%c8_73, %c32_74] : memref<64x64xbf16, #tpu.memory_space<vmem>>, vector<8x32xbf16>
    tpu.vector_store %arg12[%c8_73, %c32_74], %255 {strides = array<i32>} : memref<64x64xbf16, #tpu.memory_space<vmem>>, vector<8x32xbf16>,
    %257 = arith.truncf %252 : vector<8x64xf32> to vector<8x64xbf16>
    %cst_75 = arith.constant dense<0.000000e+00> : vector<8x256xf32>
    %258 = tpu.matmul %257, %8, %cst_75 {dimension_numbers = #tpu.dot_dimension_numbers<[1], [0], [0], [1], [0, 0, 1, 1], [], []>} : vector<8x64xbf16>, vector<64x256xbf16>, vector<8x256xf32> -> vector<8x256xf32>
    %c56_76 = arith.constant 56 : index
    %c0_77 = arith.constant 0 : index
    %259 = vector.load %arg11[%c56_76, %c0_77] : memref<64x256xf32, #tpu.memory_space<vmem>>, vector<8x128xf32>
    %c0_78 = arith.constant 0 : index
    %c128_79 = arith.constant 128 : index
    %260 = vector.load %arg11[%c0_78, %c128_79] : memref<64x256xf32, #tpu.memory_space<vmem>>, vector<8x128xf32>
    %261 = tpu.concatenate %259, %260 in 1 : vector<8x128xf32>, vector<8x128xf32> -> vector<8x256xf32>
    %262 = arith.addf %261, %258 : vector<8x256xf32>
    %263 = arith.negf %262 : vector<8x256xf32>
    %264 = math.exp %263 : vector<8x256xf32>
    %cst_80 = arith.constant 1.000000e+00 : f32
    %265 = vector.broadcast %cst_80 : f32 to vector<8x256xf32>
    %266 = arith.addf %265, %264 : vector<8x256xf32>
    %267 = arith.divf %265, %266 : vector<8x256xf32>
    %268 = math.tanh %262 : vector<8x256xf32>
    %269 = vector.extract_strided_slice %267 {offsets = [0, 32], sizes = [8, 32], strides = [1, 1]} : vector<8x256xf32> to vector<8x32xf32>
    %270 = arith.mulf %269, %239 : vector<8x32xf32>
    %271 = vector.extract_strided_slice %267 {offsets = [0, 0], sizes = [8, 32], strides = [1, 1]} : vector<8x256xf32> to vector<8x32xf32>
    %272 = vector.extract_strided_slice %268 {offsets = [0, 64], sizes = [8, 32], strides = [1, 1]} : vector<8x256xf32> to vector<8x32xf32>
    %273 = arith.mulf %271, %272 : vector<8x32xf32>
    %274 = arith.addf %270, %273 : vector<8x32xf32>
    %275 = vector.extract_strided_slice %267 {offsets = [0, 160], sizes = [8, 32], strides = [1, 1]} : vector<8x256xf32> to vector<8x32xf32>
    %276 = arith.mulf %275, %245 : vector<8x32xf32>
    %277 = vector.extract_strided_slice %267 {offsets = [0, 128], sizes = [8, 32], strides = [1, 1]} : vector<8x256xf32> to vector<8x32xf32>
    %278 = vector.extract_strided_slice %268 {offsets = [0, 192], sizes = [8, 32], strides = [1, 1]} : vector<8x256xf32> to vector<8x32xf32>
    %279 = arith.mulf %277, %278 : vector<8x32xf32>
    %280 = arith.addf %276, %279 : vector<8x32xf32>
    %281 = vector.extract_strided_slice %267 {offsets = [0, 96], sizes = [8, 32], strides = [1, 1]} : vector<8x256xf32> to vector<8x32xf32>
    %282 = math.tanh %274 : vector<8x32xf32>
    %283 = arith.mulf %281, %282 : vector<8x32xf32>
    %284 = vector.extract_strided_slice %267 {offsets = [0, 224], sizes = [8, 32], strides = [1, 1]} : vector<8x256xf32> to vector<8x32xf32>
    %285 = math.tanh %280 : vector<8x32xf32>
    %286 = arith.mulf %284, %285 : vector<8x32xf32>
    %287 = arith.truncf %283 : vector<8x32xf32> to vector<8x32xbf16>
    %c56_81 = arith.constant 56 : index
    %c0_82 = arith.constant 0 : index
    %288 = vector.load %arg12[%c56_81, %c0_82] : memref<64x64xbf16, #tpu.memory_space<vmem>>, vector<8x32xbf16>
    tpu.vector_store %arg12[%c56_81, %c0_82], %287 {strides = array<i32>} : memref<64x64xbf16, #tpu.memory_space<vmem>>, vector<8x32xbf16>,
    %289 = arith.truncf %286 : vector<8x32xf32> to vector<8x32xbf16>
    %c0_83 = arith.constant 0 : index
    %c32_84 = arith.constant 32 : index
    %290 = vector.load %arg12[%c0_83, %c32_84] : memref<64x64xbf16, #tpu.memory_space<vmem>>, vector<8x32xbf16>
    tpu.vector_store %arg12[%c0_83, %c32_84], %289 {strides = array<i32>} : memref<64x64xbf16, #tpu.memory_space<vmem>>, vector<8x32xbf16>,
    %c0_85 = arith.constant 0 : index
    %c0_86 = arith.constant 0 : index
    %291 = vector.load %arg12[%c0_85, %c0_86] : memref<64x64xbf16, #tpu.memory_space<vmem>>, vector<64x64xbf16>
    %c0_87 = arith.constant 0 : index
    %c0_88 = arith.constant 0 : index
    %292 = vector.load %arg5[%c0_87, %c0_88] : memref<64x256xbf16, #tpu.memory_space<vmem>>, vector<64x256xbf16>
    %cst_89 = arith.constant dense<0.000000e+00> : vector<64x256xf32>
    %293 = tpu.matmul %291, %292, %cst_89 {dimension_numbers = #tpu.dot_dimension_numbers<[1], [0], [0], [1], [0, 0, 1, 1], [], []>} : vector<64x64xbf16>, vector<64x256xbf16>, vector<64x256xf32> -> vector<64x256xf32>
    %c0_90 = arith.constant 0 : index
    %c0_91 = arith.constant 0 : index
    %294 = vector.load %arg7[%c0_90, %c0_91] : memref<1x256xf32, #tpu.memory_space<vmem>>, vector<1x256xf32>
    %295 = vector.broadcast %294 : vector<1x256xf32> to vector<64x256xf32>
    %296 = arith.addf %293, %295 : vector<64x256xf32>
    %c0_92 = arith.constant 0 : index
    %c0_93 = arith.constant 0 : index
    %297 = vector.load %arg11[%c0_92, %c0_93] : memref<64x256xf32, #tpu.memory_space<vmem>>, vector<64x256xf32>
    tpu.vector_store %arg11[%c0_92, %c0_93], %296 {strides = array<i32>} : memref<64x256xf32, #tpu.memory_space<vmem>>, vector<64x256xf32>,
    %c0_94 = arith.constant 0 : index
    %c0_95 = arith.constant 0 : index
    %298 = vector.load %arg6[%c0_94, %c0_95] : memref<64x256xbf16, #tpu.memory_space<vmem>>, vector<64x256xbf16>
    %cst_96 = arith.constant 0.000000e+00 : f32
    %299 = vector.broadcast %cst_96 : f32 to vector<8x64xf32>
    %cst_97 = arith.constant 0.000000e+00 : f32
    %300 = vector.broadcast %cst_97 : f32 to vector<8x32xf32>
    %cst_98 = arith.constant 0.000000e+00 : f32
    %301 = vector.broadcast %cst_98 : f32 to vector<8x32xf32>
    %302 = arith.truncf %299 : vector<8x64xf32> to vector<8x64xbf16>
    %cst_99 = arith.constant dense<0.000000e+00> : vector<8x256xf32>
    %303 = tpu.matmul %302, %298, %cst_99 {dimension_numbers = #tpu.dot_dimension_numbers<[1], [0], [0], [1], [0, 0, 1, 1], [], []>} : vector<8x64xbf16>, vector<64x256xbf16>, vector<8x256xf32> -> vector<8x256xf32>
    %c0_100 = arith.constant 0 : index
    %c0_101 = arith.constant 0 : index
    %304 = vector.load %arg11[%c0_100, %c0_101] : memref<64x256xf32, #tpu.memory_space<vmem>>, vector<8x128xf32>
    %c56_102 = arith.constant 56 : index
    %c128_103 = arith.constant 128 : index
    %305 = vector.load %arg11[%c56_102, %c128_103] : memref<64x256xf32, #tpu.memory_space<vmem>>, vector<8x128xf32>
    %306 = tpu.concatenate %304, %305 in 1 : vector<8x128xf32>, vector<8x128xf32> -> vector<8x256xf32>
    %307 = arith.addf %306, %303 : vector<8x256xf32>
    %308 = arith.negf %307 : vector<8x256xf32>
    %309 = math.exp %308 : vector<8x256xf32>
    %cst_104 = arith.constant 1.000000e+00 : f32
    %310 = vector.broadcast %cst_104 : f32 to vector<8x256xf32>
    %311 = arith.addf %310, %309 : vector<8x256xf32>
    %312 = arith.divf %310, %311 : vector<8x256xf32>
    %313 = math.tanh %307 : vector<8x256xf32>
    %314 = vector.extract_strided_slice %312 {offsets = [0, 32], sizes = [8, 32], strides = [1, 1]} : vector<8x256xf32> to vector<8x32xf32>
    %315 = arith.mulf %314, %300 : vector<8x32xf32>
    %316 = vector.extract_strided_slice %312 {offsets = [0, 0], sizes = [8, 32], strides = [1, 1]} : vector<8x256xf32> to vector<8x32xf32>
    %317 = vector.extract_strided_slice %313 {offsets = [0, 64], sizes = [8, 32], strides = [1, 1]} : vector<8x256xf32> to vector<8x32xf32>
    %318 = arith.mulf %316, %317 : vector<8x32xf32>
    %319 = arith.addf %315, %318 : vector<8x32xf32>
    %320 = vector.extract_strided_slice %312 {offsets = [0, 160], sizes = [8, 32], strides = [1, 1]} : vector<8x256xf32> to vector<8x32xf32>
    %321 = arith.mulf %320, %301 : vector<8x32xf32>
    %322 = vector.extract_strided_slice %312 {offsets = [0, 128], sizes = [8, 32], strides = [1, 1]} : vector<8x256xf32> to vector<8x32xf32>
    %323 = vector.extract_strided_slice %313 {offsets = [0, 192], sizes = [8, 32], strides = [1, 1]} : vector<8x256xf32> to vector<8x32xf32>
    %324 = arith.mulf %322, %323 : vector<8x32xf32>
    %325 = arith.addf %321, %324 : vector<8x32xf32>
    %326 = vector.extract_strided_slice %312 {offsets = [0, 96], sizes = [8, 32], strides = [1, 1]} : vector<8x256xf32> to vector<8x32xf32>
    %327 = math.tanh %319 : vector<8x32xf32>
    %328 = arith.mulf %326, %327 : vector<8x32xf32>
    %329 = vector.extract_strided_slice %312 {offsets = [0, 224], sizes = [8, 32], strides = [1, 1]} : vector<8x256xf32> to vector<8x32xf32>
    %330 = math.tanh %325 : vector<8x32xf32>
    %331 = arith.mulf %329, %330 : vector<8x32xf32>
    %332 = tpu.concatenate %328, %331 in 1 : vector<8x32xf32>, vector<8x32xf32> -> vector<8x64xf32>
    %333 = arith.truncf %328 : vector<8x32xf32> to vector<8x32xbf16>
    %c0_105 = arith.constant 0 : index
    %c0_106 = arith.constant 0 : index
    %334 = vector.load %arg12[%c0_105, %c0_106] : memref<64x64xbf16, #tpu.memory_space<vmem>>, vector<8x32xbf16>
    tpu.vector_store %arg12[%c0_105, %c0_106], %333 {strides = array<i32>} : memref<64x64xbf16, #tpu.memory_space<vmem>>, vector<8x32xbf16>,
    %335 = arith.truncf %331 : vector<8x32xf32> to vector<8x32xbf16>
    %c56_107 = arith.constant 56 : index
    %c32_108 = arith.constant 32 : index
    %336 = vector.load %arg12[%c56_107, %c32_108] : memref<64x64xbf16, #tpu.memory_space<vmem>>, vector<8x32xbf16>
    tpu.vector_store %arg12[%c56_107, %c32_108], %335 {strides = array<i32>} : memref<64x64xbf16, #tpu.memory_space<vmem>>, vector<8x32xbf16>,
    %337 = arith.truncf %332 : vector<8x64xf32> to vector<8x64xbf16>
    %cst_109 = arith.constant dense<0.000000e+00> : vector<8x256xf32>
    %338 = tpu.matmul %337, %298, %cst_109 {dimension_numbers = #tpu.dot_dimension_numbers<[1], [0], [0], [1], [0, 0, 1, 1], [], []>} : vector<8x64xbf16>, vector<64x256xbf16>, vector<8x256xf32> -> vector<8x256xf32>
    %c8_110 = arith.constant 8 : index
    %c0_111 = arith.constant 0 : index
    %339 = vector.load %arg11[%c8_110, %c0_111] : memref<64x256xf32, #tpu.memory_space<vmem>>, vector<8x128xf32>
    %c48_112 = arith.constant 48 : index
    %c128_113 = arith.constant 128 : index
    %340 = vector.load %arg11[%c48_112, %c128_113] : memref<64x256xf32, #tpu.memory_space<vmem>>, vector<8x128xf32>
    %341 = tpu.concatenate %339, %340 in 1 : vector<8x128xf32>, vector<8x128xf32> -> vector<8x256xf32>
    %342 = arith.addf %341, %338 : vector<8x256xf32>
    %343 = arith.negf %342 : vector<8x256xf32>
    %344 = math.exp %343 : vector<8x256xf32>
    %cst_114 = arith.constant 1.000000e+00 : f32
    %345 = vector.broadcast %cst_114 : f32 to vector<8x256xf32>
    %346 = arith.addf %345, %344 : vector<8x256xf32>
    %347 = arith.divf %345, %346 : vector<8x256xf32>
    %348 = math.tanh %342 : vector<8x256xf32>
    %349 = vector.extract_strided_slice %347 {offsets = [0, 32], sizes = [8, 32], strides = [1, 1]} : vector<8x256xf32> to vector<8x32xf32>
    %350 = arith.mulf %349, %319 : vector<8x32xf32>
    %351 = vector.extract_strided_slice %347 {offsets = [0, 0], sizes = [8, 32], strides = [1, 1]} : vector<8x256xf32> to vector<8x32xf32>
    %352 = vector.extract_strided_slice %348 {offsets = [0, 64], sizes = [8, 32], strides = [1, 1]} : vector<8x256xf32> to vector<8x32xf32>
    %353 = arith.mulf %351, %352 : vector<8x32xf32>
    %354 = arith.addf %350, %353 : vector<8x32xf32>
    %355 = vector.extract_strided_slice %347 {offsets = [0, 160], sizes = [8, 32], strides = [1, 1]} : vector<8x256xf32> to vector<8x32xf32>
    %356 = arith.mulf %355, %325 : vector<8x32xf32>
    %357 = vector.extract_strided_slice %347 {offsets = [0, 128], sizes = [8, 32], strides = [1, 1]} : vector<8x256xf32> to vector<8x32xf32>
    %358 = vector.extract_strided_slice %348 {offsets = [0, 192], sizes = [8, 32], strides = [1, 1]} : vector<8x256xf32> to vector<8x32xf32>
    %359 = arith.mulf %357, %358 : vector<8x32xf32>
    %360 = arith.addf %356, %359 : vector<8x32xf32>
    %361 = vector.extract_strided_slice %347 {offsets = [0, 96], sizes = [8, 32], strides = [1, 1]} : vector<8x256xf32> to vector<8x32xf32>
    %362 = math.tanh %354 : vector<8x32xf32>
    %363 = arith.mulf %361, %362 : vector<8x32xf32>
    %364 = vector.extract_strided_slice %347 {offsets = [0, 224], sizes = [8, 32], strides = [1, 1]} : vector<8x256xf32> to vector<8x32xf32>
    %365 = math.tanh %360 : vector<8x32xf32>
    %366 = arith.mulf %364, %365 : vector<8x32xf32>
    %367 = tpu.concatenate %363, %366 in 1 : vector<8x32xf32>, vector<8x32xf32> -> vector<8x64xf32>
    %368 = arith.truncf %363 : vector<8x32xf32> to vector<8x32xbf16>
    %c8_115 = arith.constant 8 : index
    %c0_116 = arith.constant 0 : index
    %369 = vector.load %arg12[%c8_115, %c0_116] : memref<64x64xbf16, #tpu.memory_space<vmem>>, vector<8x32xbf16>
    tpu.vector_store %arg12[%c8_115, %c0_116], %368 {strides = array<i32>} : memref<64x64xbf16, #tpu.memory_space<vmem>>, vector<8x32xbf16>,
    %370 = arith.truncf %366 : vector<8x32xf32> to vector<8x32xbf16>
    %c48_117 = arith.constant 48 : index
    %c32_118 = arith.constant 32 : index
    %371 = vector.load %arg12[%c48_117, %c32_118] : memref<64x64xbf16, #tpu.memory_space<vmem>>, vector<8x32xbf16>
    tpu.vector_store %arg12[%c48_117, %c32_118], %370 {strides = array<i32>} : memref<64x64xbf16, #tpu.memory_space<vmem>>, vector<8x32xbf16>,
    %372 = arith.truncf %367 : vector<8x64xf32> to vector<8x64xbf16>
    %cst_119 = arith.constant dense<0.000000e+00> : vector<8x256xf32>
    %373 = tpu.matmul %372, %298, %cst_119 {dimension_numbers = #tpu.dot_dimension_numbers<[1], [0], [0], [1], [0, 0, 1, 1], [], []>} : vector<8x64xbf16>, vector<64x256xbf16>, vector<8x256xf32> -> vector<8x256xf32>
    %c16_120 = arith.constant 16 : index
    %c0_121 = arith.constant 0 : index
    %374 = vector.load %arg11[%c16_120, %c0_121] : memref<64x256xf32, #tpu.memory_space<vmem>>, vector<8x128xf32>
    %c40_122 = arith.constant 40 : index
    %c128_123 = arith.constant 128 : index
    %375 = vector.load %arg11[%c40_122, %c128_123] : memref<64x256xf32, #tpu.memory_space<vmem>>, vector<8x128xf32>
    %376 = tpu.concatenate %374, %375 in 1 : vector<8x128xf32>, vector<8x128xf32> -> vector<8x256xf32>
    %377 = arith.addf %376, %373 : vector<8x256xf32>
    %378 = arith.negf %377 : vector<8x256xf32>
    %379 = math.exp %378 : vector<8x256xf32>
    %cst_124 = arith.constant 1.000000e+00 : f32
    %380 = vector.broadcast %cst_124 : f32 to vector<8x256xf32>
    %381 = arith.addf %380, %379 : vector<8x256xf32>
    %382 = arith.divf %380, %381 : vector<8x256xf32>
    %383 = math.tanh %377 : vector<8x256xf32>
    %384 = vector.extract_strided_slice %382 {offsets = [0, 32], sizes = [8, 32], strides = [1, 1]} : vector<8x256xf32> to vector<8x32xf32>
    %385 = arith.mulf %384, %354 : vector<8x32xf32>
    %386 = vector.extract_strided_slice %382 {offsets = [0, 0], sizes = [8, 32], strides = [1, 1]} : vector<8x256xf32> to vector<8x32xf32>
    %387 = vector.extract_strided_slice %383 {offsets = [0, 64], sizes = [8, 32], strides = [1, 1]} : vector<8x256xf32> to vector<8x32xf32>
    %388 = arith.mulf %386, %387 : vector<8x32xf32>
    %389 = arith.addf %385, %388 : vector<8x32xf32>
    %390 = vector.extract_strided_slice %382 {offsets = [0, 160], sizes = [8, 32], strides = [1, 1]} : vector<8x256xf32> to vector<8x32xf32>
    %391 = arith.mulf %390, %360 : vector<8x32xf32>
    %392 = vector.extract_strided_slice %382 {offsets = [0, 128], sizes = [8, 32], strides = [1, 1]} : vector<8x256xf32> to vector<8x32xf32>
    %393 = vector.extract_strided_slice %383 {offsets = [0, 192], sizes = [8, 32], strides = [1, 1]} : vector<8x256xf32> to vector<8x32xf32>
    %394 = arith.mulf %392, %393 : vector<8x32xf32>
    %395 = arith.addf %391, %394 : vector<8x32xf32>
    %396 = vector.extract_strided_slice %382 {offsets = [0, 96], sizes = [8, 32], strides = [1, 1]} : vector<8x256xf32> to vector<8x32xf32>
    %397 = math.tanh %389 : vector<8x32xf32>
    %398 = arith.mulf %396, %397 : vector<8x32xf32>
    %399 = vector.extract_strided_slice %382 {offsets = [0, 224], sizes = [8, 32], strides = [1, 1]} : vector<8x256xf32> to vector<8x32xf32>
    %400 = math.tanh %395 : vector<8x32xf32>
    %401 = arith.mulf %399, %400 : vector<8x32xf32>
    %402 = tpu.concatenate %398, %401 in 1 : vector<8x32xf32>, vector<8x32xf32> -> vector<8x64xf32>
    %403 = arith.truncf %398 : vector<8x32xf32> to vector<8x32xbf16>
    %c16_125 = arith.constant 16 : index
    %c0_126 = arith.constant 0 : index
    %404 = vector.load %arg12[%c16_125, %c0_126] : memref<64x64xbf16, #tpu.memory_space<vmem>>, vector<8x32xbf16>
    tpu.vector_store %arg12[%c16_125, %c0_126], %403 {strides = array<i32>} : memref<64x64xbf16, #tpu.memory_space<vmem>>, vector<8x32xbf16>,
    %405 = arith.truncf %401 : vector<8x32xf32> to vector<8x32xbf16>
    %c40_127 = arith.constant 40 : index
    %c32_128 = arith.constant 32 : index
    %406 = vector.load %arg12[%c40_127, %c32_128] : memref<64x64xbf16, #tpu.memory_space<vmem>>, vector<8x32xbf16>
    tpu.vector_store %arg12[%c40_127, %c32_128], %405 {strides = array<i32>} : memref<64x64xbf16, #tpu.memory_space<vmem>>, vector<8x32xbf16>,
    %407 = arith.truncf %402 : vector<8x64xf32> to vector<8x64xbf16>
    %cst_129 = arith.constant dense<0.000000e+00> : vector<8x256xf32>
    %408 = tpu.matmul %407, %298, %cst_129 {dimension_numbers = #tpu.dot_dimension_numbers<[1], [0], [0], [1], [0, 0, 1, 1], [], []>} : vector<8x64xbf16>, vector<64x256xbf16>, vector<8x256xf32> -> vector<8x256xf32>
    %c24_130 = arith.constant 24 : index
    %c0_131 = arith.constant 0 : index
    %409 = vector.load %arg11[%c24_130, %c0_131] : memref<64x256xf32, #tpu.memory_space<vmem>>, vector<8x128xf32>
    %c32_132 = arith.constant 32 : index
    %c128_133 = arith.constant 128 : index
    %410 = vector.load %arg11[%c32_132, %c128_133] : memref<64x256xf32, #tpu.memory_space<vmem>>, vector<8x128xf32>
    %411 = tpu.concatenate %409, %410 in 1 : vector<8x128xf32>, vector<8x128xf32> -> vector<8x256xf32>
    %412 = arith.addf %411, %408 : vector<8x256xf32>
    %413 = arith.negf %412 : vector<8x256xf32>
    %414 = math.exp %413 : vector<8x256xf32>
    %cst_134 = arith.constant 1.000000e+00 : f32
    %415 = vector.broadcast %cst_134 : f32 to vector<8x256xf32>
    %416 = arith.addf %415, %414 : vector<8x256xf32>
    %417 = arith.divf %415, %416 : vector<8x256xf32>
    %418 = math.tanh %412 : vector<8x256xf32>
    %419 = vector.extract_strided_slice %417 {offsets = [0, 32], sizes = [8, 32], strides = [1, 1]} : vector<8x256xf32> to vector<8x32xf32>
    %420 = arith.mulf %419, %389 : vector<8x32xf32>
    %421 = vector.extract_strided_slice %417 {offsets = [0, 0], sizes = [8, 32], strides = [1, 1]} : vector<8x256xf32> to vector<8x32xf32>
    %422 = vector.extract_strided_slice %418 {offsets = [0, 64], sizes = [8, 32], strides = [1, 1]} : vector<8x256xf32> to vector<8x32xf32>
    %423 = arith.mulf %421, %422 : vector<8x32xf32>
    %424 = arith.addf %420, %423 : vector<8x32xf32>
    %425 = vector.extract_strided_slice %417 {offsets = [0, 160], sizes = [8, 32], strides = [1, 1]} : vector<8x256xf32> to vector<8x32xf32>
    %426 = arith.mulf %425, %395 : vector<8x32xf32>
    %427 = vector.extract_strided_slice %417 {offsets = [0, 128], sizes = [8, 32], strides = [1, 1]} : vector<8x256xf32> to vector<8x32xf32>
    %428 = vector.extract_strided_slice %418 {offsets = [0, 192], sizes = [8, 32], strides = [1, 1]} : vector<8x256xf32> to vector<8x32xf32>
    %429 = arith.mulf %427, %428 : vector<8x32xf32>
    %430 = arith.addf %426, %429 : vector<8x32xf32>
    %431 = vector.extract_strided_slice %417 {offsets = [0, 96], sizes = [8, 32], strides = [1, 1]} : vector<8x256xf32> to vector<8x32xf32>
    %432 = math.tanh %424 : vector<8x32xf32>
    %433 = arith.mulf %431, %432 : vector<8x32xf32>
    %434 = vector.extract_strided_slice %417 {offsets = [0, 224], sizes = [8, 32], strides = [1, 1]} : vector<8x256xf32> to vector<8x32xf32>
    %435 = math.tanh %430 : vector<8x32xf32>
    %436 = arith.mulf %434, %435 : vector<8x32xf32>
    %437 = tpu.concatenate %433, %436 in 1 : vector<8x32xf32>, vector<8x32xf32> -> vector<8x64xf32>
    %438 = arith.truncf %433 : vector<8x32xf32> to vector<8x32xbf16>
    %c24_135 = arith.constant 24 : index
    %c0_136 = arith.constant 0 : index
    %439 = vector.load %arg12[%c24_135, %c0_136] : memref<64x64xbf16, #tpu.memory_space<vmem>>, vector<8x32xbf16>
    tpu.vector_store %arg12[%c24_135, %c0_136], %438 {strides = array<i32>} : memref<64x64xbf16, #tpu.memory_space<vmem>>, vector<8x32xbf16>,
    %440 = arith.truncf %436 : vector<8x32xf32> to vector<8x32xbf16>
    %c32_137 = arith.constant 32 : index
    %c32_138 = arith.constant 32 : index
    %441 = vector.load %arg12[%c32_137, %c32_138] : memref<64x64xbf16, #tpu.memory_space<vmem>>, vector<8x32xbf16>
    tpu.vector_store %arg12[%c32_137, %c32_138], %440 {strides = array<i32>} : memref<64x64xbf16, #tpu.memory_space<vmem>>, vector<8x32xbf16>,
    %442 = arith.truncf %437 : vector<8x64xf32> to vector<8x64xbf16>
    %cst_139 = arith.constant dense<0.000000e+00> : vector<8x256xf32>
    %443 = tpu.matmul %442, %298, %cst_139 {dimension_numbers = #tpu.dot_dimension_numbers<[1], [0], [0], [1], [0, 0, 1, 1], [], []>} : vector<8x64xbf16>, vector<64x256xbf16>, vector<8x256xf32> -> vector<8x256xf32>
    %c32_140 = arith.constant 32 : index
    %c0_141 = arith.constant 0 : index
    %444 = vector.load %arg11[%c32_140, %c0_141] : memref<64x256xf32, #tpu.memory_space<vmem>>, vector<8x128xf32>
    %c24_142 = arith.constant 24 : index
    %c128_143 = arith.constant 128 : index
    %445 = vector.load %arg11[%c24_142, %c128_143] : memref<64x256xf32, #tpu.memory_space<vmem>>, vector<8x128xf32>
    %446 = tpu.concatenate %444, %445 in 1 : vector<8x128xf32>, vector<8x128xf32> -> vector<8x256xf32>
    %447 = arith.addf %446, %443 : vector<8x256xf32>
    %448 = arith.negf %447 : vector<8x256xf32>
    %449 = math.exp %448 : vector<8x256xf32>
    %cst_144 = arith.constant 1.000000e+00 : f32
    %450 = vector.broadcast %cst_144 : f32 to vector<8x256xf32>
    %451 = arith.addf %450, %449 : vector<8x256xf32>
    %452 = arith.divf %450, %451 : vector<8x256xf32>
    %453 = math.tanh %447 : vector<8x256xf32>
    %454 = vector.extract_strided_slice %452 {offsets = [0, 32], sizes = [8, 32], strides = [1, 1]} : vector<8x256xf32> to vector<8x32xf32>
    %455 = arith.mulf %454, %424 : vector<8x32xf32>
    %456 = vector.extract_strided_slice %452 {offsets = [0, 0], sizes = [8, 32], strides = [1, 1]} : vector<8x256xf32> to vector<8x32xf32>
    %457 = vector.extract_strided_slice %453 {offsets = [0, 64], sizes = [8, 32], strides = [1, 1]} : vector<8x256xf32> to vector<8x32xf32>
    %458 = arith.mulf %456, %457 : vector<8x32xf32>
    %459 = arith.addf %455, %458 : vector<8x32xf32>
    %460 = vector.extract_strided_slice %452 {offsets = [0, 160], sizes = [8, 32], strides = [1, 1]} : vector<8x256xf32> to vector<8x32xf32>
    %461 = arith.mulf %460, %430 : vector<8x32xf32>
    %462 = vector.extract_strided_slice %452 {offsets = [0, 128], sizes = [8, 32], strides = [1, 1]} : vector<8x256xf32> to vector<8x32xf32>
    %463 = vector.extract_strided_slice %453 {offsets = [0, 192], sizes = [8, 32], strides = [1, 1]} : vector<8x256xf32> to vector<8x32xf32>
    %464 = arith.mulf %462, %463 : vector<8x32xf32>
    %465 = arith.addf %461, %464 : vector<8x32xf32>
    %466 = vector.extract_strided_slice %452 {offsets = [0, 96], sizes = [8, 32], strides = [1, 1]} : vector<8x256xf32> to vector<8x32xf32>
    %467 = math.tanh %459 : vector<8x32xf32>
    %468 = arith.mulf %466, %467 : vector<8x32xf32>
    %469 = vector.extract_strided_slice %452 {offsets = [0, 224], sizes = [8, 32], strides = [1, 1]} : vector<8x256xf32> to vector<8x32xf32>
    %470 = math.tanh %465 : vector<8x32xf32>
    %471 = arith.mulf %469, %470 : vector<8x32xf32>
    %472 = tpu.concatenate %468, %471 in 1 : vector<8x32xf32>, vector<8x32xf32> -> vector<8x64xf32>
    %473 = arith.truncf %468 : vector<8x32xf32> to vector<8x32xbf16>
    %c32_145 = arith.constant 32 : index
    %c0_146 = arith.constant 0 : index
    %474 = vector.load %arg12[%c32_145, %c0_146] : memref<64x64xbf16, #tpu.memory_space<vmem>>, vector<8x32xbf16>
    tpu.vector_store %arg12[%c32_145, %c0_146], %473 {strides = array<i32>} : memref<64x64xbf16, #tpu.memory_space<vmem>>, vector<8x32xbf16>,
    %475 = arith.truncf %471 : vector<8x32xf32> to vector<8x32xbf16>
    %c24_147 = arith.constant 24 : index
    %c32_148 = arith.constant 32 : index
    %476 = vector.load %arg12[%c24_147, %c32_148] : memref<64x64xbf16, #tpu.memory_space<vmem>>, vector<8x32xbf16>
    tpu.vector_store %arg12[%c24_147, %c32_148], %475 {strides = array<i32>} : memref<64x64xbf16, #tpu.memory_space<vmem>>, vector<8x32xbf16>,
    %477 = arith.truncf %472 : vector<8x64xf32> to vector<8x64xbf16>
    %cst_149 = arith.constant dense<0.000000e+00> : vector<8x256xf32>
    %478 = tpu.matmul %477, %298, %cst_149 {dimension_numbers = #tpu.dot_dimension_numbers<[1], [0], [0], [1], [0, 0, 1, 1], [], []>} : vector<8x64xbf16>, vector<64x256xbf16>, vector<8x256xf32> -> vector<8x256xf32>
    %c40_150 = arith.constant 40 : index
    %c0_151 = arith.constant 0 : index
    %479 = vector.load %arg11[%c40_150, %c0_151] : memref<64x256xf32, #tpu.memory_space<vmem>>, vector<8x128xf32>
    %c16_152 = arith.constant 16 : index
    %c128_153 = arith.constant 128 : index
    %480 = vector.load %arg11[%c16_152, %c128_153] : memref<64x256xf32, #tpu.memory_space<vmem>>, vector<8x128xf32>
    %481 = tpu.concatenate %479, %480 in 1 : vector<8x128xf32>, vector<8x128xf32> -> vector<8x256xf32>
    %482 = arith.addf %481, %478 : vector<8x256xf32>
    %483 = arith.negf %482 : vector<8x256xf32>
    %484 = math.exp %483 : vector<8x256xf32>
    %cst_154 = arith.constant 1.000000e+00 : f32
    %485 = vector.broadcast %cst_154 : f32 to vector<8x256xf32>
    %486 = arith.addf %485, %484 : vector<8x256xf32>
    %487 = arith.divf %485, %486 : vector<8x256xf32>
    %488 = math.tanh %482 : vector<8x256xf32>
    %489 = vector.extract_strided_slice %487 {offsets = [0, 32], sizes = [8, 32], strides = [1, 1]} : vector<8x256xf32> to vector<8x32xf32>
    %490 = arith.mulf %489, %459 : vector<8x32xf32>
    %491 = vector.extract_strided_slice %487 {offsets = [0, 0], sizes = [8, 32], strides = [1, 1]} : vector<8x256xf32> to vector<8x32xf32>
    %492 = vector.extract_strided_slice %488 {offsets = [0, 64], sizes = [8, 32], strides = [1, 1]} : vector<8x256xf32> to vector<8x32xf32>
    %493 = arith.mulf %491, %492 : vector<8x32xf32>
    %494 = arith.addf %490, %493 : vector<8x32xf32>
    %495 = vector.extract_strided_slice %487 {offsets = [0, 160], sizes = [8, 32], strides = [1, 1]} : vector<8x256xf32> to vector<8x32xf32>
    %496 = arith.mulf %495, %465 : vector<8x32xf32>
    %497 = vector.extract_strided_slice %487 {offsets = [0, 128], sizes = [8, 32], strides = [1, 1]} : vector<8x256xf32> to vector<8x32xf32>
    %498 = vector.extract_strided_slice %488 {offsets = [0, 192], sizes = [8, 32], strides = [1, 1]} : vector<8x256xf32> to vector<8x32xf32>
    %499 = arith.mulf %497, %498 : vector<8x32xf32>
    %500 = arith.addf %496, %499 : vector<8x32xf32>
    %501 = vector.extract_strided_slice %487 {offsets = [0, 96], sizes = [8, 32], strides = [1, 1]} : vector<8x256xf32> to vector<8x32xf32>
    %502 = math.tanh %494 : vector<8x32xf32>
    %503 = arith.mulf %501, %502 : vector<8x32xf32>
    %504 = vector.extract_strided_slice %487 {offsets = [0, 224], sizes = [8, 32], strides = [1, 1]} : vector<8x256xf32> to vector<8x32xf32>
    %505 = math.tanh %500 : vector<8x32xf32>
    %506 = arith.mulf %504, %505 : vector<8x32xf32>
    %507 = tpu.concatenate %503, %506 in 1 : vector<8x32xf32>, vector<8x32xf32> -> vector<8x64xf32>
    %508 = arith.truncf %503 : vector<8x32xf32> to vector<8x32xbf16>
    %c40_155 = arith.constant 40 : index
    %c0_156 = arith.constant 0 : index
    %509 = vector.load %arg12[%c40_155, %c0_156] : memref<64x64xbf16, #tpu.memory_space<vmem>>, vector<8x32xbf16>
    tpu.vector_store %arg12[%c40_155, %c0_156], %508 {strides = array<i32>} : memref<64x64xbf16, #tpu.memory_space<vmem>>, vector<8x32xbf16>,
    %510 = arith.truncf %506 : vector<8x32xf32> to vector<8x32xbf16>
    %c16_157 = arith.constant 16 : index
    %c32_158 = arith.constant 32 : index
    %511 = vector.load %arg12[%c16_157, %c32_158] : memref<64x64xbf16, #tpu.memory_space<vmem>>, vector<8x32xbf16>
    tpu.vector_store %arg12[%c16_157, %c32_158], %510 {strides = array<i32>} : memref<64x64xbf16, #tpu.memory_space<vmem>>, vector<8x32xbf16>,
    %512 = arith.truncf %507 : vector<8x64xf32> to vector<8x64xbf16>
    %cst_159 = arith.constant dense<0.000000e+00> : vector<8x256xf32>
    %513 = tpu.matmul %512, %298, %cst_159 {dimension_numbers = #tpu.dot_dimension_numbers<[1], [0], [0], [1], [0, 0, 1, 1], [], []>} : vector<8x64xbf16>, vector<64x256xbf16>, vector<8x256xf32> -> vector<8x256xf32>
    %c48_160 = arith.constant 48 : index
    %c0_161 = arith.constant 0 : index
    %514 = vector.load %arg11[%c48_160, %c0_161] : memref<64x256xf32, #tpu.memory_space<vmem>>, vector<8x128xf32>
    %c8_162 = arith.constant 8 : index
    %c128_163 = arith.constant 128 : index
    %515 = vector.load %arg11[%c8_162, %c128_163] : memref<64x256xf32, #tpu.memory_space<vmem>>, vector<8x128xf32>
    %516 = tpu.concatenate %514, %515 in 1 : vector<8x128xf32>, vector<8x128xf32> -> vector<8x256xf32>
    %517 = arith.addf %516, %513 : vector<8x256xf32>
    %518 = arith.negf %517 : vector<8x256xf32>
    %519 = math.exp %518 : vector<8x256xf32>
    %cst_164 = arith.constant 1.000000e+00 : f32
    %520 = vector.broadcast %cst_164 : f32 to vector<8x256xf32>
    %521 = arith.addf %520, %519 : vector<8x256xf32>
    %522 = arith.divf %520, %521 : vector<8x256xf32>
    %523 = math.tanh %517 : vector<8x256xf32>
    %524 = vector.extract_strided_slice %522 {offsets = [0, 32], sizes = [8, 32], strides = [1, 1]} : vector<8x256xf32> to vector<8x32xf32>
    %525 = arith.mulf %524, %494 : vector<8x32xf32>
    %526 = vector.extract_strided_slice %522 {offsets = [0, 0], sizes = [8, 32], strides = [1, 1]} : vector<8x256xf32> to vector<8x32xf32>
    %527 = vector.extract_strided_slice %523 {offsets = [0, 64], sizes = [8, 32], strides = [1, 1]} : vector<8x256xf32> to vector<8x32xf32>
    %528 = arith.mulf %526, %527 : vector<8x32xf32>
    %529 = arith.addf %525, %528 : vector<8x32xf32>
    %530 = vector.extract_strided_slice %522 {offsets = [0, 160], sizes = [8, 32], strides = [1, 1]} : vector<8x256xf32> to vector<8x32xf32>
    %531 = arith.mulf %530, %500 : vector<8x32xf32>
    %532 = vector.extract_strided_slice %522 {offsets = [0, 128], sizes = [8, 32], strides = [1, 1]} : vector<8x256xf32> to vector<8x32xf32>
    %533 = vector.extract_strided_slice %523 {offsets = [0, 192], sizes = [8, 32], strides = [1, 1]} : vector<8x256xf32> to vector<8x32xf32>
    %534 = arith.mulf %532, %533 : vector<8x32xf32>
    %535 = arith.addf %531, %534 : vector<8x32xf32>
    %536 = vector.extract_strided_slice %522 {offsets = [0, 96], sizes = [8, 32], strides = [1, 1]} : vector<8x256xf32> to vector<8x32xf32>
    %537 = math.tanh %529 : vector<8x32xf32>
    %538 = arith.mulf %536, %537 : vector<8x32xf32>
    %539 = vector.extract_strided_slice %522 {offsets = [0, 224], sizes = [8, 32], strides = [1, 1]} : vector<8x256xf32> to vector<8x32xf32>
    %540 = math.tanh %535 : vector<8x32xf32>
    %541 = arith.mulf %539, %540 : vector<8x32xf32>
    %542 = tpu.concatenate %538, %541 in 1 : vector<8x32xf32>, vector<8x32xf32> -> vector<8x64xf32>
    %543 = arith.truncf %538 : vector<8x32xf32> to vector<8x32xbf16>
    %c48_165 = arith.constant 48 : index
    %c0_166 = arith.constant 0 : index
    %544 = vector.load %arg12[%c48_165, %c0_166] : memref<64x64xbf16, #tpu.memory_space<vmem>>, vector<8x32xbf16>
    tpu.vector_store %arg12[%c48_165, %c0_166], %543 {strides = array<i32>} : memref<64x64xbf16, #tpu.memory_space<vmem>>, vector<8x32xbf16>,
    %545 = arith.truncf %541 : vector<8x32xf32> to vector<8x32xbf16>
    %c8_167 = arith.constant 8 : index
    %c32_168 = arith.constant 32 : index
    %546 = vector.load %arg12[%c8_167, %c32_168] : memref<64x64xbf16, #tpu.memory_space<vmem>>, vector<8x32xbf16>
    tpu.vector_store %arg12[%c8_167, %c32_168], %545 {strides = array<i32>} : memref<64x64xbf16, #tpu.memory_space<vmem>>, vector<8x32xbf16>,
    %547 = arith.truncf %542 : vector<8x64xf32> to vector<8x64xbf16>
    %cst_169 = arith.constant dense<0.000000e+00> : vector<8x256xf32>
    %548 = tpu.matmul %547, %298, %cst_169 {dimension_numbers = #tpu.dot_dimension_numbers<[1], [0], [0], [1], [0, 0, 1, 1], [], []>} : vector<8x64xbf16>, vector<64x256xbf16>, vector<8x256xf32> -> vector<8x256xf32>
    %c56_170 = arith.constant 56 : index
    %c0_171 = arith.constant 0 : index
    %549 = vector.load %arg11[%c56_170, %c0_171] : memref<64x256xf32, #tpu.memory_space<vmem>>, vector<8x128xf32>
    %c0_172 = arith.constant 0 : index
    %c128_173 = arith.constant 128 : index
    %550 = vector.load %arg11[%c0_172, %c128_173] : memref<64x256xf32, #tpu.memory_space<vmem>>, vector<8x128xf32>
    %551 = tpu.concatenate %549, %550 in 1 : vector<8x128xf32>, vector<8x128xf32> -> vector<8x256xf32>
    %552 = arith.addf %551, %548 : vector<8x256xf32>
    %553 = arith.negf %552 : vector<8x256xf32>
    %554 = math.exp %553 : vector<8x256xf32>
    %cst_174 = arith.constant 1.000000e+00 : f32
    %555 = vector.broadcast %cst_174 : f32 to vector<8x256xf32>
    %556 = arith.addf %555, %554 : vector<8x256xf32>
    %557 = arith.divf %555, %556 : vector<8x256xf32>
    %558 = math.tanh %552 : vector<8x256xf32>
    %559 = vector.extract_strided_slice %557 {offsets = [0, 32], sizes = [8, 32], strides = [1, 1]} : vector<8x256xf32> to vector<8x32xf32>
    %560 = arith.mulf %559, %529 : vector<8x32xf32>
    %561 = vector.extract_strided_slice %557 {offsets = [0, 0], sizes = [8, 32], strides = [1, 1]} : vector<8x256xf32> to vector<8x32xf32>
    %562 = vector.extract_strided_slice %558 {offsets = [0, 64], sizes = [8, 32], strides = [1, 1]} : vector<8x256xf32> to vector<8x32xf32>
    %563 = arith.mulf %561, %562 : vector<8x32xf32>
    %564 = arith.addf %560, %563 : vector<8x32xf32>
    %565 = vector.extract_strided_slice %557 {offsets = [0, 160], sizes = [8, 32], strides = [1, 1]} : vector<8x256xf32> to vector<8x32xf32>
    %566 = arith.mulf %565, %535 : vector<8x32xf32>
    %567 = vector.extract_strided_slice %557 {offsets = [0, 128], sizes = [8, 32], strides = [1, 1]} : vector<8x256xf32> to vector<8x32xf32>
    %568 = vector.extract_strided_slice %558 {offsets = [0, 192], sizes = [8, 32], strides = [1, 1]} : vector<8x256xf32> to vector<8x32xf32>
    %569 = arith.mulf %567, %568 : vector<8x32xf32>
    %570 = arith.addf %566, %569 : vector<8x32xf32>
    %571 = vector.extract_strided_slice %557 {offsets = [0, 96], sizes = [8, 32], strides = [1, 1]} : vector<8x256xf32> to vector<8x32xf32>
    %572 = math.tanh %564 : vector<8x32xf32>
    %573 = arith.mulf %571, %572 : vector<8x32xf32>
    %574 = vector.extract_strided_slice %557 {offsets = [0, 224], sizes = [8, 32], strides = [1, 1]} : vector<8x256xf32> to vector<8x32xf32>
    %575 = math.tanh %570 : vector<8x32xf32>
    %576 = arith.mulf %574, %575 : vector<8x32xf32>
    %577 = arith.truncf %573 : vector<8x32xf32> to vector<8x32xbf16>
    %c56_175 = arith.constant 56 : index
    %c0_176 = arith.constant 0 : index
    %578 = vector.load %arg12[%c56_175, %c0_176] : memref<64x64xbf16, #tpu.memory_space<vmem>>, vector<8x32xbf16>
    tpu.vector_store %arg12[%c56_175, %c0_176], %577 {strides = array<i32>} : memref<64x64xbf16, #tpu.memory_space<vmem>>, vector<8x32xbf16>,
    %579 = arith.truncf %576 : vector<8x32xf32> to vector<8x32xbf16>
    %c0_177 = arith.constant 0 : index
    %c32_178 = arith.constant 32 : index
    %580 = vector.load %arg12[%c0_177, %c32_178] : memref<64x64xbf16, #tpu.memory_space<vmem>>, vector<8x32xbf16>
    tpu.vector_store %arg12[%c0_177, %c32_178], %579 {strides = array<i32>} : memref<64x64xbf16, #tpu.memory_space<vmem>>, vector<8x32xbf16>,
    %581 = tpu.concatenate %576, %573 in 1 : vector<8x32xf32>, vector<8x32xf32> -> vector<8x64xf32>
    %c0_179 = arith.constant 0 : index
    %c0_180 = arith.constant 0 : index
    %582 = vector.load %arg12[%c0_179, %c0_180] : memref<64x64xbf16, #tpu.memory_space<vmem>>, vector<8x64xbf16>
    %583 = arith.extf %582 : vector<8x64xbf16> to vector<8x64xf32>
    %584 = arith.mulf %583, %581 : vector<8x64xf32>
    %cst_181 = arith.constant dense<0.000000e+00> : vector<8xf32>
    %585 = vector.multi_reduction <add>, %584, %cst_181 [1] : vector<8x64xf32> to vector<8xf32>
    %586 = vector.shape_cast %585 : vector<8xf32> to vector<8x1xf32>
    %c8_182 = arith.constant 8 : index
    %c0_183 = arith.constant 0 : index
    %587 = vector.load %arg12[%c8_182, %c0_183] : memref<64x64xbf16, #tpu.memory_space<vmem>>, vector<8x64xbf16>
    %588 = arith.extf %587 : vector<8x64xbf16> to vector<8x64xf32>
    %589 = arith.mulf %588, %581 : vector<8x64xf32>
    %cst_184 = arith.constant dense<0.000000e+00> : vector<8xf32>
    %590 = vector.multi_reduction <add>, %589, %cst_184 [1] : vector<8x64xf32> to vector<8xf32>
    %591 = vector.shape_cast %590 : vector<8xf32> to vector<8x1xf32>
    %c16_185 = arith.constant 16 : index
    %c0_186 = arith.constant 0 : index
    %592 = vector.load %arg12[%c16_185, %c0_186] : memref<64x64xbf16, #tpu.memory_space<vmem>>, vector<8x64xbf16>
    %593 = arith.extf %592 : vector<8x64xbf16> to vector<8x64xf32>
    %594 = arith.mulf %593, %581 : vector<8x64xf32>
    %cst_187 = arith.constant dense<0.000000e+00> : vector<8xf32>
    %595 = vector.multi_reduction <add>, %594, %cst_187 [1] : vector<8x64xf32> to vector<8xf32>
    %596 = vector.shape_cast %595 : vector<8xf32> to vector<8x1xf32>
    %c24_188 = arith.constant 24 : index
    %c0_189 = arith.constant 0 : index
    %597 = vector.load %arg12[%c24_188, %c0_189] : memref<64x64xbf16, #tpu.memory_space<vmem>>, vector<8x64xbf16>
    %598 = arith.extf %597 : vector<8x64xbf16> to vector<8x64xf32>
    %599 = arith.mulf %598, %581 : vector<8x64xf32>
    %cst_190 = arith.constant dense<0.000000e+00> : vector<8xf32>
    %600 = vector.multi_reduction <add>, %599, %cst_190 [1] : vector<8x64xf32> to vector<8xf32>
    %601 = vector.shape_cast %600 : vector<8xf32> to vector<8x1xf32>
    %c32_191 = arith.constant 32 : index
    %c0_192 = arith.constant 0 : index
    %602 = vector.load %arg12[%c32_191, %c0_192] : memref<64x64xbf16, #tpu.memory_space<vmem>>, vector<8x64xbf16>
    %603 = arith.extf %602 : vector<8x64xbf16> to vector<8x64xf32>
    %604 = arith.mulf %603, %581 : vector<8x64xf32>
    %cst_193 = arith.constant dense<0.000000e+00> : vector<8xf32>
    %605 = vector.multi_reduction <add>, %604, %cst_193 [1] : vector<8x64xf32> to vector<8xf32>
    %606 = vector.shape_cast %605 : vector<8xf32> to vector<8x1xf32>
    %c40_194 = arith.constant 40 : index
    %c0_195 = arith.constant 0 : index
    %607 = vector.load %arg12[%c40_194, %c0_195] : memref<64x64xbf16, #tpu.memory_space<vmem>>, vector<8x64xbf16>
    %608 = arith.extf %607 : vector<8x64xbf16> to vector<8x64xf32>
    %609 = arith.mulf %608, %581 : vector<8x64xf32>
    %cst_196 = arith.constant dense<0.000000e+00> : vector<8xf32>
    %610 = vector.multi_reduction <add>, %609, %cst_196 [1] : vector<8x64xf32> to vector<8xf32>
    %611 = vector.shape_cast %610 : vector<8xf32> to vector<8x1xf32>
    %c48_197 = arith.constant 48 : index
    %c0_198 = arith.constant 0 : index
    %612 = vector.load %arg12[%c48_197, %c0_198] : memref<64x64xbf16, #tpu.memory_space<vmem>>, vector<8x64xbf16>
    %613 = arith.extf %612 : vector<8x64xbf16> to vector<8x64xf32>
    %614 = arith.mulf %613, %581 : vector<8x64xf32>
    %cst_199 = arith.constant dense<0.000000e+00> : vector<8xf32>
    %615 = vector.multi_reduction <add>, %614, %cst_199 [1] : vector<8x64xf32> to vector<8xf32>
    %616 = vector.shape_cast %615 : vector<8xf32> to vector<8x1xf32>
    %c56_200 = arith.constant 56 : index
    %c0_201 = arith.constant 0 : index
    %617 = vector.load %arg12[%c56_200, %c0_201] : memref<64x64xbf16, #tpu.memory_space<vmem>>, vector<8x64xbf16>
    %618 = arith.extf %617 : vector<8x64xbf16> to vector<8x64xf32>
    %619 = arith.mulf %618, %581 : vector<8x64xf32>
    %cst_202 = arith.constant dense<0.000000e+00> : vector<8xf32>
    %620 = vector.multi_reduction <add>, %619, %cst_202 [1] : vector<8x64xf32> to vector<8xf32>
    %621 = vector.shape_cast %620 : vector<8xf32> to vector<8x1xf32>
    %622 = tpu.concatenate %586, %591, %596, %601, %606, %611, %616, %621 in 1 : vector<8x1xf32>, vector<8x1xf32>, vector<8x1xf32>, vector<8x1xf32>, vector<8x1xf32>, vector<8x1xf32>, vector<8x1xf32>, vector<8x1xf32> -> vector<8x8xf32>
    %cst_203 = arith.constant dense<0xFF800000> : vector<8xf32>
    %623 = vector.multi_reduction <maximumf>, %622, %cst_203 [1] : vector<8x8xf32> to vector<8xf32>
    %624 = vector.shape_cast %623 : vector<8xf32> to vector<8x1xf32>
    %625 = vector.broadcast %624 : vector<8x1xf32> to vector<8x8xf32>
    %626 = arith.subf %622, %625 : vector<8x8xf32>
    %627 = math.exp %626 : vector<8x8xf32>
    %cst_204 = arith.constant dense<0.000000e+00> : vector<8xf32>
    %628 = vector.multi_reduction <add>, %627, %cst_204 [1] : vector<8x8xf32> to vector<8xf32>
    %629 = vector.shape_cast %628 : vector<8xf32> to vector<8x1xf32>
    %630 = tpu.reciprocal %629 {approx = true} : vector<8x1xf32> -> vector<8x1xf32>
    %631 = vector.broadcast %630 : vector<8x1xf32> to vector<8x8xf32>
    %632 = arith.mulf %627, %631 : vector<8x8xf32>
    %cst_205 = arith.constant 0.000000e+00 : f32
    %633 = vector.broadcast %cst_205 : f32 to vector<8x64xf32>
    %c0_206 = arith.constant 0 : index
    %c0_207 = arith.constant 0 : index
    %634 = vector.load %arg12[%c0_206, %c0_207] : memref<64x64xbf16, #tpu.memory_space<vmem>>, vector<8x64xbf16>
    %635 = arith.extf %634 : vector<8x64xbf16> to vector<8x64xf32>
    %636 = vector.extract_strided_slice %632 {offsets = [0, 0], sizes = [8, 1], strides = [1, 1]} : vector<8x8xf32> to vector<8x1xf32>
    %637 = vector.broadcast %636 : vector<8x1xf32> to vector<8x64xf32>
    %638 = arith.mulf %635, %637 : vector<8x64xf32>
    %639 = arith.addf %633, %638 : vector<8x64xf32>
    %c8_208 = arith.constant 8 : index
    %c0_209 = arith.constant 0 : index
    %640 = vector.load %arg12[%c8_208, %c0_209] : memref<64x64xbf16, #tpu.memory_space<vmem>>, vector<8x64xbf16>
    %641 = arith.extf %640 : vector<8x64xbf16> to vector<8x64xf32>
    %642 = vector.extract_strided_slice %632 {offsets = [0, 1], sizes = [8, 1], strides = [1, 1]} : vector<8x8xf32> to vector<8x1xf32>
    %643 = vector.broadcast %642 : vector<8x1xf32> to vector<8x64xf32>
    %644 = arith.mulf %641, %643 : vector<8x64xf32>
    %645 = arith.addf %639, %644 : vector<8x64xf32>
    %c16_210 = arith.constant 16 : index
    %c0_211 = arith.constant 0 : index
    %646 = vector.load %arg12[%c16_210, %c0_211] : memref<64x64xbf16, #tpu.memory_space<vmem>>, vector<8x64xbf16>
    %647 = arith.extf %646 : vector<8x64xbf16> to vector<8x64xf32>
    %648 = vector.extract_strided_slice %632 {offsets = [0, 2], sizes = [8, 1], strides = [1, 1]} : vector<8x8xf32> to vector<8x1xf32>
    %649 = vector.broadcast %648 : vector<8x1xf32> to vector<8x64xf32>
    %650 = arith.mulf %647, %649 : vector<8x64xf32>
    %651 = arith.addf %645, %650 : vector<8x64xf32>
    %c24_212 = arith.constant 24 : index
    %c0_213 = arith.constant 0 : index
    %652 = vector.load %arg12[%c24_212, %c0_213] : memref<64x64xbf16, #tpu.memory_space<vmem>>, vector<8x64xbf16>
    %653 = arith.extf %652 : vector<8x64xbf16> to vector<8x64xf32>
    %654 = vector.extract_strided_slice %632 {offsets = [0, 3], sizes = [8, 1], strides = [1, 1]} : vector<8x8xf32> to vector<8x1xf32>
    %655 = vector.broadcast %654 : vector<8x1xf32> to vector<8x64xf32>
    %656 = arith.mulf %653, %655 : vector<8x64xf32>
    %657 = arith.addf %651, %656 : vector<8x64xf32>
    %c32_214 = arith.constant 32 : index
    %c0_215 = arith.constant 0 : index
    %658 = vector.load %arg12[%c32_214, %c0_215] : memref<64x64xbf16, #tpu.memory_space<vmem>>, vector<8x64xbf16>
    %659 = arith.extf %658 : vector<8x64xbf16> to vector<8x64xf32>
    %660 = vector.extract_strided_slice %632 {offsets = [0, 4], sizes = [8, 1], strides = [1, 1]} : vector<8x8xf32> to vector<8x1xf32>
    %661 = vector.broadcast %660 : vector<8x1xf32> to vector<8x64xf32>
    %662 = arith.mulf %659, %661 : vector<8x64xf32>
    %663 = arith.addf %657, %662 : vector<8x64xf32>
    %c40_216 = arith.constant 40 : index
    %c0_217 = arith.constant 0 : index
    %664 = vector.load %arg12[%c40_216, %c0_217] : memref<64x64xbf16, #tpu.memory_space<vmem>>, vector<8x64xbf16>
    %665 = arith.extf %664 : vector<8x64xbf16> to vector<8x64xf32>
    %666 = vector.extract_strided_slice %632 {offsets = [0, 5], sizes = [8, 1], strides = [1, 1]} : vector<8x8xf32> to vector<8x1xf32>
    %667 = vector.broadcast %666 : vector<8x1xf32> to vector<8x64xf32>
    %668 = arith.mulf %665, %667 : vector<8x64xf32>
    %669 = arith.addf %663, %668 : vector<8x64xf32>
    %c48_218 = arith.constant 48 : index
    %c0_219 = arith.constant 0 : index
    %670 = vector.load %arg12[%c48_218, %c0_219] : memref<64x64xbf16, #tpu.memory_space<vmem>>, vector<8x64xbf16>
    %671 = arith.extf %670 : vector<8x64xbf16> to vector<8x64xf32>
    %672 = vector.extract_strided_slice %632 {offsets = [0, 6], sizes = [8, 1], strides = [1, 1]} : vector<8x8xf32> to vector<8x1xf32>
    %673 = vector.broadcast %672 : vector<8x1xf32> to vector<8x64xf32>
    %674 = arith.mulf %671, %673 : vector<8x64xf32>
    %675 = arith.addf %669, %674 : vector<8x64xf32>
    %c56_220 = arith.constant 56 : index
    %c0_221 = arith.constant 0 : index
    %676 = vector.load %arg12[%c56_220, %c0_221] : memref<64x64xbf16, #tpu.memory_space<vmem>>, vector<8x64xbf16>
    %677 = arith.extf %676 : vector<8x64xbf16> to vector<8x64xf32>
    %678 = vector.extract_strided_slice %632 {offsets = [0, 7], sizes = [8, 1], strides = [1, 1]} : vector<8x8xf32> to vector<8x1xf32>
    %679 = vector.broadcast %678 : vector<8x1xf32> to vector<8x64xf32>
    %680 = arith.mulf %677, %679 : vector<8x64xf32>
    %681 = arith.addf %675, %680 : vector<8x64xf32>
    %682 = arith.truncf %681 : vector<8x64xf32> to vector<8x64xbf16>
    %c0_222 = arith.constant 0 : index
    %c0_223 = arith.constant 0 : index
    %683 = vector.load %arg8[%c0_222, %c0_223] : memref<64x128xbf16, #tpu.memory_space<vmem>>, vector<64x128xbf16>
    %cst_224 = arith.constant dense<0.000000e+00> : vector<8x128xf32>
    %684 = tpu.matmul %682, %683, %cst_224 {dimension_numbers = #tpu.dot_dimension_numbers<[1], [0], [0], [1], [0, 0, 1, 1], [], []>} : vector<8x64xbf16>, vector<64x128xbf16>, vector<8x128xf32> -> vector<8x128xf32>
    %c0_225 = arith.constant 0 : index
    %c0_226 = arith.constant 0 : index
    %685 = vector.load %arg9[%c0_225, %c0_226] : memref<1x128xf32, #tpu.memory_space<vmem>>, vector<1x128xf32>
    %686 = vector.broadcast %685 : vector<1x128xf32> to vector<8x128xf32>
    %687 = arith.addf %684, %686 : vector<8x128xf32>
    %688 = arith.negf %687 : vector<8x128xf32>
    %689 = math.exp %688 : vector<8x128xf32>
    %cst_227 = arith.constant 1.000000e+00 : f32
    %690 = vector.broadcast %cst_227 : f32 to vector<8x128xf32>
    %691 = arith.addf %690, %689 : vector<8x128xf32>
    %692 = arith.divf %690, %691 : vector<8x128xf32>
    %c0_228 = arith.constant 0 : index
    %c0_229 = arith.constant 0 : index
    %693 = vector.load %arg10[%c0_228, %c0_229] : memref<8x128xf32, #tpu.memory_space<vmem>>, vector<8x128xf32>
    tpu.vector_store %arg10[%c0_228, %c0_229], %692 {strides = array<i32>} : memref<8x128xf32, #tpu.memory_space<vmem>>, vector<8x128xf32>,
    return
  }
  func.func @transform_0(%arg0: i32) -> (i32, i32, i32) {
    %c0_i32 = arith.constant 0 : i32
    %c0_i32_0 = arith.constant 0 : i32
    %c0_i32_1 = arith.constant 0 : i32
    return %arg0, %c0_i32, %c0_i32_0 : i32, i32, i32
  }
  func.func @transform_1(%arg0: i32) -> (i32, i32) {
    %c0_i32 = arith.constant 0 : i32
    %c0_i32_0 = arith.constant 0 : i32
    %c0_i32_1 = arith.constant 0 : i32
    return %c0_i32, %c0_i32_0 : i32, i32
  }
  func.func @transform_2(%arg0: i32) -> (i32, i32) {
    %c0_i32 = arith.constant 0 : i32
    %c0_i32_0 = arith.constant 0 : i32
    %c0_i32_1 = arith.constant 0 : i32
    return %c0_i32, %c0_i32_0 : i32, i32
  }
  func.func @transform_3(%arg0: i32) -> (i32, i32) {
    %c0_i32 = arith.constant 0 : i32
    %c0_i32_0 = arith.constant 0 : i32
    %c0_i32_1 = arith.constant 0 : i32
    return %c0_i32, %c0_i32_0 : i32, i32
  }
  func.func @transform_4(%arg0: i32) -> (i32, i32) {
    %c0_i32 = arith.constant 0 : i32
    %c0_i32_0 = arith.constant 0 : i32
    %c0_i32_1 = arith.constant 0 : i32
    return %c0_i32, %c0_i32_0 : i32, i32
  }
  func.func @transform_5(%arg0: i32) -> (i32, i32) {
    %c0_i32 = arith.constant 0 : i32
    %c0_i32_0 = arith.constant 0 : i32
    %c0_i32_1 = arith.constant 0 : i32
    return %c0_i32, %c0_i32_0 : i32, i32
  }
  func.func @transform_6(%arg0: i32) -> (i32, i32) {
    %c0_i32 = arith.constant 0 : i32
    %c0_i32_0 = arith.constant 0 : i32
    %c0_i32_1 = arith.constant 0 : i32
    return %c0_i32, %c0_i32_0 : i32, i32
  }
  func.func @transform_7(%arg0: i32) -> (i32, i32) {
    %c0_i32 = arith.constant 0 : i32
    %c0_i32_0 = arith.constant 0 : i32
    %c0_i32_1 = arith.constant 0 : i32
    return %c0_i32, %c0_i32_0 : i32, i32
  }
  func.func @transform_8(%arg0: i32) -> (i32, i32) {
    %c0_i32 = arith.constant 0 : i32
    %c0_i32_0 = arith.constant 0 : i32
    %c0_i32_1 = arith.constant 0 : i32
    return %c0_i32, %c0_i32_0 : i32, i32
  }
  func.func @transform_9(%arg0: i32) -> (i32, i32) {
    %c0_i32 = arith.constant 0 : i32
    %c0_i32_0 = arith.constant 0 : i32
    return %arg0, %c0_i32 : i32, i32
  }
}

</mosaic_0001>

<llo_original>
// kernel: nn_forward.1
$region0: #{nn_forward.1}
  #allocation0 [shape = 'u32[]', space=smem, size = 0x4, offset = 0x4, fixed_abs, tag = 'smem constant byte address 0x4 - core index']
  #allocation1 [shape = 'u32[144,128]{1,0:T(1,128)}', space=vmem, size = 0x12000, scoped, tag = 'internal scratch']
  #allocation2 [shape = 'f32[64,256]{1,0:T(8,128)}', space=vmem, size = 0x10000, scoped, tag = 'scratch operand']
  #allocation3 [shape = 'bf16[64,64]{1,0:T(16,128)(2,1)}', space=vmem, size = 0x4000, scoped, tag = 'scratch operand']
  %s0 = inlined_call_operand.vmem [shape: bf16[1,64,32], index: 0, kind: input, shape index: {}]
  %s1 = inlined_call_operand.vmem [shape: bf16[32,256], index: 1, kind: input, shape index: {}]
  %s2 = inlined_call_operand.vmem [shape: bf16[64,256], index: 2, kind: input, shape index: {}]
  %s3 = inlined_call_operand.vmem [shape: f32[1,256], index: 3, kind: input, shape index: {}]
  %s4 = inlined_call_operand.vmem [shape: bf16[64,256], index: 4, kind: input, shape index: {}]
  %s5 = inlined_call_operand.vmem [shape: bf16[64,256], index: 5, kind: input, shape index: {}]
  %s6 = inlined_call_operand.hbm [shape: f32[1,256], index: 6, kind: input, shape index: {}]
  %s7 = inlined_call_operand.hbm [shape: bf16[64,128], index: 7, kind: input, shape index: {}]
  %s8 = inlined_call_operand.vmem [shape: f32[1,128], index: 8, kind: input, shape index: {}]
  %s9 = inlined_call_operand.vmem [shape: f32[8,128], index: 9, kind: output, shape index: {}]
  %s10 = sld [smem:[#allocation0]]
  $region54: #{nn_forward.1} parent=0
    _
  %s12 = ssub.s32 1, %s10
  %s13 = scalar_select 0, %s12, %s10
  $region1: #{nn_forward.1} parent=0
    #allocation4 [shape = 'u8[1024]{0}', space=vmem, size = 0x400, scoped, tag = 'input window, operand 6, single buffered']
    #allocation5 [shape = 's32[1]{0}', space=sflag, size = 0x4, scoped, tag = 'scoped memory for nn_forward.1']
    #allocation6 [shape = 'u8[16384]{0}', space=vmem, size = 0x4000, scoped, tag = 'input window, operand 7, single buffered']
    #allocation7 [shape = 's32[1]{0}', space=sflag, size = 0x4, scoped, tag = 'scoped memory for nn_forward.1']
    %14 = vsyncpa [#allocation5], 0
    %15 = vsyncpa [#allocation7], 0
    // Predicated region
    $region2: #{nn_forward.1} parent=1 // pred_check
      _
    $region3: #{nn_forward.1} parent=1 // pred_check_branch
      %17 = sbr.rel (0) target = $region5
    $region4: #{nn_forward.1} parent=1 // pred_region
      _
    $region5: #{nn_forward.1} parent=1 // pred_fallthru
      _
    // Predicated region
    $region6: #{nn_forward.1} parent=1 // pred_check
      _
    $region7: #{nn_forward.1} parent=1 // pred_check_branch
      %19 = sbr.rel (0) target = $region9
    $region8: #{nn_forward.1} parent=1 // pred_region
      _
    $region9: #{nn_forward.1} parent=1 // pred_fallthru
      _
    // Predicated region
    $region10: #{nn_forward.1} parent=1 // pred_check
      _
    $region11: #{nn_forward.1} parent=1 // pred_check_branch
      %21 = sbr.rel (0) target = $region13
    $region12: #{nn_forward.1} parent=1 // pred_region
      _
    $region13: #{nn_forward.1} parent=1 // pred_fallthru
      _
    // Predicated region
    $region14: #{nn_forward.1} parent=1 // pred_check
      _
    $region15: #{nn_forward.1} parent=1 // pred_check_branch
      %23 = sbr.rel (0) target = $region17
    $region16: #{nn_forward.1} parent=1 // pred_region
      _
    $region17: #{nn_forward.1} parent=1 // pred_fallthru
      _
    // Predicated region
    $region18: #{nn_forward.1} parent=1 // pred_check
      _
    $region19: #{nn_forward.1} parent=1 // pred_check_branch
      %25 = sbr.rel (0) target = $region21
    $region20: #{nn_forward.1} parent=1 // pred_region
      _
    $region21: #{nn_forward.1} parent=1 // pred_fallthru
      _
    // Predicated region
    $region22: #{nn_forward.1} parent=1 // pred_check
      _
    $region23: #{nn_forward.1} parent=1 // pred_check_branch
      %27 = sbr.rel (0) target = $region25
    $region24: #{nn_forward.1} parent=1 // pred_region
      _
    $region25: #{nn_forward.1} parent=1 // pred_fallthru
      _
    // Predicated region
    $region26: #{nn_forward.1} parent=1 // pred_check
      _
    $region27: #{nn_forward.1} parent=1 // pred_check_branch
      %29 = sbr.rel (0) target = $region29
    $region28: #{nn_forward.1} parent=1 // pred_region
      %s31 = ssub.s32 32, 32
      %32 = vsyncadd [#allocation5], %s31
      %s34 = sshll.u32 [#allocation4], 4
      %s35 = int_to_ptr.vmem [resolvable:$true] %s34
      %37 = dma.hbm_to_vmem [thread:$0]  %s6, 32, %s35, [#allocation5]
    $region29: #{nn_forward.1} parent=1 // pred_fallthru
      _
    // Predicated region
    $region30: #{nn_forward.1} parent=1 // pred_check
      _
    $region31: #{nn_forward.1} parent=1 // pred_check_branch
      %39 = sbr.rel (0) target = $region33
    $region32: #{nn_forward.1} parent=1 // pred_region
      %s41 = ssub.s32 512, 512
      %42 = vsyncadd [#allocation7], %s41
      %s43 = sshll.u32 [#allocation6], 4
      %s44 = int_to_ptr.vmem [resolvable:$true] %s43
      %49 = dma.hbm_to_vmem [thread:$0]  %s7, 512, %s44, [#allocation7], 64, 64, 4
    $region33: #{nn_forward.1} parent=1 // pred_fallthru
      _
    // Predicated region
    $region34: #{nn_forward.1} parent=1 // pred_check
      _
    $region35: #{nn_forward.1} parent=1 // pred_check_branch
      %51 = sbr.rel (0) target = $region37
    $region36: #{nn_forward.1} parent=1 // pred_region
      _
    $region37: #{nn_forward.1} parent=1 // pred_fallthru
      _
    // Predicated region
    $region38: #{nn_forward.1} parent=1 // pred_check
      _
    $region39: #{nn_forward.1} parent=1 // pred_check_branch
      %53 = sbr.rel (0) target = $region41
    $region40: #{nn_forward.1} parent=1 // pred_region
      %54 = dma.done [#allocation5], 32
    $region41: #{nn_forward.1} parent=1 // pred_fallthru
      _
    // Predicated region
    $region42: #{nn_forward.1} parent=1 // pred_check
      _
    $region43: #{nn_forward.1} parent=1 // pred_check_branch
      %56 = sbr.rel (0) target = $region45
    $region44: #{nn_forward.1} parent=1 // pred_region
      %57 = dma.done [#allocation7], 512
    $region45: #{nn_forward.1} parent=1 // pred_fallthru
      _
    %v59 = vld [vmem:[%s0] sm:$0xf]
    %v60 = vld [vmem:[%s0 + $0x4] sm:$0xf]
    %v61 = vld [vmem:[%s0 + $0x8] sm:$0xf]
    %v62 = vld [vmem:[%s0 + $0xc] sm:$0xf]
    %v63 = vld [vmem:[%s0 + $0x10] sm:$0xf]
    %v64 = vld [vmem:[%s0 + $0x14] sm:$0xf]
    %v65 = vld [vmem:[%s0 + $0x18] sm:$0xf]
    %v66 = vld [vmem:[%s0 + $0x1c] sm:$0xf]
    %v67 = vld [vmem:[%s1] sm:$0xff]
    %v68 = vld [vmem:[%s1 + $0x8] sm:$0xff]
    %v69 = vld [vmem:[%s1 + $0x10] sm:$0xff]
    %v70 = vld [vmem:[%s1 + $0x18] sm:$0xff]
    %v71 = vld [vmem:[%s3] sm:$0x3]
    %v73 = vlaneseq
    %v74 = vshrl.u32 %v73, 7
    %v75 = vsub.s32 0, %v74
    %v76 = vrot.slane %v71, %v75
    %v77 = vlaneseq
    %v78 = vshrl.u32 %v77, 7
    %v79 = vsub.s32 1, %v78
    %v80 = vrot.slane %v71, %v79
    %v91 = vunpack.c.l.b16 %v59
    %v92 = vunpack.c.l.b16 %v60
    %v93 = vunpack.c.l.b16 %v61
    %v94 = vunpack.c.l.b16 %v62
    %v95 = vunpack.c.l.b16 %v63
    %v96 = vunpack.c.l.b16 %v64
    %v97 = vunpack.c.l.b16 %v65
    %v98 = vunpack.c.l.b16 %v66
    %v99 = vpack.c.b16 %v92, %v91
    %v100 = vpack.c.b16 %v94, %v93
    %v101 = vpack.c.b16 %v96, %v95
    %v102 = vpack.c.b16 %v98, %v97
    %v107 = vunpack.c.l.b16 %v67
    %v108 = vunpack.c.h.b16 %v67
    %v109 = vunpack.c.l.b16 %v68
    %v110 = vunpack.c.h.b16 %v68
    %v111 = vunpack.c.l.b16 %v69
    %v112 = vunpack.c.h.b16 %v69
    %v113 = vunpack.c.l.b16 %v70
    %v114 = vunpack.c.h.b16 %v70
    %v115 = vpack.c.b16 %v109, %v107
    %v116 = vpack.c.b16 %v110, %v108
    %v117 = vpack.c.b16 %v113, %v111
    %v118 = vpack.c.b16 %v114, %v112
    %vm123 = vcmask 261120
    %v125 = vsel %vm123, %v99, 0
    %v128 = vsel %vm123, %v100, 0
    %v131 = vsel %vm123, %v101, 0
    %v134 = vsel %vm123, %v102, 0
    %136 = vmatprep.subr.bf16.mxu0 %v116
    %137 = vmatpush1.bf16.msra.mxu0 %v115
    %138 = vmatprep.subr.bf16.mxu0 %v118
    %139 = vmatpush1.bf16.msra.mxu0 %v117
    %140 = vmatprep.subr.bf16.mxu0 0
    %141 = vmatpush1.bf16.msra.mxu0 0
    %142 = vmatprep.subr.bf16.mxu0 0
    %143 = vmatpush1.bf16.msra.mxu0 0
    %144 = vmatprep.subr.bf16.mxu0 0
    %145 = vmatpush1.bf16.msra.mxu0 0
    %146 = vmatprep.subr.bf16.mxu0 0
    %147 = vmatpush1.bf16.msra.mxu0 0
    %148 = vmatprep.subr.bf16.mxu0 0
    %149 = vmatpush1.bf16.msra.mxu0 0
    %150 = vmatprep.subr.bf16.mxu0 0
    %151 = vmatpush1.bf16.msra.mxu0 0
    %152 = vmatprep.subr.bf16.mxu0 0
    %153 = vmatpush1.bf16.msra.mxu0 0
    %154 = vmatprep.subr.bf16.mxu0 0
    %155 = vmatpush1.bf16.msra.mxu0 0
    %156 = vmatprep.subr.bf16.mxu0 0
    %157 = vmatpush1.bf16.msra.mxu0 0
    %158 = vmatprep.subr.bf16.mxu0 0
    %159 = vmatpush1.bf16.msra.mxu0 0
    %160 = vmatprep.subr.bf16.mxu0 0
    %161 = vmatpush1.bf16.msra.mxu0 0
    %162 = vmatprep.subr.bf16.mxu0 0
    %163 = vmatpush1.bf16.msra.mxu0 0
    %164 = vmatprep.subr.bf16.mxu0 0
    %165 = vmatpush1.bf16.msra.mxu0 0
    %166 = vmatprep.subr.bf16.mxu0 0
    %167 = vmatpush1.bf16.msra.mxu0 0
    %168 = vmatprep.mubr.bf16.mxu0 0
    %169 = vmatmul.mubr.bf16.gmra.mrb[0].mxu0 %v125
    %v170 = vpop.f32.mrb[0].mxu0
    %v171 = vadd.f32 %v76, %v170
    %v172 = vpop.f32.mrb[0].mxu0
    %v173 = vadd.f32 %v80, %v172
    %v174 = vpop.f32.mrb[0].mxu0
    %v175 = vadd.f32 %v76, %v174
    %v176 = vpop.f32.mrb[0].mxu0
    %v177 = vadd.f32 %v80, %v176
    %178 = vmatprep.mubr.bf16.mxu0 0
    %179 = vmatmul.mubr.bf16.gmra.mrb[0].mxu0 %v128
    %v180 = vpop.f32.mrb[0].mxu0
    %v181 = vadd.f32 %v76, %v180
    %v182 = vpop.f32.mrb[0].mxu0
    %v183 = vadd.f32 %v80, %v182
    %v184 = vpop.f32.mrb[0].mxu0
    %v185 = vadd.f32 %v76, %v184
    %v186 = vpop.f32.mrb[0].mxu0
    %v187 = vadd.f32 %v80, %v186
    %188 = vmatprep.mubr.bf16.mxu0 0
    %189 = vmatmul.mubr.bf16.gmra.mrb[0].mxu0 %v131
    %v190 = vpop.f32.mrb[0].mxu0
    %v191 = vadd.f32 %v76, %v190
    %v192 = vpop.f32.mrb[0].mxu0
    %v193 = vadd.f32 %v80, %v192
    %v194 = vpop.f32.mrb[0].mxu0
    %v195 = vadd.f32 %v76, %v194
    %v196 = vpop.f32.mrb[0].mxu0
    %v197 = vadd.f32 %v80, %v196
    %198 = vmatprep.mubr.bf16.mxu0 0
    %199 = vmatmul.mubr.bf16.gmra.mrb[0].mxu0 %v134
    %v200 = vpop.f32.mrb[0].mxu0
    %v201 = vadd.f32 %v76, %v200
    %v202 = vpop.f32.mrb[0].mxu0
    %v203 = vadd.f32 %v80, %v202
    %v204 = vpop.f32.mrb[0].mxu0
    %v205 = vadd.f32 %v76, %v204
    %v206 = vpop.f32.mrb[0].mxu0
    %v207 = vadd.f32 %v80, %v206
    %208 = vdwg.mxu0
    %209 = vst [vmem:[#allocation2] sm:$0xff] %v171
    %210 = vst [vmem:[#allocation2 + $0x8] sm:$0xff] %v173
    %211 = vst [vmem:[#allocation2 + $0x10] sm:$0xff] %v175
    %212 = vst [vmem:[#allocation2 + $0x18] sm:$0xff] %v177
    %213 = vst [vmem:[#allocation2 + $0x20] sm:$0xff] %v181
    %214 = vst [vmem:[#allocation2 + $0x28] sm:$0xff] %v183
    %215 = vst [vmem:[#allocation2 + $0x30] sm:$0xff] %v185
    %216 = vst [vmem:[#allocation2 + $0x38] sm:$0xff] %v187
    %217 = vst [vmem:[#allocation2 + $0x40] sm:$0xff] %v191
    %218 = vst [vmem:[#allocation2 + $0x48] sm:$0xff] %v193
    %219 = vst [vmem:[#allocation2 + $0x50] sm:$0xff] %v195
    %220 = vst [vmem:[#allocation2 + $0x58] sm:$0xff] %v197
    %221 = vst [vmem:[#allocation2 + $0x60] sm:$0xff] %v201
    %222 = vst [vmem:[#allocation2 + $0x68] sm:$0xff] %v203
    %223 = vst [vmem:[#allocation2 + $0x70] sm:$0xff] %v205
    %224 = vst [vmem:[#allocation2 + $0x78] sm:$0xff] %v207
    %v225 = vld [vmem:[%s2] sm:$0xff]
    %v226 = vld [vmem:[%s2 + $0x8] sm:$0xff]
    %v227 = vld [vmem:[%s2 + $0x10] sm:$0xff]
    %v228 = vld [vmem:[%s2 + $0x18] sm:$0xff]
    %v229 = vld [vmem:[%s2 + $0x20] sm:$0xff]
    %v230 = vld [vmem:[%s2 + $0x28] sm:$0xff]
    %v231 = vld [vmem:[%s2 + $0x30] sm:$0xff]
    %v232 = vld [vmem:[%s2 + $0x38] sm:$0xff]
    %v241 = vunpack.c.l.b16 %v225
    %v242 = vunpack.c.h.b16 %v225
    %v243 = vunpack.c.l.b16 %v226
    %v244 = vunpack.c.h.b16 %v226
    %v245 = vunpack.c.l.b16 %v227
    %v246 = vunpack.c.h.b16 %v227
    %v247 = vunpack.c.l.b16 %v228
    %v248 = vunpack.c.h.b16 %v228
    %v249 = vunpack.c.l.b16 %v229
    %v250 = vunpack.c.h.b16 %v229
    %v251 = vunpack.c.l.b16 %v230
    %v252 = vunpack.c.h.b16 %v230
    %v253 = vunpack.c.l.b16 %v231
    %v254 = vunpack.c.h.b16 %v231
    %v255 = vunpack.c.l.b16 %v232
    %v256 = vunpack.c.h.b16 %v232
    %v257 = vpack.c.b16 %v243, %v241
    %v258 = vpack.c.b16 %v244, %v242
    %v259 = vpack.c.b16 %v247, %v245
    %v260 = vpack.c.b16 %v248, %v246
    %v261 = vpack.c.b16 %v251, %v249
    %v262 = vpack.c.b16 %v252, %v250
    %v263 = vpack.c.b16 %v255, %v253
    %v264 = vpack.c.b16 %v256, %v254
    %vm273 = vcmask 523264
    %v275 = vsel %vm273, 0, 0
    %277 = vmatprep.subr.bf16.mxu0 %v258
    %278 = vmatpush1.bf16.msra.mxu0 %v257
    %279 = vmatprep.subr.bf16.mxu0 %v260
    %280 = vmatpush1.bf16.msra.mxu0 %v259
    %281 = vmatprep.subr.bf16.mxu0 %v262
    %282 = vmatpush1.bf16.msra.mxu0 %v261
    %283 = vmatprep.subr.bf16.mxu0 %v264
    %284 = vmatpush1.bf16.msra.mxu0 %v263
    %285 = vmatprep.subr.bf16.mxu0 0
    %286 = vmatpush1.bf16.msra.mxu0 0
    %287 = vmatprep.subr.bf16.mxu0 0
    %288 = vmatpush1.bf16.msra.mxu0 0
    %289 = vmatprep.subr.bf16.mxu0 0
    %290 = vmatpush1.bf16.msra.mxu0 0
    %291 = vmatprep.subr.bf16.mxu0 0
    %292 = vmatpush1.bf16.msra.mxu0 0
    %293 = vmatprep.subr.bf16.mxu0 0
    %294 = vmatpush1.bf16.msra.mxu0 0
    %295 = vmatprep.subr.bf16.mxu0 0
    %296 = vmatpush1.bf16.msra.mxu0 0
    %297 = vmatprep.subr.bf16.mxu0 0
    %298 = vmatpush1.bf16.msra.mxu0 0
    %299 = vmatprep.subr.bf16.mxu0 0
    %300 = vmatpush1.bf16.msra.mxu0 0
    %301 = vmatprep.subr.bf16.mxu0 0
    %302 = vmatpush1.bf16.msra.mxu0 0
    %303 = vmatprep.subr.bf16.mxu0 0
    %304 = vmatpush1.bf16.msra.mxu0 0
    %305 = vmatprep.subr.bf16.mxu0 0
    %306 = vmatpush1.bf16.msra.mxu0 0
    %307 = vmatprep.subr.bf16.mxu0 0
    %308 = vmatpush1.bf16.msra.mxu0 0
    %309 = vmatprep.mubr.bf16.mxu0 0
    %310 = vmatmul.mubr.bf16.gmra.mrb[0].mxu0 %v275
    %v311 = vpop.f32.mrb[0].mxu0
    %v312 = vadd.f32 0.0, %v311
    %v313 = vpop.f32.mrb[0].mxu0
    %v314 = vadd.f32 0.0, %v313
    %v315 = vpop.f32.mrb[0].mxu0
    %v316 = vpop.f32.mrb[0].mxu0
    %317 = vdwg.mxu0
    %v318 = vld [vmem:[#allocation2] sm:$0xff]
    %v319 = vld [vmem:[#allocation2 + $0x78] sm:$0xff]
    %v320 = vadd.f32 %v318, %v312
    %v321 = vadd.f32 %v319, %v314
    %v322 = vxor.u32 %v320, 2147483648
    %v323 = vxor.u32 %v321, 2147483648
    %v324 = vmul.f32 %v322, 1.442695
    %v325 = vpow.pop %v324
    %v326 = vmul.f32 %v323, 1.442695
    %v327 = vpow.pop %v326
    %v328 = vadd.f32 %v325, 1.0
    %v329 = vadd.f32 %v327, 1.0
    %v330 = vrcp.pop %v328
    %v331 = vmul.f32 1.0, %v330
    %v332 = vrcp.pop %v329
    %v333 = vmul.f32 1.0, %v332
    %v334 = vtanh.pop %v320
    %v335 = vtanh.pop %v321
    %v336 = vmul.f32 %v331, 0.0
    %338 = vrot.lane.b32.xlu0 %v334, 64
    %v339 = vpop.permute.xlu0 %338
    %v341 = vmul.f32 %v331, %v339
    %343 = vrot.lane.b32.xlu0 %v341, 32
    %v344 = vpop.permute.xlu0 %343
    %v346 = vadd.f32 %v336, %v344
    %v347 = vmul.f32 %v333, 0.0
    %349 = vrot.lane.b32.xlu0 %v335, 64
    %v350 = vpop.permute.xlu0 %349
    %v352 = vmul.f32 %v333, %v350
    %354 = vrot.lane.b32.xlu0 %v352, 32
    %v355 = vpop.permute.xlu0 %354
    %v357 = vadd.f32 %v347, %v355
    %v358 = vtanh.pop %v346
    %360 = vrot.lane.b32.xlu0 %v358, 64
    %v361 = vpop.permute.xlu0 %360
    %v363 = vmul.f32 %v331, %v361
    %v364 = vtanh.pop %v357
    %366 = vrot.lane.b32.xlu0 %v364, 64
    %v367 = vpop.permute.xlu0 %366
    %v369 = vmul.f32 %v333, %v367
    %371 = vrot.lane.b32.xlu0 %v363, 32
    %v372 = vpop.permute.xlu0 %371
    %375 = vrot.lane.b32.xlu0 %v369, 64
    %v376 = vpop.permute.xlu0 %375
    %v378 = vsel %vm123, %v372, %v376
    %v379 = vpack.c.bf16 %v363, %v363
    %381 = vrot.lane.b32.xlu0 %v379, 32
    %v382 = vpop.permute.xlu0 %381
    %vm384 = vcmask 257024
    %385 = vst.msk [vmem:[#allocation3] sm:$0xf] %vm384, %v382
    %v386 = vpack.c.bf16 %v369, %v369
    %v388 = vrot.slane %v386, 4
    %389 = vrot.lane.b32.xlu0 %v388, 64
    %v390 = vpop.permute.xlu0 %389
    %vm392 = vcmask 523524
    %393 = vst.msk [vmem:[#allocation3 + $0x18] sm:$0xf0] %vm392, %v390
    %v394 = vpack.c.bf16 %v378, %v378
    %v396 = vsel %vm273, %v394, 0
    %398 = vmatprep.subr.bf16.mxu0 %v258
    %399 = vmatpush1.bf16.msra.mxu0 %v257
    %400 = vmatprep.subr.bf16.mxu0 %v260
    %401 = vmatpush1.bf16.msra.mxu0 %v259
    %402 = vmatprep.subr.bf16.mxu0 %v262
    %403 = vmatpush1.bf16.msra.mxu0 %v261
    %404 = vmatprep.subr.bf16.mxu0 %v264
    %405 = vmatpush1.bf16.msra.mxu0 %v263
    %406 = vmatprep.subr.bf16.mxu0 0
    %407 = vmatpush1.bf16.msra.mxu0 0
    %408 = vmatprep.subr.bf16.mxu0 0
    %409 = vmatpush1.bf16.msra.mxu0 0
    %410 = vmatprep.subr.bf16.mxu0 0
    %411 = vmatpush1.bf16.msra.mxu0 0
    %412 = vmatprep.subr.bf16.mxu0 0
    %413 = vmatpush1.bf16.msra.mxu0 0
    %414 = vmatprep.subr.bf16.mxu0 0
    %415 = vmatpush1.bf16.msra.mxu0 0
    %416 = vmatprep.subr.bf16.mxu0 0
    %417 = vmatpush1.bf16.msra.mxu0 0
    %418 = vmatprep.subr.bf16.mxu0 0
    %419 = vmatpush1.bf16.msra.mxu0 0
    %420 = vmatprep.subr.bf16.mxu0 0
    %421 = vmatpush1.bf16.msra.mxu0 0
    %422 = vmatprep.subr.bf16.mxu0 0
    %423 = vmatpush1.bf16.msra.mxu0 0
    %424 = vmatprep.subr.bf16.mxu0 0
    %425 = vmatpush1.bf16.msra.mxu0 0
    %426 = vmatprep.subr.bf16.mxu0 0
    %427 = vmatpush1.bf16.msra.mxu0 0
    %428 = vmatprep.subr.bf16.mxu0 0
    %429 = vmatpush1.bf16.msra.mxu0 0
    %430 = vmatprep.mubr.bf16.mxu0 0
    %431 = vmatmul.mubr.bf16.gmra.mrb[0].mxu0 %v396
    %v432 = vpop.f32.mrb[0].mxu0
    %v433 = vadd.f32 0.0, %v432
    %v434 = vpop.f32.mrb[0].mxu0
    %v435 = vadd.f32 0.0, %v434
    %v436 = vpop.f32.mrb[0].mxu0
    %v437 = vpop.f32.mrb[0].mxu0
    %438 = vdwg.mxu0
    %v439 = vld [vmem:[#allocation2 + $0x10] sm:$0xff]
    %v440 = vld [vmem:[#allocation2 + $0x68] sm:$0xff]
    %v441 = vadd.f32 %v439, %v433
    %v442 = vadd.f32 %v440, %v435
    %v443 = vxor.u32 %v441, 2147483648
    %v444 = vxor.u32 %v442, 2147483648
    %v445 = vmul.f32 %v443, 1.442695
    %v446 = vpow.pop %v445
    %v447 = vmul.f32 %v444, 1.442695
    %v448 = vpow.pop %v447
    %v449 = vadd.f32 %v446, 1.0
    %v450 = vadd.f32 %v448, 1.0
    %v451 = vrcp.pop %v449
    %v452 = vmul.f32 1.0, %v451
    %v453 = vrcp.pop %v450
    %v454 = vmul.f32 1.0, %v453
    %v455 = vtanh.pop %v441
    %v456 = vtanh.pop %v442
    %v457 = vmul.f32 %v452, %v346
    %459 = vrot.lane.b32.xlu0 %v455, 64
    %v460 = vpop.permute.xlu0 %459
    %v462 = vmul.f32 %v452, %v460
    %464 = vrot.lane.b32.xlu0 %v462, 32
    %v465 = vpop.permute.xlu0 %464
    %v467 = vadd.f32 %v457, %v465
    %v468 = vmul.f32 %v454, %v357
    %470 = vrot.lane.b32.xlu0 %v456, 64
    %v471 = vpop.permute.xlu0 %470
    %v473 = vmul.f32 %v454, %v471
    %475 = vrot.lane.b32.xlu0 %v473, 32
    %v476 = vpop.permute.xlu0 %475
    %v478 = vadd.f32 %v468, %v476
    %v479 = vtanh.pop %v467
    %481 = vrot.lane.b32.xlu0 %v479, 64
    %v482 = vpop.permute.xlu0 %481
    %v484 = vmul.f32 %v452, %v482
    %v485 = vtanh.pop %v478
    %487 = vrot.lane.b32.xlu0 %v485, 64
    %v488 = vpop.permute.xlu0 %487
    %v490 = vmul.f32 %v454, %v488
    %492 = vrot.lane.b32.xlu0 %v484, 32
    %v493 = vpop.permute.xlu0 %492
    %496 = vrot.lane.b32.xlu0 %v490, 64
    %v497 = vpop.permute.xlu0 %496
    %v499 = vsel %vm123, %v493, %v497
    %v500 = vpack.c.bf16 %v484, %v484
    %v502 = vrot.slane %v500, 4
    %503 = vrot.lane.b32.xlu0 %v502, 32
    %v504 = vpop.permute.xlu0 %503
    %vm506 = vcmask 261124
    %507 = vst.msk [vmem:[#allocation3] sm:$0xf0] %vm506, %v504
    %v508 = vpack.c.bf16 %v490, %v490
    %510 = vrot.lane.b32.xlu0 %v508, 64
    %v511 = vpop.permute.xlu0 %510
    %vm513 = vcmask 519424
    %514 = vst.msk [vmem:[#allocation3 + $0x18] sm:$0xf] %vm513, %v511
    %v515 = vpack.c.bf16 %v499, %v499
    %v517 = vsel %vm273, %v515, 0
    %519 = vmatprep.subr.bf16.mxu0 %v258
    %520 = vmatpush1.bf16.msra.mxu0 %v257
    %521 = vmatprep.subr.bf16.mxu0 %v260
    %522 = vmatpush1.bf16.msra.mxu0 %v259
    %523 = vmatprep.subr.bf16.mxu0 %v262
    %524 = vmatpush1.bf16.msra.mxu0 %v261
    %525 = vmatprep.subr.bf16.mxu0 %v264
    %526 = vmatpush1.bf16.msra.mxu0 %v263
    %527 = vmatprep.subr.bf16.mxu0 0
    %528 = vmatpush1.bf16.msra.mxu0 0
    %529 = vmatprep.subr.bf16.mxu0 0
    %530 = vmatpush1.bf16.msra.mxu0 0
    %531 = vmatprep.subr.bf16.mxu0 0
    %532 = vmatpush1.bf16.msra.mxu0 0
    %533 = vmatprep.subr.bf16.mxu0 0
    %534 = vmatpush1.bf16.msra.mxu0 0
    %535 = vmatprep.subr.bf16.mxu0 0
    %536 = vmatpush1.bf16.msra.mxu0 0
    %537 = vmatprep.subr.bf16.mxu0 0
    %538 = vmatpush1.bf16.msra.mxu0 0
    %539 = vmatprep.subr.bf16.mxu0 0
    %540 = vmatpush1.bf16.msra.mxu0 0
    %541 = vmatprep.subr.bf16.mxu0 0
    %542 = vmatpush1.bf16.msra.mxu0 0
    %543 = vmatprep.subr.bf16.mxu0 0
    %544 = vmatpush1.bf16.msra.mxu0 0
    %545 = vmatprep.subr.bf16.mxu0 0
    %546 = vmatpush1.bf16.msra.mxu0 0
    %547 = vmatprep.subr.bf16.mxu0 0
    %548 = vmatpush1.bf16.msra.mxu0 0
    %549 = vmatprep.subr.bf16.mxu0 0
    %550 = vmatpush1.bf16.msra.mxu0 0
    %551 = vmatprep.mubr.bf16.mxu0 0
    %552 = vmatmul.mubr.bf16.gmra.mrb[0].mxu0 %v517
    %v553 = vpop.f32.mrb[0].mxu0
    %v554 = vadd.f32 0.0, %v553
    %v555 = vpop.f32.mrb[0].mxu0
    %v556 = vadd.f32 0.0, %v555
    %v557 = vpop.f32.mrb[0].mxu0
    %v558 = vpop.f32.mrb[0].mxu0
    %559 = vdwg.mxu0
    %v560 = vld [vmem:[#allocation2 + $0x20] sm:$0xff]
    %v561 = vld [vmem:[#allocation2 + $0x58] sm:$0xff]
    %v562 = vadd.f32 %v560, %v554
    %v563 = vadd.f32 %v561, %v556
    %v564 = vxor.u32 %v562, 2147483648
    %v565 = vxor.u32 %v563, 2147483648
    %v566 = vmul.f32 %v564, 1.442695
    %v567 = vpow.pop %v566
    %v568 = vmul.f32 %v565, 1.442695
    %v569 = vpow.pop %v568
    %v570 = vadd.f32 %v567, 1.0
    %v571 = vadd.f32 %v569, 1.0
    %v572 = vrcp.pop %v570
    %v573 = vmul.f32 1.0, %v572
    %v574 = vrcp.pop %v571
    %v575 = vmul.f32 1.0, %v574
    %v576 = vtanh.pop %v562
    %v577 = vtanh.pop %v563
    %v578 = vmul.f32 %v573, %v467
    %580 = vrot.lane.b32.xlu0 %v576, 64
    %v581 = vpop.permute.xlu0 %580
    %v583 = vmul.f32 %v573, %v581
    %585 = vrot.lane.b32.xlu0 %v583, 32
    %v586 = vpop.permute.xlu0 %585
    %v588 = vadd.f32 %v578, %v586
    %v589 = vmul.f32 %v575, %v478
    %591 = vrot.lane.b32.xlu0 %v577, 64
    %v592 = vpop.permute.xlu0 %591
    %v594 = vmul.f32 %v575, %v592
    %596 = vrot.lane.b32.xlu0 %v594, 32
    %v597 = vpop.permute.xlu0 %596
    %v599 = vadd.f32 %v589, %v597
    %v600 = vtanh.pop %v588
    %602 = vrot.lane.b32.xlu0 %v600, 64
    %v603 = vpop.permute.xlu0 %602
    %v605 = vmul.f32 %v573, %v603
    %v606 = vtanh.pop %v599
    %608 = vrot.lane.b32.xlu0 %v606, 64
    %v609 = vpop.permute.xlu0 %608
    %v611 = vmul.f32 %v575, %v609
    %613 = vrot.lane.b32.xlu0 %v605, 32
    %v614 = vpop.permute.xlu0 %613
    %617 = vrot.lane.b32.xlu0 %v611, 64
    %v618 = vpop.permute.xlu0 %617
    %v620 = vsel %vm123, %v614, %v618
    %v621 = vpack.c.bf16 %v605, %v605
    %623 = vrot.lane.b32.xlu0 %v621, 32
    %v624 = vpop.permute.xlu0 %623
    %626 = vst.msk [vmem:[#allocation3 + $0x8] sm:$0xf] %vm384, %v624
    %v627 = vpack.c.bf16 %v611, %v611
    %v629 = vrot.slane %v627, 4
    %630 = vrot.lane.b32.xlu0 %v629, 64
    %v631 = vpop.permute.xlu0 %630
    %633 = vst.msk [vmem:[#allocation3 + $0x10] sm:$0xf0] %vm392, %v631
    %v634 = vpack.c.bf16 %v620, %v620
    %v636 = vsel %vm273, %v634, 0
    %638 = vmatprep.subr.bf16.mxu0 %v258
    %639 = vmatpush1.bf16.msra.mxu0 %v257
    %640 = vmatprep.subr.bf16.mxu0 %v260
    %641 = vmatpush1.bf16.msra.mxu0 %v259
    %642 = vmatprep.subr.bf16.mxu0 %v262
    %643 = vmatpush1.bf16.msra.mxu0 %v261
    %644 = vmatprep.subr.bf16.mxu0 %v264
    %645 = vmatpush1.bf16.msra.mxu0 %v263
    %646 = vmatprep.subr.bf16.mxu0 0
    %647 = vmatpush1.bf16.msra.mxu0 0
    %648 = vmatprep.subr.bf16.mxu0 0
    %649 = vmatpush1.bf16.msra.mxu0 0
    %650 = vmatprep.subr.bf16.mxu0 0
    %651 = vmatpush1.bf16.msra.mxu0 0
    %652 = vmatprep.subr.bf16.mxu0 0
    %653 = vmatpush1.bf16.msra.mxu0 0
    %654 = vmatprep.subr.bf16.mxu0 0
    %655 = vmatpush1.bf16.msra.mxu0 0
    %656 = vmatprep.subr.bf16.mxu0 0
    %657 = vmatpush1.bf16.msra.mxu0 0
    %658 = vmatprep.subr.bf16.mxu0 0
    %659 = vmatpush1.bf16.msra.mxu0 0
    %660 = vmatprep.subr.bf16.mxu0 0
    %661 = vmatpush1.bf16.msra.mxu0 0
    %662 = vmatprep.subr.bf16.mxu0 0
    %663 = vmatpush1.bf16.msra.mxu0 0
    %664 = vmatprep.subr.bf16.mxu0 0
    %665 = vmatpush1.bf16.msra.mxu0 0
    %666 = vmatprep.subr.bf16.mxu0 0
    %667 = vmatpush1.bf16.msra.mxu0 0
    %668 = vmatprep.subr.bf16.mxu0 0
    %669 = vmatpush1.bf16.msra.mxu0 0
    %670 = vmatprep.mubr.bf16.mxu0 0
    %671 = vmatmul.mubr.bf16.gmra.mrb[0].mxu0 %v636
    %v672 = vpop.f32.mrb[0].mxu0
    %v673 = vadd.f32 0.0, %v672
    %v674 = vpop.f32.mrb[0].mxu0
    %v675 = vadd.f32 0.0, %v674
    %v676 = vpop.f32.mrb[0].mxu0
    %v677 = vpop.f32.mrb[0].mxu0
    %678 = vdwg.mxu0
    %v679 = vld [vmem:[#allocation2 + $0x30] sm:$0xff]
    %v680 = vld [vmem:[#allocation2 + $0x48] sm:$0xff]
    %v681 = vadd.f32 %v679, %v673
    %v682 = vadd.f32 %v680, %v675
    %v683 = vxor.u32 %v681, 2147483648
    %v684 = vxor.u32 %v682, 2147483648
    %v685 = vmul.f32 %v683, 1.442695
    %v686 = vpow.pop %v685
    %v687 = vmul.f32 %v684, 1.442695
    %v688 = vpow.pop %v687
    %v689 = vadd.f32 %v686, 1.0
    %v690 = vadd.f32 %v688, 1.0
    %v691 = vrcp.pop %v689
    %v692 = vmul.f32 1.0, %v691
    %v693 = vrcp.pop %v690
    %v694 = vmul.f32 1.0, %v693
    %v695 = vtanh.pop %v681
    %v696 = vtanh.pop %v682
    %v697 = vmul.f32 %v692, %v588
    %699 = vrot.lane.b32.xlu0 %v695, 64
    %v700 = vpop.permute.xlu0 %699
    %v702 = vmul.f32 %v692, %v700
    %704 = vrot.lane.b32.xlu0 %v702, 32
    %v705 = vpop.permute.xlu0 %704
    %v707 = vadd.f32 %v697, %v705
    %v708 = vmul.f32 %v694, %v599
    %710 = vrot.lane.b32.xlu0 %v696, 64
    %v711 = vpop.permute.xlu0 %710
    %v713 = vmul.f32 %v694, %v711
    %715 = vrot.lane.b32.xlu0 %v713, 32
    %v716 = vpop.permute.xlu0 %715
    %v718 = vadd.f32 %v708, %v716
    %v719 = vtanh.pop %v707
    %721 = vrot.lane.b32.xlu0 %v719, 64
    %v722 = vpop.permute.xlu0 %721
    %v724 = vmul.f32 %v692, %v722
    %v725 = vtanh.pop %v718
    %727 = vrot.lane.b32.xlu0 %v725, 64
    %v728 = vpop.permute.xlu0 %727
    %v730 = vmul.f32 %v694, %v728
    %732 = vrot.lane.b32.xlu0 %v724, 32
    %v733 = vpop.permute.xlu0 %732
    %736 = vrot.lane.b32.xlu0 %v730, 64
    %v737 = vpop.permute.xlu0 %736
    %v739 = vsel %vm123, %v733, %v737
    %v740 = vpack.c.bf16 %v724, %v724
    %v742 = vrot.slane %v740, 4
    %743 = vrot.lane.b32.xlu0 %v742, 32
    %v744 = vpop.permute.xlu0 %743
    %746 = vst.msk [vmem:[#allocation3 + $0x8] sm:$0xf0] %vm506, %v744
    %v747 = vpack.c.bf16 %v730, %v730
    %749 = vrot.lane.b32.xlu0 %v747, 64
    %v750 = vpop.permute.xlu0 %749
    %752 = vst.msk [vmem:[#allocation3 + $0x10] sm:$0xf] %vm513, %v750
    %v753 = vpack.c.bf16 %v739, %v739
    %v755 = vsel %vm273, %v753, 0
    %757 = vmatprep.subr.bf16.mxu0 %v258
    %758 = vmatpush1.bf16.msra.mxu0 %v257
    %759 = vmatprep.subr.bf16.mxu0 %v260
    %760 = vmatpush1.bf16.msra.mxu0 %v259
    %761 = vmatprep.subr.bf16.mxu0 %v262
    %762 = vmatpush1.bf16.msra.mxu0 %v261
    %763 = vmatprep.subr.bf16.mxu0 %v264
    %764 = vmatpush1.bf16.msra.mxu0 %v263
    %765 = vmatprep.subr.bf16.mxu0 0
    %766 = vmatpush1.bf16.msra.mxu0 0
    %767 = vmatprep.subr.bf16.mxu0 0
    %768 = vmatpush1.bf16.msra.mxu0 0
    %769 = vmatprep.subr.bf16.mxu0 0
    %770 = vmatpush1.bf16.msra.mxu0 0
    %771 = vmatprep.subr.bf16.mxu0 0
    %772 = vmatpush1.bf16.msra.mxu0 0
    %773 = vmatprep.subr.bf16.mxu0 0
    %774 = vmatpush1.bf16.msra.mxu0 0
    %775 = vmatprep.subr.bf16.mxu0 0
    %776 = vmatpush1.bf16.msra.mxu0 0
    %777 = vmatprep.subr.bf16.mxu0 0
    %778 = vmatpush1.bf16.msra.mxu0 0
    %779 = vmatprep.subr.bf16.mxu0 0
    %780 = vmatpush1.bf16.msra.mxu0 0
    %781 = vmatprep.subr.bf16.mxu0 0
    %782 = vmatpush1.bf16.msra.mxu0 0
    %783 = vmatprep.subr.bf16.mxu0 0
    %784 = vmatpush1.bf16.msra.mxu0 0
    %785 = vmatprep.subr.bf16.mxu0 0
    %786 = vmatpush1.bf16.msra.mxu0 0
    %787 = vmatprep.subr.bf16.mxu0 0
    %788 = vmatpush1.bf16.msra.mxu0 0
    %789 = vmatprep.mubr.bf16.mxu0 0
    %790 = vmatmul.mubr.bf16.gmra.mrb[0].mxu0 %v755
    %v791 = vpop.f32.mrb[0].mxu0
    %v792 = vadd.f32 0.0, %v791
    %v793 = vpop.f32.mrb[0].mxu0
    %v794 = vadd.f32 0.0, %v793
    %v795 = vpop.f32.mrb[0].mxu0
    %v796 = vpop.f32.mrb[0].mxu0
    %797 = vdwg.mxu0
    %v798 = vld [vmem:[#allocation2 + $0x40] sm:$0xff]
    %v799 = vld [vmem:[#allocation2 + $0x38] sm:$0xff]
    %v800 = vadd.f32 %v798, %v792
    %v801 = vadd.f32 %v799, %v794
    %v802 = vxor.u32 %v800, 2147483648
    %v803 = vxor.u32 %v801, 2147483648
    %v804 = vmul.f32 %v802, 1.442695
    %v805 = vpow.pop %v804
    %v806 = vmul.f32 %v803, 1.442695
    %v807 = vpow.pop %v806
    %v808 = vadd.f32 %v805, 1.0
    %v809 = vadd.f32 %v807, 1.0
    %v810 = vrcp.pop %v808
    %v811 = vmul.f32 1.0, %v810
    %v812 = vrcp.pop %v809
    %v813 = vmul.f32 1.0, %v812
    %v814 = vtanh.pop %v800
    %v815 = vtanh.pop %v801
    %v816 = vmul.f32 %v811, %v707
    %818 = vrot.lane.b32.xlu0 %v814, 64
    %v819 = vpop.permute.xlu0 %818
    %v821 = vmul.f32 %v811, %v819
    %823 = vrot.lane.b32.xlu0 %v821, 32
    %v824 = vpop.permute.xlu0 %823
    %v826 = vadd.f32 %v816, %v824
    %v827 = vmul.f32 %v813, %v718
    %829 = vrot.lane.b32.xlu0 %v815, 64
    %v830 = vpop.permute.xlu0 %829
    %v832 = vmul.f32 %v813, %v830
    %834 = vrot.lane.b32.xlu0 %v832, 32
    %v835 = vpop.permute.xlu0 %834
    %v837 = vadd.f32 %v827, %v835
    %v838 = vtanh.pop %v826
    %840 = vrot.lane.b32.xlu0 %v838, 64
    %v841 = vpop.permute.xlu0 %840
    %v843 = vmul.f32 %v811, %v841
    %v844 = vtanh.pop %v837
    %846 = vrot.lane.b32.xlu0 %v844, 64
    %v847 = vpop.permute.xlu0 %846
    %v849 = vmul.f32 %v813, %v847
    %851 = vrot.lane.b32.xlu0 %v843, 32
    %v852 = vpop.permute.xlu0 %851
    %855 = vrot.lane.b32.xlu0 %v849, 64
    %v856 = vpop.permute.xlu0 %855
    %v858 = vsel %vm123, %v852, %v856
    %v859 = vpack.c.bf16 %v843, %v843
    %861 = vrot.lane.b32.xlu0 %v859, 32
    %v862 = vpop.permute.xlu0 %861
    %864 = vst.msk [vmem:[#allocation3 + $0x10] sm:$0xf] %vm384, %v862
    %v865 = vpack.c.bf16 %v849, %v849
    %v867 = vrot.slane %v865, 4
    %868 = vrot.lane.b32.xlu0 %v867, 64
    %v869 = vpop.permute.xlu0 %868
    %871 = vst.msk [vmem:[#allocation3 + $0x8] sm:$0xf0] %vm392, %v869
    %v872 = vpack.c.bf16 %v858, %v858
    %v874 = vsel %vm273, %v872, 0
    %876 = vmatprep.subr.bf16.mxu0 %v258
    %877 = vmatpush1.bf16.msra.mxu0 %v257
    %878 = vmatprep.subr.bf16.mxu0 %v260
    %879 = vmatpush1.bf16.msra.mxu0 %v259
    %880 = vmatprep.subr.bf16.mxu0 %v262
    %881 = vmatpush1.bf16.msra.mxu0 %v261
    %882 = vmatprep.subr.bf16.mxu0 %v264
    %883 = vmatpush1.bf16.msra.mxu0 %v263
    %884 = vmatprep.subr.bf16.mxu0 0
    %885 = vmatpush1.bf16.msra.mxu0 0
    %886 = vmatprep.subr.bf16.mxu0 0
    %887 = vmatpush1.bf16.msra.mxu0 0
    %888 = vmatprep.subr.bf16.mxu0 0
    %889 = vmatpush1.bf16.msra.mxu0 0
    %890 = vmatprep.subr.bf16.mxu0 0
    %891 = vmatpush1.bf16.msra.mxu0 0
    %892 = vmatprep.subr.bf16.mxu0 0
    %893 = vmatpush1.bf16.msra.mxu0 0
    %894 = vmatprep.subr.bf16.mxu0 0
    %895 = vmatpush1.bf16.msra.mxu0 0
    %896 = vmatprep.subr.bf16.mxu0 0
    %897 = vmatpush1.bf16.msra.mxu0 0
    %898 = vmatprep.subr.bf16.mxu0 0
    %899 = vmatpush1.bf16.msra.mxu0 0
    %900 = vmatprep.subr.bf16.mxu0 0
    %901 = vmatpush1.bf16.msra.mxu0 0
    %902 = vmatprep.subr.bf16.mxu0 0
    %903 = vmatpush1.bf16.msra.mxu0 0
    %904 = vmatprep.subr.bf16.mxu0 0
    %905 = vmatpush1.bf16.msra.mxu0 0
    %906 = vmatprep.subr.bf16.mxu0 0
    %907 = vmatpush1.bf16.msra.mxu0 0
    %908 = vmatprep.mubr.bf16.mxu0 0
    %909 = vmatmul.mubr.bf16.gmra.mrb[0].mxu0 %v874
    %v910 = vpop.f32.mrb[0].mxu0
    %v911 = vadd.f32 0.0, %v910
    %v912 = vpop.f32.mrb[0].mxu0
    %v913 = vadd.f32 0.0, %v912
    %v914 = vpop.f32.mrb[0].mxu0
    %v915 = vpop.f32.mrb[0].mxu0
    %916 = vdwg.mxu0
    %v917 = vld [vmem:[#allocation2 + $0x50] sm:$0xff]
    %v918 = vld [vmem:[#allocation2 + $0x28] sm:$0xff]
    %v919 = vadd.f32 %v917, %v911
    %v920 = vadd.f32 %v918, %v913
    %v921 = vxor.u32 %v919, 2147483648
    %v922 = vxor.u32 %v920, 2147483648
    %v923 = vmul.f32 %v921, 1.442695
    %v924 = vpow.pop %v923
    %v925 = vmul.f32 %v922, 1.442695
    %v926 = vpow.pop %v925
    %v927 = vadd.f32 %v924, 1.0
    %v928 = vadd.f32 %v926, 1.0
    %v929 = vrcp.pop %v927
    %v930 = vmul.f32 1.0, %v929
    %v931 = vrcp.pop %v928
    %v932 = vmul.f32 1.0, %v931
    %v933 = vtanh.pop %v919
    %v934 = vtanh.pop %v920
    %v935 = vmul.f32 %v930, %v826
    %937 = vrot.lane.b32.xlu0 %v933, 64
    %v938 = vpop.permute.xlu0 %937
    %v940 = vmul.f32 %v930, %v938
    %942 = vrot.lane.b32.xlu0 %v940, 32
    %v943 = vpop.permute.xlu0 %942
    %v945 = vadd.f32 %v935, %v943
    %v946 = vmul.f32 %v932, %v837
    %948 = vrot.lane.b32.xlu0 %v934, 64
    %v949 = vpop.permute.xlu0 %948
    %v951 = vmul.f32 %v932, %v949
    %953 = vrot.lane.b32.xlu0 %v951, 32
    %v954 = vpop.permute.xlu0 %953
    %v956 = vadd.f32 %v946, %v954
    %v957 = vtanh.pop %v945
    %959 = vrot.lane.b32.xlu0 %v957, 64
    %v960 = vpop.permute.xlu0 %959
    %v962 = vmul.f32 %v930, %v960
    %v963 = vtanh.pop %v956
    %965 = vrot.lane.b32.xlu0 %v963, 64
    %v966 = vpop.permute.xlu0 %965
    %v968 = vmul.f32 %v932, %v966
    %970 = vrot.lane.b32.xlu0 %v962, 32
    %v971 = vpop.permute.xlu0 %970
    %974 = vrot.lane.b32.xlu0 %v968, 64
    %v975 = vpop.permute.xlu0 %974
    %v977 = vsel %vm123, %v971, %v975
    %v978 = vpack.c.bf16 %v962, %v962
    %v980 = vrot.slane %v978, 4
    %981 = vrot.lane.b32.xlu0 %v980, 32
    %v982 = vpop.permute.xlu0 %981
    %984 = vst.msk [vmem:[#allocation3 + $0x10] sm:$0xf0] %vm506, %v982
    %v985 = vpack.c.bf16 %v968, %v968
    %987 = vrot.lane.b32.xlu0 %v985, 64
    %v988 = vpop.permute.xlu0 %987
    %990 = vst.msk [vmem:[#allocation3 + $0x8] sm:$0xf] %vm513, %v988
    %v991 = vpack.c.bf16 %v977, %v977
    %v993 = vsel %vm273, %v991, 0
    %995 = vmatprep.subr.bf16.mxu0 %v258
    %996 = vmatpush1.bf16.msra.mxu0 %v257
    %997 = vmatprep.subr.bf16.mxu0 %v260
    %998 = vmatpush1.bf16.msra.mxu0 %v259
    %999 = vmatprep.subr.bf16.mxu0 %v262
    %1000 = vmatpush1.bf16.msra.mxu0 %v261
    %1001 = vmatprep.subr.bf16.mxu0 %v264
    %1002 = vmatpush1.bf16.msra.mxu0 %v263
    %1003 = vmatprep.subr.bf16.mxu0 0
    %1004 = vmatpush1.bf16.msra.mxu0 0
    %1005 = vmatprep.subr.bf16.mxu0 0
    %1006 = vmatpush1.bf16.msra.mxu0 0
    %1007 = vmatprep.subr.bf16.mxu0 0
    %1008 = vmatpush1.bf16.msra.mxu0 0
    %1009 = vmatprep.subr.bf16.mxu0 0
    %1010 = vmatpush1.bf16.msra.mxu0 0
    %1011 = vmatprep.subr.bf16.mxu0 0
    %1012 = vmatpush1.bf16.msra.mxu0 0
    %1013 = vmatprep.subr.bf16.mxu0 0
    %1014 = vmatpush1.bf16.msra.mxu0 0
    %1015 = vmatprep.subr.bf16.mxu0 0
    %1016 = vmatpush1.bf16.msra.mxu0 0
    %1017 = vmatprep.subr.bf16.mxu0 0
    %1018 = vmatpush1.bf16.msra.mxu0 0
    %1019 = vmatprep.subr.bf16.mxu0 0
    %1020 = vmatpush1.bf16.msra.mxu0 0
    %1021 = vmatprep.subr.bf16.mxu0 0
    %1022 = vmatpush1.bf16.msra.mxu0 0
    %1023 = vmatprep.subr.bf16.mxu0 0
    %1024 = vmatpush1.bf16.msra.mxu0 0
    %1025 = vmatprep.subr.bf16.mxu0 0
    %1026 = vmatpush1.bf16.msra.mxu0 0
    %1027 = vmatprep.mubr.bf16.mxu0 0
    %1028 = vmatmul.mubr.bf16.gmra.mrb[0].mxu0 %v993
    %v1029 = vpop.f32.mrb[0].mxu0
    %v1030 = vadd.f32 0.0, %v1029
    %v1031 = vpop.f32.mrb[0].mxu0
    %v1032 = vadd.f32 0.0, %v1031
    %v1033 = vpop.f32.mrb[0].mxu0
    %v1034 = vpop.f32.mrb[0].mxu0
    %1035 = vdwg.mxu0
    %v1036 = vld [vmem:[#allocation2 + $0x60] sm:$0xff]
    %v1037 = vld [vmem:[#allocation2 + $0x18] sm:$0xff]
    %v1038 = vadd.f32 %v1036, %v1030
    %v1039 = vadd.f32 %v1037, %v1032
    %v1040 = vxor.u32 %v1038, 2147483648
    %v1041 = vxor.u32 %v1039, 2147483648
    %v1042 = vmul.f32 %v1040, 1.442695
    %v1043 = vpow.pop %v1042
    %v1044 = vmul.f32 %v1041, 1.442695
    %v1045 = vpow.pop %v1044
    %v1046 = vadd.f32 %v1043, 1.0
    %v1047 = vadd.f32 %v1045, 1.0
    %v1048 = vrcp.pop %v1046
    %v1049 = vmul.f32 1.0, %v1048
    %v1050 = vrcp.pop %v1047
    %v1051 = vmul.f32 1.0, %v1050
    %v1052 = vtanh.pop %v1038
    %v1053 = vtanh.pop %v1039
    %v1054 = vmul.f32 %v1049, %v945
    %1056 = vrot.lane.b32.xlu0 %v1052, 64
    %v1057 = vpop.permute.xlu0 %1056
    %v1059 = vmul.f32 %v1049, %v1057
    %1061 = vrot.lane.b32.xlu0 %v1059, 32
    %v1062 = vpop.permute.xlu0 %1061
    %v1064 = vadd.f32 %v1054, %v1062
    %v1065 = vmul.f32 %v1051, %v956
    %1067 = vrot.lane.b32.xlu0 %v1053, 64
    %v1068 = vpop.permute.xlu0 %1067
    %v1070 = vmul.f32 %v1051, %v1068
    %1072 = vrot.lane.b32.xlu0 %v1070, 32
    %v1073 = vpop.permute.xlu0 %1072
    %v1075 = vadd.f32 %v1065, %v1073
    %v1076 = vtanh.pop %v1064
    %1078 = vrot.lane.b32.xlu0 %v1076, 64
    %v1079 = vpop.permute.xlu0 %1078
    %v1081 = vmul.f32 %v1049, %v1079
    %v1082 = vtanh.pop %v1075
    %1084 = vrot.lane.b32.xlu0 %v1082, 64
    %v1085 = vpop.permute.xlu0 %1084
    %v1087 = vmul.f32 %v1051, %v1085
    %1089 = vrot.lane.b32.xlu0 %v1081, 32
    %v1090 = vpop.permute.xlu0 %1089
    %1093 = vrot.lane.b32.xlu0 %v1087, 64
    %v1094 = vpop.permute.xlu0 %1093
    %v1096 = vsel %vm123, %v1090, %v1094
    %v1097 = vpack.c.bf16 %v1081, %v1081
    %1099 = vrot.lane.b32.xlu0 %v1097, 32
    %v1100 = vpop.permute.xlu0 %1099
    %1102 = vst.msk [vmem:[#allocation3 + $0x18] sm:$0xf] %vm384, %v1100
    %v1103 = vpack.c.bf16 %v1087, %v1087
    %v1105 = vrot.slane %v1103, 4
    %1106 = vrot.lane.b32.xlu0 %v1105, 64
    %v1107 = vpop.permute.xlu0 %1106
    %1109 = vst.msk [vmem:[#allocation3] sm:$0xf0] %vm392, %v1107
    %v1110 = vpack.c.bf16 %v1096, %v1096
    %v1112 = vsel %vm273, %v1110, 0
    %1114 = vmatprep.subr.bf16.mxu0 %v258
    %1115 = vmatpush1.bf16.msra.mxu0 %v257
    %1116 = vmatprep.subr.bf16.mxu0 %v260
    %1117 = vmatpush1.bf16.msra.mxu0 %v259
    %1118 = vmatprep.subr.bf16.mxu0 %v262
    %1119 = vmatpush1.bf16.msra.mxu0 %v261
    %1120 = vmatprep.subr.bf16.mxu0 %v264
    %1121 = vmatpush1.bf16.msra.mxu0 %v263
    %1122 = vmatprep.subr.bf16.mxu0 0
    %1123 = vmatpush1.bf16.msra.mxu0 0
    %1124 = vmatprep.subr.bf16.mxu0 0
    %1125 = vmatpush1.bf16.msra.mxu0 0
    %1126 = vmatprep.subr.bf16.mxu0 0
    %1127 = vmatpush1.bf16.msra.mxu0 0
    %1128 = vmatprep.subr.bf16.mxu0 0
    %1129 = vmatpush1.bf16.msra.mxu0 0
    %1130 = vmatprep.subr.bf16.mxu0 0
    %1131 = vmatpush1.bf16.msra.mxu0 0
    %1132 = vmatprep.subr.bf16.mxu0 0
    %1133 = vmatpush1.bf16.msra.mxu0 0
    %1134 = vmatprep.subr.bf16.mxu0 0
    %1135 = vmatpush1.bf16.msra.mxu0 0
    %1136 = vmatprep.subr.bf16.mxu0 0
    %1137 = vmatpush1.bf16.msra.mxu0 0
    %1138 = vmatprep.subr.bf16.mxu0 0
    %1139 = vmatpush1.bf16.msra.mxu0 0
    %1140 = vmatprep.subr.bf16.mxu0 0
    %1141 = vmatpush1.bf16.msra.mxu0 0
    %1142 = vmatprep.subr.bf16.mxu0 0
    %1143 = vmatpush1.bf16.msra.mxu0 0
    %1144 = vmatprep.subr.bf16.mxu0 0
    %1145 = vmatpush1.bf16.msra.mxu0 0
    %1146 = vmatprep.mubr.bf16.mxu0 0
    %1147 = vmatmul.mubr.bf16.gmra.mrb[0].mxu0 %v1112
    %v1148 = vpop.f32.mrb[0].mxu0
    %v1149 = vadd.f32 0.0, %v1148
    %v1150 = vpop.f32.mrb[0].mxu0
    %v1151 = vadd.f32 0.0, %v1150
    %v1152 = vpop.f32.mrb[0].mxu0
    %v1153 = vpop.f32.mrb[0].mxu0
    %1154 = vdwg.mxu0
    %v1155 = vld [vmem:[#allocation2 + $0x70] sm:$0xff]
    %v1156 = vld [vmem:[#allocation2 + $0x8] sm:$0xff]
    %v1157 = vadd.f32 %v1155, %v1149
    %v1158 = vadd.f32 %v1156, %v1151
    %v1159 = vxor.u32 %v1157, 2147483648
    %v1160 = vxor.u32 %v1158, 2147483648
    %v1161 = vmul.f32 %v1159, 1.442695
    %v1162 = vpow.pop %v1161
    %v1163 = vmul.f32 %v1160, 1.442695
    %v1164 = vpow.pop %v1163
    %v1165 = vadd.f32 %v1162, 1.0
    %v1166 = vadd.f32 %v1164, 1.0
    %v1167 = vrcp.pop %v1165
    %v1168 = vmul.f32 1.0, %v1167
    %v1169 = vrcp.pop %v1166
    %v1170 = vmul.f32 1.0, %v1169
    %v1171 = vtanh.pop %v1157
    %v1172 = vtanh.pop %v1158
    %v1173 = vmul.f32 %v1168, %v1064
    %1175 = vrot.lane.b32.xlu0 %v1171, 64
    %v1176 = vpop.permute.xlu0 %1175
    %v1178 = vmul.f32 %v1168, %v1176
    %1180 = vrot.lane.b32.xlu0 %v1178, 32
    %v1181 = vpop.permute.xlu0 %1180
    %v1183 = vadd.f32 %v1173, %v1181
    %v1184 = vmul.f32 %v1170, %v1075
    %1186 = vrot.lane.b32.xlu0 %v1172, 64
    %v1187 = vpop.permute.xlu0 %1186
    %v1189 = vmul.f32 %v1170, %v1187
    %1191 = vrot.lane.b32.xlu0 %v1189, 32
    %v1192 = vpop.permute.xlu0 %1191
    %v1194 = vadd.f32 %v1184, %v1192
    %v1195 = vtanh.pop %v1183
    %1197 = vrot.lane.b32.xlu0 %v1195, 64
    %v1198 = vpop.permute.xlu0 %1197
    %v1200 = vmul.f32 %v1168, %v1198
    %v1201 = vtanh.pop %v1194
    %1203 = vrot.lane.b32.xlu0 %v1201, 64
    %v1204 = vpop.permute.xlu0 %1203
    %v1206 = vmul.f32 %v1170, %v1204
    %v1207 = vpack.c.bf16 %v1200, %v1200
    %v1209 = vrot.slane %v1207, 4
    %1210 = vrot.lane.b32.xlu0 %v1209, 32
    %v1211 = vpop.permute.xlu0 %1210
    %1213 = vst.msk [vmem:[#allocation3 + $0x18] sm:$0xf0] %vm506, %v1211
    %v1214 = vpack.c.bf16 %v1206, %v1206
    %1216 = vrot.lane.b32.xlu0 %v1214, 64
    %v1217 = vpop.permute.xlu0 %1216
    %1219 = vst.msk [vmem:[#allocation3] sm:$0xf] %vm513, %v1217
    %v1220 = vld [vmem:[#allocation3] sm:$0xff]
    %v1221 = vld [vmem:[#allocation3 + $0x8] sm:$0xff]
    %v1222 = vld [vmem:[#allocation3 + $0x10] sm:$0xff]
    %v1223 = vld [vmem:[#allocation3 + $0x18] sm:$0xff]
    %v1224 = vld [vmem:[%s4] sm:$0xff]
    %v1225 = vld [vmem:[%s4 + $0x8] sm:$0xff]
    %v1226 = vld [vmem:[%s4 + $0x10] sm:$0xff]
    %v1227 = vld [vmem:[%s4 + $0x18] sm:$0xff]
    %v1228 = vld [vmem:[%s4 + $0x20] sm:$0xff]
    %v1229 = vld [vmem:[%s4 + $0x28] sm:$0xff]
    %v1230 = vld [vmem:[%s4 + $0x30] sm:$0xff]
    %v1231 = vld [vmem:[%s4 + $0x38] sm:$0xff]
    %v1232 = vld [vmem:[#allocation4] sm:$0x3]
    %v1234 = vlaneseq
    %v1235 = vshrl.u32 %v1234, 7
    %v1236 = vsub.s32 0, %v1235
    %v1237 = vrot.slane %v1232, %v1236
    %v1238 = vlaneseq
    %v1239 = vshrl.u32 %v1238, 7
    %v1240 = vsub.s32 1, %v1239
    %v1241 = vrot.slane %v1232, %v1240
    %v1252 = vunpack.c.l.b16 %v1224
    %v1253 = vunpack.c.h.b16 %v1224
    %v1254 = vunpack.c.l.b16 %v1225
    %v1255 = vunpack.c.h.b16 %v1225
    %v1256 = vunpack.c.l.b16 %v1226
    %v1257 = vunpack.c.h.b16 %v1226
    %v1258 = vunpack.c.l.b16 %v1227
    %v1259 = vunpack.c.h.b16 %v1227
    %v1260 = vunpack.c.l.b16 %v1228
    %v1261 = vunpack.c.h.b16 %v1228
    %v1262 = vunpack.c.l.b16 %v1229
    %v1263 = vunpack.c.h.b16 %v1229
    %v1264 = vunpack.c.l.b16 %v1230
    %v1265 = vunpack.c.h.b16 %v1230
    %v1266 = vunpack.c.l.b16 %v1231
    %v1267 = vunpack.c.h.b16 %v1231
    %v1268 = vpack.c.b16 %v1254, %v1252
    %v1269 = vpack.c.b16 %v1255, %v1253
    %v1270 = vpack.c.b16 %v1258, %v1256
    %v1271 = vpack.c.b16 %v1259, %v1257
    %v1272 = vpack.c.b16 %v1262, %v1260
    %v1273 = vpack.c.b16 %v1263, %v1261
    %v1274 = vpack.c.b16 %v1266, %v1264
    %v1275 = vpack.c.b16 %v1267, %v1265
    %v1285 = vsel %vm273, %v1220, 0
    %v1288 = vsel %vm273, %v1221, 0
    %v1291 = vsel %vm273, %v1222, 0
    %v1294 = vsel %vm273, %v1223, 0
    %1296 = vmatprep.subr.bf16.mxu0 %v1269
    %1297 = vmatpush1.bf16.msra.mxu0 %v1268
    %1298 = vmatprep.subr.bf16.mxu0 %v1271
    %1299 = vmatpush1.bf16.msra.mxu0 %v1270
    %1300 = vmatprep.subr.bf16.mxu0 %v1273
    %1301 = vmatpush1.bf16.msra.mxu0 %v1272
    %1302 = vmatprep.subr.bf16.mxu0 %v1275
    %1303 = vmatpush1.bf16.msra.mxu0 %v1274
    %1304 = vmatprep.subr.bf16.mxu0 0
    %1305 = vmatpush1.bf16.msra.mxu0 0
    %1306 = vmatprep.subr.bf16.mxu0 0
    %1307 = vmatpush1.bf16.msra.mxu0 0
    %1308 = vmatprep.subr.bf16.mxu0 0
    %1309 = vmatpush1.bf16.msra.mxu0 0
    %1310 = vmatprep.subr.bf16.mxu0 0
    %1311 = vmatpush1.bf16.msra.mxu0 0
    %1312 = vmatprep.subr.bf16.mxu0 0
    %1313 = vmatpush1.bf16.msra.mxu0 0
    %1314 = vmatprep.subr.bf16.mxu0 0
    %1315 = vmatpush1.bf16.msra.mxu0 0
    %1316 = vmatprep.subr.bf16.mxu0 0
    %1317 = vmatpush1.bf16.msra.mxu0 0
    %1318 = vmatprep.subr.bf16.mxu0 0
    %1319 = vmatpush1.bf16.msra.mxu0 0
    %1320 = vmatprep.subr.bf16.mxu0 0
    %1321 = vmatpush1.bf16.msra.mxu0 0
    %1322 = vmatprep.subr.bf16.mxu0 0
    %1323 = vmatpush1.bf16.msra.mxu0 0
    %1324 = vmatprep.subr.bf16.mxu0 0
    %1325 = vmatpush1.bf16.msra.mxu0 0
    %1326 = vmatprep.subr.bf16.mxu0 0
    %1327 = vmatpush1.bf16.msra.mxu0 0
    %1328 = vmatprep.mubr.bf16.mxu0 0
    %1329 = vmatmul.mubr.bf16.gmra.mrb[0].mxu0 %v1285
    %v1330 = vpop.f32.mrb[0].mxu0
    %v1331 = vadd.f32 %v1237, %v1330
    %v1332 = vpop.f32.mrb[0].mxu0
    %v1333 = vadd.f32 %v1241, %v1332
    %v1334 = vpop.f32.mrb[0].mxu0
    %v1335 = vadd.f32 %v1237, %v1334
    %v1336 = vpop.f32.mrb[0].mxu0
    %v1337 = vadd.f32 %v1241, %v1336
    %1338 = vmatprep.mubr.bf16.mxu0 0
    %1339 = vmatmul.mubr.bf16.gmra.mrb[0].mxu0 %v1288
    %v1340 = vpop.f32.mrb[0].mxu0
    %v1341 = vadd.f32 %v1237, %v1340
    %v1342 = vpop.f32.mrb[0].mxu0
    %v1343 = vadd.f32 %v1241, %v1342
    %v1344 = vpop.f32.mrb[0].mxu0
    %v1345 = vadd.f32 %v1237, %v1344
    %v1346 = vpop.f32.mrb[0].mxu0
    %v1347 = vadd.f32 %v1241, %v1346
    %1348 = vmatprep.mubr.bf16.mxu0 0
    %1349 = vmatmul.mubr.bf16.gmra.mrb[0].mxu0 %v1291
    %v1350 = vpop.f32.mrb[0].mxu0
    %v1351 = vadd.f32 %v1237, %v1350
    %v1352 = vpop.f32.mrb[0].mxu0
    %v1353 = vadd.f32 %v1241, %v1352
    %v1354 = vpop.f32.mrb[0].mxu0
    %v1355 = vadd.f32 %v1237, %v1354
    %v1356 = vpop.f32.mrb[0].mxu0
    %v1357 = vadd.f32 %v1241, %v1356
    %1358 = vmatprep.mubr.bf16.mxu0 0
    %1359 = vmatmul.mubr.bf16.gmra.mrb[0].mxu0 %v1294
    %v1360 = vpop.f32.mrb[0].mxu0
    %v1361 = vadd.f32 %v1237, %v1360
    %v1362 = vpop.f32.mrb[0].mxu0
    %v1363 = vadd.f32 %v1241, %v1362
    %v1364 = vpop.f32.mrb[0].mxu0
    %v1365 = vadd.f32 %v1237, %v1364
    %v1366 = vpop.f32.mrb[0].mxu0
    %v1367 = vadd.f32 %v1241, %v1366
    %1368 = vdwg.mxu0
    %1369 = vst [vmem:[#allocation2] sm:$0xff] %v1331
    %1370 = vst [vmem:[#allocation2 + $0x8] sm:$0xff] %v1333
    %1371 = vst [vmem:[#allocation2 + $0x10] sm:$0xff] %v1335
    %1372 = vst [vmem:[#allocation2 + $0x18] sm:$0xff] %v1337
    %1373 = vst [vmem:[#allocation2 + $0x20] sm:$0xff] %v1341
    %1374 = vst [vmem:[#allocation2 + $0x28] sm:$0xff] %v1343
    %1375 = vst [vmem:[#allocation2 + $0x30] sm:$0xff] %v1345
    %1376 = vst [vmem:[#allocation2 + $0x38] sm:$0xff] %v1347
    %1377 = vst [vmem:[#allocation2 + $0x40] sm:$0xff] %v1351
    %1378 = vst [vmem:[#allocation2 + $0x48] sm:$0xff] %v1353
    %1379 = vst [vmem:[#allocation2 + $0x50] sm:$0xff] %v1355
    %1380 = vst [vmem:[#allocation2 + $0x58] sm:$0xff] %v1357
    %1381 = vst [vmem:[#allocation2 + $0x60] sm:$0xff] %v1361
    %1382 = vst [vmem:[#allocation2 + $0x68] sm:$0xff] %v1363
    %1383 = vst [vmem:[#allocation2 + $0x70] sm:$0xff] %v1365
    %1384 = vst [vmem:[#allocation2 + $0x78] sm:$0xff] %v1367
    %v1385 = vld [vmem:[%s5] sm:$0xff]
    %v1386 = vld [vmem:[%s5 + $0x8] sm:$0xff]
    %v1387 = vld [vmem:[%s5 + $0x10] sm:$0xff]
    %v1388 = vld [vmem:[%s5 + $0x18] sm:$0xff]
    %v1389 = vld [vmem:[%s5 + $0x20] sm:$0xff]
    %v1390 = vld [vmem:[%s5 + $0x28] sm:$0xff]
    %v1391 = vld [vmem:[%s5 + $0x30] sm:$0xff]
    %v1392 = vld [vmem:[%s5 + $0x38] sm:$0xff]
    %v1401 = vunpack.c.l.b16 %v1385
    %v1402 = vunpack.c.h.b16 %v1385
    %v1403 = vunpack.c.l.b16 %v1386
    %v1404 = vunpack.c.h.b16 %v1386
    %v1405 = vunpack.c.l.b16 %v1387
    %v1406 = vunpack.c.h.b16 %v1387
    %v1407 = vunpack.c.l.b16 %v1388
    %v1408 = vunpack.c.h.b16 %v1388
    %v1409 = vunpack.c.l.b16 %v1389
    %v1410 = vunpack.c.h.b16 %v1389
    %v1411 = vunpack.c.l.b16 %v1390
    %v1412 = vunpack.c.h.b16 %v1390
    %v1413 = vunpack.c.l.b16 %v1391
    %v1414 = vunpack.c.h.b16 %v1391
    %v1415 = vunpack.c.l.b16 %v1392
    %v1416 = vunpack.c.h.b16 %v1392
    %v1417 = vpack.c.b16 %v1403, %v1401
    %v1418 = vpack.c.b16 %v1404, %v1402
    %v1419 = vpack.c.b16 %v1407, %v1405
    %v1420 = vpack.c.b16 %v1408, %v1406
    %v1421 = vpack.c.b16 %v1411, %v1409
    %v1422 = vpack.c.b16 %v1412, %v1410
    %v1423 = vpack.c.b16 %v1415, %v1413
    %v1424 = vpack.c.b16 %v1416, %v1414
    %1433 = vmatprep.subr.bf16.mxu0 %v1418
    %1434 = vmatpush1.bf16.msra.mxu0 %v1417
    %1435 = vmatprep.subr.bf16.mxu0 %v1420
    %1436 = vmatpush1.bf16.msra.mxu0 %v1419
    %1437 = vmatprep.subr.bf16.mxu0 %v1422
    %1438 = vmatpush1.bf16.msra.mxu0 %v1421
    %1439 = vmatprep.subr.bf16.mxu0 %v1424
    %1440 = vmatpush1.bf16.msra.mxu0 %v1423
    %1441 = vmatprep.subr.bf16.mxu0 0
    %1442 = vmatpush1.bf16.msra.mxu0 0
    %1443 = vmatprep.subr.bf16.mxu0 0
    %1444 = vmatpush1.bf16.msra.mxu0 0
    %1445 = vmatprep.subr.bf16.mxu0 0
    %1446 = vmatpush1.bf16.msra.mxu0 0
    %1447 = vmatprep.subr.bf16.mxu0 0
    %1448 = vmatpush1.bf16.msra.mxu0 0
    %1449 = vmatprep.subr.bf16.mxu0 0
    %1450 = vmatpush1.bf16.msra.mxu0 0
    %1451 = vmatprep.subr.bf16.mxu0 0
    %1452 = vmatpush1.bf16.msra.mxu0 0
    %1453 = vmatprep.subr.bf16.mxu0 0
    %1454 = vmatpush1.bf16.msra.mxu0 0
    %1455 = vmatprep.subr.bf16.mxu0 0
    %1456 = vmatpush1.bf16.msra.mxu0 0
    %1457 = vmatprep.subr.bf16.mxu0 0
    %1458 = vmatpush1.bf16.msra.mxu0 0
    %1459 = vmatprep.subr.bf16.mxu0 0
    %1460 = vmatpush1.bf16.msra.mxu0 0
    %1461 = vmatprep.subr.bf16.mxu0 0
    %1462 = vmatpush1.bf16.msra.mxu0 0
    %1463 = vmatprep.subr.bf16.mxu0 0
    %1464 = vmatpush1.bf16.msra.mxu0 0
    %1465 = vmatprep.mubr.bf16.mxu0 0
    %1466 = vmatmul.mubr.bf16.gmra.mrb[0].mxu0 %v275
    %v1467 = vpop.f32.mrb[0].mxu0
    %v1468 = vadd.f32 0.0, %v1467
    %v1469 = vpop.f32.mrb[0].mxu0
    %v1470 = vadd.f32 0.0, %v1469
    %v1471 = vpop.f32.mrb[0].mxu0
    %v1472 = vpop.f32.mrb[0].mxu0
    %1473 = vdwg.mxu0
    %v1474 = vld [vmem:[#allocation2] sm:$0xff]
    %v1475 = vld [vmem:[#allocation2 + $0x78] sm:$0xff]
    %v1476 = vadd.f32 %v1474, %v1468
    %v1477 = vadd.f32 %v1475, %v1470
    %v1478 = vxor.u32 %v1476, 2147483648
    %v1479 = vxor.u32 %v1477, 2147483648
    %v1480 = vmul.f32 %v1478, 1.442695
    %v1481 = vpow.pop %v1480
    %v1482 = vmul.f32 %v1479, 1.442695
    %v1483 = vpow.pop %v1482
    %v1484 = vadd.f32 %v1481, 1.0
    %v1485 = vadd.f32 %v1483, 1.0
    %v1486 = vrcp.pop %v1484
    %v1487 = vmul.f32 1.0, %v1486
    %v1488 = vrcp.pop %v1485
    %v1489 = vmul.f32 1.0, %v1488
    %v1490 = vtanh.pop %v1476
    %v1491 = vtanh.pop %v1477
    %v1492 = vmul.f32 %v1487, 0.0
    %1494 = vrot.lane.b32.xlu0 %v1490, 64
    %v1495 = vpop.permute.xlu0 %1494
    %v1497 = vmul.f32 %v1487, %v1495
    %1499 = vrot.lane.b32.xlu0 %v1497, 32
    %v1500 = vpop.permute.xlu0 %1499
    %v1502 = vadd.f32 %v1492, %v1500
    %v1503 = vmul.f32 %v1489, 0.0
    %1505 = vrot.lane.b32.xlu0 %v1491, 64
    %v1506 = vpop.permute.xlu0 %1505
    %v1508 = vmul.f32 %v1489, %v1506
    %1510 = vrot.lane.b32.xlu0 %v1508, 32
    %v1511 = vpop.permute.xlu0 %1510
    %v1513 = vadd.f32 %v1503, %v1511
    %v1514 = vtanh.pop %v1502
    %1516 = vrot.lane.b32.xlu0 %v1514, 64
    %v1517 = vpop.permute.xlu0 %1516
    %v1519 = vmul.f32 %v1487, %v1517
    %v1520 = vtanh.pop %v1513
    %1522 = vrot.lane.b32.xlu0 %v1520, 64
    %v1523 = vpop.permute.xlu0 %1522
    %v1525 = vmul.f32 %v1489, %v1523
    %1527 = vrot.lane.b32.xlu0 %v1519, 32
    %v1528 = vpop.permute.xlu0 %1527
    %1531 = vrot.lane.b32.xlu0 %v1525, 64
    %v1532 = vpop.permute.xlu0 %1531
    %v1534 = vsel %vm123, %v1528, %v1532
    %v1535 = vpack.c.bf16 %v1519, %v1519
    %1537 = vrot.lane.b32.xlu0 %v1535, 32
    %v1538 = vpop.permute.xlu0 %1537
    %1540 = vst.msk [vmem:[#allocation3] sm:$0xf] %vm384, %v1538
    %v1541 = vpack.c.bf16 %v1525, %v1525
    %v1543 = vrot.slane %v1541, 4
    %1544 = vrot.lane.b32.xlu0 %v1543, 64
    %v1545 = vpop.permute.xlu0 %1544
    %1547 = vst.msk [vmem:[#allocation3 + $0x18] sm:$0xf0] %vm392, %v1545
    %v1548 = vpack.c.bf16 %v1534, %v1534
    %v1550 = vsel %vm273, %v1548, 0
    %1552 = vmatprep.subr.bf16.mxu0 %v1418
    %1553 = vmatpush1.bf16.msra.mxu0 %v1417
    %1554 = vmatprep.subr.bf16.mxu0 %v1420
    %1555 = vmatpush1.bf16.msra.mxu0 %v1419
    %1556 = vmatprep.subr.bf16.mxu0 %v1422
    %1557 = vmatpush1.bf16.msra.mxu0 %v1421
    %1558 = vmatprep.subr.bf16.mxu0 %v1424
    %1559 = vmatpush1.bf16.msra.mxu0 %v1423
    %1560 = vmatprep.subr.bf16.mxu0 0
    %1561 = vmatpush1.bf16.msra.mxu0 0
    %1562 = vmatprep.subr.bf16.mxu0 0
    %1563 = vmatpush1.bf16.msra.mxu0 0
    %1564 = vmatprep.subr.bf16.mxu0 0
    %1565 = vmatpush1.bf16.msra.mxu0 0
    %1566 = vmatprep.subr.bf16.mxu0 0
    %1567 = vmatpush1.bf16.msra.mxu0 0
    %1568 = vmatprep.subr.bf16.mxu0 0
    %1569 = vmatpush1.bf16.msra.mxu0 0
    %1570 = vmatprep.subr.bf16.mxu0 0
    %1571 = vmatpush1.bf16.msra.mxu0 0
    %1572 = vmatprep.subr.bf16.mxu0 0
    %1573 = vmatpush1.bf16.msra.mxu0 0
    %1574 = vmatprep.subr.bf16.mxu0 0
    %1575 = vmatpush1.bf16.msra.mxu0 0
    %1576 = vmatprep.subr.bf16.mxu0 0
    %1577 = vmatpush1.bf16.msra.mxu0 0
    %1578 = vmatprep.subr.bf16.mxu0 0
    %1579 = vmatpush1.bf16.msra.mxu0 0
    %1580 = vmatprep.subr.bf16.mxu0 0
    %1581 = vmatpush1.bf16.msra.mxu0 0
    %1582 = vmatprep.subr.bf16.mxu0 0
    %1583 = vmatpush1.bf16.msra.mxu0 0
    %1584 = vmatprep.mubr.bf16.mxu0 0
    %1585 = vmatmul.mubr.bf16.gmra.mrb[0].mxu0 %v1550
    %v1586 = vpop.f32.mrb[0].mxu0
    %v1587 = vadd.f32 0.0, %v1586
    %v1588 = vpop.f32.mrb[0].mxu0
    %v1589 = vadd.f32 0.0, %v1588
    %v1590 = vpop.f32.mrb[0].mxu0
    %v1591 = vpop.f32.mrb[0].mxu0
    %1592 = vdwg.mxu0
    %v1593 = vld [vmem:[#allocation2 + $0x10] sm:$0xff]
    %v1594 = vld [vmem:[#allocation2 + $0x68] sm:$0xff]
    %v1595 = vadd.f32 %v1593, %v1587
    %v1596 = vadd.f32 %v1594, %v1589
    %v1597 = vxor.u32 %v1595, 2147483648
    %v1598 = vxor.u32 %v1596, 2147483648
    %v1599 = vmul.f32 %v1597, 1.442695
    %v1600 = vpow.pop %v1599
    %v1601 = vmul.f32 %v1598, 1.442695
    %v1602 = vpow.pop %v1601
    %v1603 = vadd.f32 %v1600, 1.0
    %v1604 = vadd.f32 %v1602, 1.0
    %v1605 = vrcp.pop %v1603
    %v1606 = vmul.f32 1.0, %v1605
    %v1607 = vrcp.pop %v1604
    %v1608 = vmul.f32 1.0, %v1607
    %v1609 = vtanh.pop %v1595
    %v1610 = vtanh.pop %v1596
    %v1611 = vmul.f32 %v1606, %v1502
    %1613 = vrot.lane.b32.xlu0 %v1609, 64
    %v1614 = vpop.permute.xlu0 %1613
    %v1616 = vmul.f32 %v1606, %v1614
    %1618 = vrot.lane.b32.xlu0 %v1616, 32
    %v1619 = vpop.permute.xlu0 %1618
    %v1621 = vadd.f32 %v1611, %v1619
    %v1622 = vmul.f32 %v1608, %v1513
    %1624 = vrot.lane.b32.xlu0 %v1610, 64
    %v1625 = vpop.permute.xlu0 %1624
    %v1627 = vmul.f32 %v1608, %v1625
    %1629 = vrot.lane.b32.xlu0 %v1627, 32
    %v1630 = vpop.permute.xlu0 %1629
    %v1632 = vadd.f32 %v1622, %v1630
    %v1633 = vtanh.pop %v1621
    %1635 = vrot.lane.b32.xlu0 %v1633, 64
    %v1636 = vpop.permute.xlu0 %1635
    %v1638 = vmul.f32 %v1606, %v1636
    %v1639 = vtanh.pop %v1632
    %1641 = vrot.lane.b32.xlu0 %v1639, 64
    %v1642 = vpop.permute.xlu0 %1641
    %v1644 = vmul.f32 %v1608, %v1642
    %1646 = vrot.lane.b32.xlu0 %v1638, 32
    %v1647 = vpop.permute.xlu0 %1646
    %1650 = vrot.lane.b32.xlu0 %v1644, 64
    %v1651 = vpop.permute.xlu0 %1650
    %v1653 = vsel %vm123, %v1647, %v1651
    %v1654 = vpack.c.bf16 %v1638, %v1638
    %v1656 = vrot.slane %v1654, 4
    %1657 = vrot.lane.b32.xlu0 %v1656, 32
    %v1658 = vpop.permute.xlu0 %1657
    %1660 = vst.msk [vmem:[#allocation3] sm:$0xf0] %vm506, %v1658
    %v1661 = vpack.c.bf16 %v1644, %v1644
    %1663 = vrot.lane.b32.xlu0 %v1661, 64
    %v1664 = vpop.permute.xlu0 %1663
    %1666 = vst.msk [vmem:[#allocation3 + $0x18] sm:$0xf] %vm513, %v1664
    %v1667 = vpack.c.bf16 %v1653, %v1653
    %v1669 = vsel %vm273, %v1667, 0
    %1671 = vmatprep.subr.bf16.mxu0 %v1418
    %1672 = vmatpush1.bf16.msra.mxu0 %v1417
    %1673 = vmatprep.subr.bf16.mxu0 %v1420
    %1674 = vmatpush1.bf16.msra.mxu0 %v1419
    %1675 = vmatprep.subr.bf16.mxu0 %v1422
    %1676 = vmatpush1.bf16.msra.mxu0 %v1421
    %1677 = vmatprep.subr.bf16.mxu0 %v1424
    %1678 = vmatpush1.bf16.msra.mxu0 %v1423
    %1679 = vmatprep.subr.bf16.mxu0 0
    %1680 = vmatpush1.bf16.msra.mxu0 0
    %1681 = vmatprep.subr.bf16.mxu0 0
    %1682 = vmatpush1.bf16.msra.mxu0 0
    %1683 = vmatprep.subr.bf16.mxu0 0
    %1684 = vmatpush1.bf16.msra.mxu0 0
    %1685 = vmatprep.subr.bf16.mxu0 0
    %1686 = vmatpush1.bf16.msra.mxu0 0
    %1687 = vmatprep.subr.bf16.mxu0 0
    %1688 = vmatpush1.bf16.msra.mxu0 0
    %1689 = vmatprep.subr.bf16.mxu0 0
    %1690 = vmatpush1.bf16.msra.mxu0 0
    %1691 = vmatprep.subr.bf16.mxu0 0
    %1692 = vmatpush1.bf16.msra.mxu0 0
    %1693 = vmatprep.subr.bf16.mxu0 0
    %1694 = vmatpush1.bf16.msra.mxu0 0
    %1695 = vmatprep.subr.bf16.mxu0 0
    %1696 = vmatpush1.bf16.msra.mxu0 0
    %1697 = vmatprep.subr.bf16.mxu0 0
    %1698 = vmatpush1.bf16.msra.mxu0 0
    %1699 = vmatprep.subr.bf16.mxu0 0
    %1700 = vmatpush1.bf16.msra.mxu0 0
    %1701 = vmatprep.subr.bf16.mxu0 0
    %1702 = vmatpush1.bf16.msra.mxu0 0
    %1703 = vmatprep.mubr.bf16.mxu0 0
    %1704 = vmatmul.mubr.bf16.gmra.mrb[0].mxu0 %v1669
    %v1705 = vpop.f32.mrb[0].mxu0
    %v1706 = vadd.f32 0.0, %v1705
    %v1707 = vpop.f32.mrb[0].mxu0
    %v1708 = vadd.f32 0.0, %v1707
    %v1709 = vpop.f32.mrb[0].mxu0
    %v1710 = vpop.f32.mrb[0].mxu0
    %1711 = vdwg.mxu0
    %v1712 = vld [vmem:[#allocation2 + $0x20] sm:$0xff]
    %v1713 = vld [vmem:[#allocation2 + $0x58] sm:$0xff]
    %v1714 = vadd.f32 %v1712, %v1706
    %v1715 = vadd.f32 %v1713, %v1708
    %v1716 = vxor.u32 %v1714, 2147483648
    %v1717 = vxor.u32 %v1715, 2147483648
    %v1718 = vmul.f32 %v1716, 1.442695
    %v1719 = vpow.pop %v1718
    %v1720 = vmul.f32 %v1717, 1.442695
    %v1721 = vpow.pop %v1720
    %v1722 = vadd.f32 %v1719, 1.0
    %v1723 = vadd.f32 %v1721, 1.0
    %v1724 = vrcp.pop %v1722
    %v1725 = vmul.f32 1.0, %v1724
    %v1726 = vrcp.pop %v1723
    %v1727 = vmul.f32 1.0, %v1726
    %v1728 = vtanh.pop %v1714
    %v1729 = vtanh.pop %v1715
    %v1730 = vmul.f32 %v1725, %v1621
    %1732 = vrot.lane.b32.xlu0 %v1728, 64
    %v1733 = vpop.permute.xlu0 %1732
    %v1735 = vmul.f32 %v1725, %v1733
    %1737 = vrot.lane.b32.xlu0 %v1735, 32
    %v1738 = vpop.permute.xlu0 %1737
    %v1740 = vadd.f32 %v1730, %v1738
    %v1741 = vmul.f32 %v1727, %v1632
    %1743 = vrot.lane.b32.xlu0 %v1729, 64
    %v1744 = vpop.permute.xlu0 %1743
    %v1746 = vmul.f32 %v1727, %v1744
    %1748 = vrot.lane.b32.xlu0 %v1746, 32
    %v1749 = vpop.permute.xlu0 %1748
    %v1751 = vadd.f32 %v1741, %v1749
    %v1752 = vtanh.pop %v1740
    %1754 = vrot.lane.b32.xlu0 %v1752, 64
    %v1755 = vpop.permute.xlu0 %1754
    %v1757 = vmul.f32 %v1725, %v1755
    %v1758 = vtanh.pop %v1751
    %1760 = vrot.lane.b32.xlu0 %v1758, 64
    %v1761 = vpop.permute.xlu0 %1760
    %v1763 = vmul.f32 %v1727, %v1761
    %1765 = vrot.lane.b32.xlu0 %v1757, 32
    %v1766 = vpop.permute.xlu0 %1765
    %1769 = vrot.lane.b32.xlu0 %v1763, 64
    %v1770 = vpop.permute.xlu0 %1769
    %v1772 = vsel %vm123, %v1766, %v1770
    %v1773 = vpack.c.bf16 %v1757, %v1757
    %1775 = vrot.lane.b32.xlu0 %v1773, 32
    %v1776 = vpop.permute.xlu0 %1775
    %1778 = vst.msk [vmem:[#allocation3 + $0x8] sm:$0xf] %vm384, %v1776
    %v1779 = vpack.c.bf16 %v1763, %v1763
    %v1781 = vrot.slane %v1779, 4
    %1782 = vrot.lane.b32.xlu0 %v1781, 64
    %v1783 = vpop.permute.xlu0 %1782
    %1785 = vst.msk [vmem:[#allocation3 + $0x10] sm:$0xf0] %vm392, %v1783
    %v1786 = vpack.c.bf16 %v1772, %v1772
    %v1788 = vsel %vm273, %v1786, 0
    %1790 = vmatprep.subr.bf16.mxu0 %v1418
    %1791 = vmatpush1.bf16.msra.mxu0 %v1417
    %1792 = vmatprep.subr.bf16.mxu0 %v1420
    %1793 = vmatpush1.bf16.msra.mxu0 %v1419
    %1794 = vmatprep.subr.bf16.mxu0 %v1422
    %1795 = vmatpush1.bf16.msra.mxu0 %v1421
    %1796 = vmatprep.subr.bf16.mxu0 %v1424
    %1797 = vmatpush1.bf16.msra.mxu0 %v1423
    %1798 = vmatprep.subr.bf16.mxu0 0
    %1799 = vmatpush1.bf16.msra.mxu0 0
    %1800 = vmatprep.subr.bf16.mxu0 0
    %1801 = vmatpush1.bf16.msra.mxu0 0
    %1802 = vmatprep.subr.bf16.mxu0 0
    %1803 = vmatpush1.bf16.msra.mxu0 0
    %1804 = vmatprep.subr.bf16.mxu0 0
    %1805 = vmatpush1.bf16.msra.mxu0 0
    %1806 = vmatprep.subr.bf16.mxu0 0
    %1807 = vmatpush1.bf16.msra.mxu0 0
    %1808 = vmatprep.subr.bf16.mxu0 0
    %1809 = vmatpush1.bf16.msra.mxu0 0
    %1810 = vmatprep.subr.bf16.mxu0 0
    %1811 = vmatpush1.bf16.msra.mxu0 0
    %1812 = vmatprep.subr.bf16.mxu0 0
    %1813 = vmatpush1.bf16.msra.mxu0 0
    %1814 = vmatprep.subr.bf16.mxu0 0
    %1815 = vmatpush1.bf16.msra.mxu0 0
    %1816 = vmatprep.subr.bf16.mxu0 0
    %1817 = vmatpush1.bf16.msra.mxu0 0
    %1818 = vmatprep.subr.bf16.mxu0 0
    %1819 = vmatpush1.bf16.msra.mxu0 0
    %1820 = vmatprep.subr.bf16.mxu0 0
    %1821 = vmatpush1.bf16.msra.mxu0 0
    %1822 = vmatprep.mubr.bf16.mxu0 0
    %1823 = vmatmul.mubr.bf16.gmra.mrb[0].mxu0 %v1788
    %v1824 = vpop.f32.mrb[0].mxu0
    %v1825 = vadd.f32 0.0, %v1824
    %v1826 = vpop.f32.mrb[0].mxu0
    %v1827 = vadd.f32 0.0, %v1826
    %v1828 = vpop.f32.mrb[0].mxu0
    %v1829 = vpop.f32.mrb[0].mxu0
    %1830 = vdwg.mxu0
    %v1831 = vld [vmem:[#allocation2 + $0x30] sm:$0xff]
    %v1832 = vld [vmem:[#allocation2 + $0x48] sm:$0xff]
    %v1833 = vadd.f32 %v1831, %v1825
    %v1834 = vadd.f32 %v1832, %v1827
    %v1835 = vxor.u32 %v1833, 2147483648
    %v1836 = vxor.u32 %v1834, 2147483648
    %v1837 = vmul.f32 %v1835, 1.442695
    %v1838 = vpow.pop %v1837
    %v1839 = vmul.f32 %v1836, 1.442695
    %v1840 = vpow.pop %v1839
    %v1841 = vadd.f32 %v1838, 1.0
    %v1842 = vadd.f32 %v1840, 1.0
    %v1843 = vrcp.pop %v1841
    %v1844 = vmul.f32 1.0, %v1843
    %v1845 = vrcp.pop %v1842
    %v1846 = vmul.f32 1.0, %v1845
    %v1847 = vtanh.pop %v1833
    %v1848 = vtanh.pop %v1834
    %v1849 = vmul.f32 %v1844, %v1740
    %1851 = vrot.lane.b32.xlu0 %v1847, 64
    %v1852 = vpop.permute.xlu0 %1851
    %v1854 = vmul.f32 %v1844, %v1852
    %1856 = vrot.lane.b32.xlu0 %v1854, 32
    %v1857 = vpop.permute.xlu0 %1856
    %v1859 = vadd.f32 %v1849, %v1857
    %v1860 = vmul.f32 %v1846, %v1751
    %1862 = vrot.lane.b32.xlu0 %v1848, 64
    %v1863 = vpop.permute.xlu0 %1862
    %v1865 = vmul.f32 %v1846, %v1863
    %1867 = vrot.lane.b32.xlu0 %v1865, 32
    %v1868 = vpop.permute.xlu0 %1867
    %v1870 = vadd.f32 %v1860, %v1868
    %v1871 = vtanh.pop %v1859
    %1873 = vrot.lane.b32.xlu0 %v1871, 64
    %v1874 = vpop.permute.xlu0 %1873
    %v1876 = vmul.f32 %v1844, %v1874
    %v1877 = vtanh.pop %v1870
    %1879 = vrot.lane.b32.xlu0 %v1877, 64
    %v1880 = vpop.permute.xlu0 %1879
    %v1882 = vmul.f32 %v1846, %v1880
    %1884 = vrot.lane.b32.xlu0 %v1876, 32
    %v1885 = vpop.permute.xlu0 %1884
    %1888 = vrot.lane.b32.xlu0 %v1882, 64
    %v1889 = vpop.permute.xlu0 %1888
    %v1891 = vsel %vm123, %v1885, %v1889
    %v1892 = vpack.c.bf16 %v1876, %v1876
    %v1894 = vrot.slane %v1892, 4
    %1895 = vrot.lane.b32.xlu0 %v1894, 32
    %v1896 = vpop.permute.xlu0 %1895
    %1898 = vst.msk [vmem:[#allocation3 + $0x8] sm:$0xf0] %vm506, %v1896
    %v1899 = vpack.c.bf16 %v1882, %v1882
    %1901 = vrot.lane.b32.xlu0 %v1899, 64
    %v1902 = vpop.permute.xlu0 %1901
    %1904 = vst.msk [vmem:[#allocation3 + $0x10] sm:$0xf] %vm513, %v1902
    %v1905 = vpack.c.bf16 %v1891, %v1891
    %v1907 = vsel %vm273, %v1905, 0
    %1909 = vmatprep.subr.bf16.mxu0 %v1418
    %1910 = vmatpush1.bf16.msra.mxu0 %v1417
    %1911 = vmatprep.subr.bf16.mxu0 %v1420
    %1912 = vmatpush1.bf16.msra.mxu0 %v1419
    %1913 = vmatprep.subr.bf16.mxu0 %v1422
    %1914 = vmatpush1.bf16.msra.mxu0 %v1421
    %1915 = vmatprep.subr.bf16.mxu0 %v1424
    %1916 = vmatpush1.bf16.msra.mxu0 %v1423
    %1917 = vmatprep.subr.bf16.mxu0 0
    %1918 = vmatpush1.bf16.msra.mxu0 0
    %1919 = vmatprep.subr.bf16.mxu0 0
    %1920 = vmatpush1.bf16.msra.mxu0 0
    %1921 = vmatprep.subr.bf16.mxu0 0
    %1922 = vmatpush1.bf16.msra.mxu0 0
    %1923 = vmatprep.subr.bf16.mxu0 0
    %1924 = vmatpush1.bf16.msra.mxu0 0
    %1925 = vmatprep.subr.bf16.mxu0 0
    %1926 = vmatpush1.bf16.msra.mxu0 0
    %1927 = vmatprep.subr.bf16.mxu0 0
    %1928 = vmatpush1.bf16.msra.mxu0 0
    %1929 = vmatprep.subr.bf16.mxu0 0
    %1930 = vmatpush1.bf16.msra.mxu0 0
    %1931 = vmatprep.subr.bf16.mxu0 0
    %1932 = vmatpush1.bf16.msra.mxu0 0
    %1933 = vmatprep.subr.bf16.mxu0 0
    %1934 = vmatpush1.bf16.msra.mxu0 0
    %1935 = vmatprep.subr.bf16.mxu0 0
    %1936 = vmatpush1.bf16.msra.mxu0 0
    %1937 = vmatprep.subr.bf16.mxu0 0
    %1938 = vmatpush1.bf16.msra.mxu0 0
    %1939 = vmatprep.subr.bf16.mxu0 0
    %1940 = vmatpush1.bf16.msra.mxu0 0
    %1941 = vmatprep.mubr.bf16.mxu0 0
    %1942 = vmatmul.mubr.bf16.gmra.mrb[0].mxu0 %v1907
    %v1943 = vpop.f32.mrb[0].mxu0
    %v1944 = vadd.f32 0.0, %v1943
    %v1945 = vpop.f32.mrb[0].mxu0
    %v1946 = vadd.f32 0.0, %v1945
    %v1947 = vpop.f32.mrb[0].mxu0
    %v1948 = vpop.f32.mrb[0].mxu0
    %1949 = vdwg.mxu0
    %v1950 = vld [vmem:[#allocation2 + $0x40] sm:$0xff]
    %v1951 = vld [vmem:[#allocation2 + $0x38] sm:$0xff]
    %v1952 = vadd.f32 %v1950, %v1944
    %v1953 = vadd.f32 %v1951, %v1946
    %v1954 = vxor.u32 %v1952, 2147483648
    %v1955 = vxor.u32 %v1953, 2147483648
    %v1956 = vmul.f32 %v1954, 1.442695
    %v1957 = vpow.pop %v1956
    %v1958 = vmul.f32 %v1955, 1.442695
    %v1959 = vpow.pop %v1958
    %v1960 = vadd.f32 %v1957, 1.0
    %v1961 = vadd.f32 %v1959, 1.0
    %v1962 = vrcp.pop %v1960
    %v1963 = vmul.f32 1.0, %v1962
    %v1964 = vrcp.pop %v1961
    %v1965 = vmul.f32 1.0, %v1964
    %v1966 = vtanh.pop %v1952
    %v1967 = vtanh.pop %v1953
    %v1968 = vmul.f32 %v1963, %v1859
    %1970 = vrot.lane.b32.xlu0 %v1966, 64
    %v1971 = vpop.permute.xlu0 %1970
    %v1973 = vmul.f32 %v1963, %v1971
    %1975 = vrot.lane.b32.xlu0 %v1973, 32
    %v1976 = vpop.permute.xlu0 %1975
    %v1978 = vadd.f32 %v1968, %v1976
    %v1979 = vmul.f32 %v1965, %v1870
    %1981 = vrot.lane.b32.xlu0 %v1967, 64
    %v1982 = vpop.permute.xlu0 %1981
    %v1984 = vmul.f32 %v1965, %v1982
    %1986 = vrot.lane.b32.xlu0 %v1984, 32
    %v1987 = vpop.permute.xlu0 %1986
    %v1989 = vadd.f32 %v1979, %v1987
    %v1990 = vtanh.pop %v1978
    %1992 = vrot.lane.b32.xlu0 %v1990, 64
    %v1993 = vpop.permute.xlu0 %1992
    %v1995 = vmul.f32 %v1963, %v1993
    %v1996 = vtanh.pop %v1989
    %1998 = vrot.lane.b32.xlu0 %v1996, 64
    %v1999 = vpop.permute.xlu0 %1998
    %v2001 = vmul.f32 %v1965, %v1999
    %2003 = vrot.lane.b32.xlu0 %v1995, 32
    %v2004 = vpop.permute.xlu0 %2003
    %2007 = vrot.lane.b32.xlu0 %v2001, 64
    %v2008 = vpop.permute.xlu0 %2007
    %v2010 = vsel %vm123, %v2004, %v2008
    %v2011 = vpack.c.bf16 %v1995, %v1995
    %2013 = vrot.lane.b32.xlu0 %v2011, 32
    %v2014 = vpop.permute.xlu0 %2013
    %2016 = vst.msk [vmem:[#allocation3 + $0x10] sm:$0xf] %vm384, %v2014
    %v2017 = vpack.c.bf16 %v2001, %v2001
    %v2019 = vrot.slane %v2017, 4
    %2020 = vrot.lane.b32.xlu0 %v2019, 64
    %v2021 = vpop.permute.xlu0 %2020
    %2023 = vst.msk [vmem:[#allocation3 + $0x8] sm:$0xf0] %vm392, %v2021
    %v2024 = vpack.c.bf16 %v2010, %v2010
    %v2026 = vsel %vm273, %v2024, 0
    %2028 = vmatprep.subr.bf16.mxu0 %v1418
    %2029 = vmatpush1.bf16.msra.mxu0 %v1417
    %2030 = vmatprep.subr.bf16.mxu0 %v1420
    %2031 = vmatpush1.bf16.msra.mxu0 %v1419
    %2032 = vmatprep.subr.bf16.mxu0 %v1422
    %2033 = vmatpush1.bf16.msra.mxu0 %v1421
    %2034 = vmatprep.subr.bf16.mxu0 %v1424
    %2035 = vmatpush1.bf16.msra.mxu0 %v1423
    %2036 = vmatprep.subr.bf16.mxu0 0
    %2037 = vmatpush1.bf16.msra.mxu0 0
    %2038 = vmatprep.subr.bf16.mxu0 0
    %2039 = vmatpush1.bf16.msra.mxu0 0
    %2040 = vmatprep.subr.bf16.mxu0 0
    %2041 = vmatpush1.bf16.msra.mxu0 0
    %2042 = vmatprep.subr.bf16.mxu0 0
    %2043 = vmatpush1.bf16.msra.mxu0 0
    %2044 = vmatprep.subr.bf16.mxu0 0
    %2045 = vmatpush1.bf16.msra.mxu0 0
    %2046 = vmatprep.subr.bf16.mxu0 0
    %2047 = vmatpush1.bf16.msra.mxu0 0
    %2048 = vmatprep.subr.bf16.mxu0 0
    %2049 = vmatpush1.bf16.msra.mxu0 0
    %2050 = vmatprep.subr.bf16.mxu0 0
    %2051 = vmatpush1.bf16.msra.mxu0 0
    %2052 = vmatprep.subr.bf16.mxu0 0
    %2053 = vmatpush1.bf16.msra.mxu0 0
    %2054 = vmatprep.subr.bf16.mxu0 0
    %2055 = vmatpush1.bf16.msra.mxu0 0
    %2056 = vmatprep.subr.bf16.mxu0 0
    %2057 = vmatpush1.bf16.msra.mxu0 0
    %2058 = vmatprep.subr.bf16.mxu0 0
    %2059 = vmatpush1.bf16.msra.mxu0 0
    %2060 = vmatprep.mubr.bf16.mxu0 0
    %2061 = vmatmul.mubr.bf16.gmra.mrb[0].mxu0 %v2026
    %v2062 = vpop.f32.mrb[0].mxu0
    %v2063 = vadd.f32 0.0, %v2062
    %v2064 = vpop.f32.mrb[0].mxu0
    %v2065 = vadd.f32 0.0, %v2064
    %v2066 = vpop.f32.mrb[0].mxu0
    %v2067 = vpop.f32.mrb[0].mxu0
    %2068 = vdwg.mxu0
    %v2069 = vld [vmem:[#allocation2 + $0x50] sm:$0xff]
    %v2070 = vld [vmem:[#allocation2 + $0x28] sm:$0xff]
    %v2071 = vadd.f32 %v2069, %v2063
    %v2072 = vadd.f32 %v2070, %v2065
    %v2073 = vxor.u32 %v2071, 2147483648
    %v2074 = vxor.u32 %v2072, 2147483648
    %v2075 = vmul.f32 %v2073, 1.442695
    %v2076 = vpow.pop %v2075
    %v2077 = vmul.f32 %v2074, 1.442695
    %v2078 = vpow.pop %v2077
    %v2079 = vadd.f32 %v2076, 1.0
    %v2080 = vadd.f32 %v2078, 1.0
    %v2081 = vrcp.pop %v2079
    %v2082 = vmul.f32 1.0, %v2081
    %v2083 = vrcp.pop %v2080
    %v2084 = vmul.f32 1.0, %v2083
    %v2085 = vtanh.pop %v2071
    %v2086 = vtanh.pop %v2072
    %v2087 = vmul.f32 %v2082, %v1978
    %2089 = vrot.lane.b32.xlu0 %v2085, 64
    %v2090 = vpop.permute.xlu0 %2089
    %v2092 = vmul.f32 %v2082, %v2090
    %2094 = vrot.lane.b32.xlu0 %v2092, 32
    %v2095 = vpop.permute.xlu0 %2094
    %v2097 = vadd.f32 %v2087, %v2095
    %v2098 = vmul.f32 %v2084, %v1989
    %2100 = vrot.lane.b32.xlu0 %v2086, 64
    %v2101 = vpop.permute.xlu0 %2100
    %v2103 = vmul.f32 %v2084, %v2101
    %2105 = vrot.lane.b32.xlu0 %v2103, 32
    %v2106 = vpop.permute.xlu0 %2105
    %v2108 = vadd.f32 %v2098, %v2106
    %v2109 = vtanh.pop %v2097
    %2111 = vrot.lane.b32.xlu0 %v2109, 64
    %v2112 = vpop.permute.xlu0 %2111
    %v2114 = vmul.f32 %v2082, %v2112
    %v2115 = vtanh.pop %v2108
    %2117 = vrot.lane.b32.xlu0 %v2115, 64
    %v2118 = vpop.permute.xlu0 %2117
    %v2120 = vmul.f32 %v2084, %v2118
    %2122 = vrot.lane.b32.xlu0 %v2114, 32
    %v2123 = vpop.permute.xlu0 %2122
    %2126 = vrot.lane.b32.xlu0 %v2120, 64
    %v2127 = vpop.permute.xlu0 %2126
    %v2129 = vsel %vm123, %v2123, %v2127
    %v2130 = vpack.c.bf16 %v2114, %v2114
    %v2132 = vrot.slane %v2130, 4
    %2133 = vrot.lane.b32.xlu0 %v2132, 32
    %v2134 = vpop.permute.xlu0 %2133
    %2136 = vst.msk [vmem:[#allocation3 + $0x10] sm:$0xf0] %vm506, %v2134
    %v2137 = vpack.c.bf16 %v2120, %v2120
    %2139 = vrot.lane.b32.xlu0 %v2137, 64
    %v2140 = vpop.permute.xlu0 %2139
    %2142 = vst.msk [vmem:[#allocation3 + $0x8] sm:$0xf] %vm513, %v2140
    %v2143 = vpack.c.bf16 %v2129, %v2129
    %v2145 = vsel %vm273, %v2143, 0
    %2147 = vmatprep.subr.bf16.mxu0 %v1418
    %2148 = vmatpush1.bf16.msra.mxu0 %v1417
    %2149 = vmatprep.subr.bf16.mxu0 %v1420
    %2150 = vmatpush1.bf16.msra.mxu0 %v1419
    %2151 = vmatprep.subr.bf16.mxu0 %v1422
    %2152 = vmatpush1.bf16.msra.mxu0 %v1421
    %2153 = vmatprep.subr.bf16.mxu0 %v1424
    %2154 = vmatpush1.bf16.msra.mxu0 %v1423
    %2155 = vmatprep.subr.bf16.mxu0 0
    %2156 = vmatpush1.bf16.msra.mxu0 0
    %2157 = vmatprep.subr.bf16.mxu0 0
    %2158 = vmatpush1.bf16.msra.mxu0 0
    %2159 = vmatprep.subr.bf16.mxu0 0
    %2160 = vmatpush1.bf16.msra.mxu0 0
    %2161 = vmatprep.subr.bf16.mxu0 0
    %2162 = vmatpush1.bf16.msra.mxu0 0
    %2163 = vmatprep.subr.bf16.mxu0 0
    %2164 = vmatpush1.bf16.msra.mxu0 0
    %2165 = vmatprep.subr.bf16.mxu0 0
    %2166 = vmatpush1.bf16.msra.mxu0 0
    %2167 = vmatprep.subr.bf16.mxu0 0
    %2168 = vmatpush1.bf16.msra.mxu0 0
    %2169 = vmatprep.subr.bf16.mxu0 0
    %2170 = vmatpush1.bf16.msra.mxu0 0
    %2171 = vmatprep.subr.bf16.mxu0 0
    %2172 = vmatpush1.bf16.msra.mxu0 0
    %2173 = vmatprep.subr.bf16.mxu0 0
    %2174 = vmatpush1.bf16.msra.mxu0 0
    %2175 = vmatprep.subr.bf16.mxu0 0
    %2176 = vmatpush1.bf16.msra.mxu0 0
    %2177 = vmatprep.subr.bf16.mxu0 0
    %2178 = vmatpush1.bf16.msra.mxu0 0
    %2179 = vmatprep.mubr.bf16.mxu0 0
    %2180 = vmatmul.mubr.bf16.gmra.mrb[0].mxu0 %v2145
    %v2181 = vpop.f32.mrb[0].mxu0
    %v2182 = vadd.f32 0.0, %v2181
    %v2183 = vpop.f32.mrb[0].mxu0
    %v2184 = vadd.f32 0.0, %v2183
    %v2185 = vpop.f32.mrb[0].mxu0
    %v2186 = vpop.f32.mrb[0].mxu0
    %2187 = vdwg.mxu0
    %v2188 = vld [vmem:[#allocation2 + $0x60] sm:$0xff]
    %v2189 = vld [vmem:[#allocation2 + $0x18] sm:$0xff]
    %v2190 = vadd.f32 %v2188, %v2182
    %v2191 = vadd.f32 %v2189, %v2184
    %v2192 = vxor.u32 %v2190, 2147483648
    %v2193 = vxor.u32 %v2191, 2147483648
    %v2194 = vmul.f32 %v2192, 1.442695
    %v2195 = vpow.pop %v2194
    %v2196 = vmul.f32 %v2193, 1.442695
    %v2197 = vpow.pop %v2196
    %v2198 = vadd.f32 %v2195, 1.0
    %v2199 = vadd.f32 %v2197, 1.0
    %v2200 = vrcp.pop %v2198
    %v2201 = vmul.f32 1.0, %v2200
    %v2202 = vrcp.pop %v2199
    %v2203 = vmul.f32 1.0, %v2202
    %v2204 = vtanh.pop %v2190
    %v2205 = vtanh.pop %v2191
    %v2206 = vmul.f32 %v2201, %v2097
    %2208 = vrot.lane.b32.xlu0 %v2204, 64
    %v2209 = vpop.permute.xlu0 %2208
    %v2211 = vmul.f32 %v2201, %v2209
    %2213 = vrot.lane.b32.xlu0 %v2211, 32
    %v2214 = vpop.permute.xlu0 %2213
    %v2216 = vadd.f32 %v2206, %v2214
    %v2217 = vmul.f32 %v2203, %v2108
    %2219 = vrot.lane.b32.xlu0 %v2205, 64
    %v2220 = vpop.permute.xlu0 %2219
    %v2222 = vmul.f32 %v2203, %v2220
    %2224 = vrot.lane.b32.xlu0 %v2222, 32
    %v2225 = vpop.permute.xlu0 %2224
    %v2227 = vadd.f32 %v2217, %v2225
    %v2228 = vtanh.pop %v2216
    %2230 = vrot.lane.b32.xlu0 %v2228, 64
    %v2231 = vpop.permute.xlu0 %2230
    %v2233 = vmul.f32 %v2201, %v2231
    %v2234 = vtanh.pop %v2227
    %2236 = vrot.lane.b32.xlu0 %v2234, 64
    %v2237 = vpop.permute.xlu0 %2236
    %v2239 = vmul.f32 %v2203, %v2237
    %2241 = vrot.lane.b32.xlu0 %v2233, 32
    %v2242 = vpop.permute.xlu0 %2241
    %2245 = vrot.lane.b32.xlu0 %v2239, 64
    %v2246 = vpop.permute.xlu0 %2245
    %v2248 = vsel %vm123, %v2242, %v2246
    %v2249 = vpack.c.bf16 %v2233, %v2233
    %2251 = vrot.lane.b32.xlu0 %v2249, 32
    %v2252 = vpop.permute.xlu0 %2251
    %2254 = vst.msk [vmem:[#allocation3 + $0x18] sm:$0xf] %vm384, %v2252
    %v2255 = vpack.c.bf16 %v2239, %v2239
    %v2257 = vrot.slane %v2255, 4
    %2258 = vrot.lane.b32.xlu0 %v2257, 64
    %v2259 = vpop.permute.xlu0 %2258
    %2261 = vst.msk [vmem:[#allocation3] sm:$0xf0] %vm392, %v2259
    %v2262 = vpack.c.bf16 %v2248, %v2248
    %v2264 = vsel %vm273, %v2262, 0
    %2266 = vmatprep.subr.bf16.mxu0 %v1418
    %2267 = vmatpush1.bf16.msra.mxu0 %v1417
    %2268 = vmatprep.subr.bf16.mxu0 %v1420
    %2269 = vmatpush1.bf16.msra.mxu0 %v1419
    %2270 = vmatprep.subr.bf16.mxu0 %v1422
    %2271 = vmatpush1.bf16.msra.mxu0 %v1421
    %2272 = vmatprep.subr.bf16.mxu0 %v1424
    %2273 = vmatpush1.bf16.msra.mxu0 %v1423
    %2274 = vmatprep.subr.bf16.mxu0 0
    %2275 = vmatpush1.bf16.msra.mxu0 0
    %2276 = vmatprep.subr.bf16.mxu0 0
    %2277 = vmatpush1.bf16.msra.mxu0 0
    %2278 = vmatprep.subr.bf16.mxu0 0
    %2279 = vmatpush1.bf16.msra.mxu0 0
    %2280 = vmatprep.subr.bf16.mxu0 0
    %2281 = vmatpush1.bf16.msra.mxu0 0
    %2282 = vmatprep.subr.bf16.mxu0 0
    %2283 = vmatpush1.bf16.msra.mxu0 0
    %2284 = vmatprep.subr.bf16.mxu0 0
    %2285 = vmatpush1.bf16.msra.mxu0 0
    %2286 = vmatprep.subr.bf16.mxu0 0
    %2287 = vmatpush1.bf16.msra.mxu0 0
    %2288 = vmatprep.subr.bf16.mxu0 0
    %2289 = vmatpush1.bf16.msra.mxu0 0
    %2290 = vmatprep.subr.bf16.mxu0 0
    %2291 = vmatpush1.bf16.msra.mxu0 0
    %2292 = vmatprep.subr.bf16.mxu0 0
    %2293 = vmatpush1.bf16.msra.mxu0 0
    %2294 = vmatprep.subr.bf16.mxu0 0
    %2295 = vmatpush1.bf16.msra.mxu0 0
    %2296 = vmatprep.subr.bf16.mxu0 0
    %2297 = vmatpush1.bf16.msra.mxu0 0
    %2298 = vmatprep.mubr.bf16.mxu0 0
    %2299 = vmatmul.mubr.bf16.gmra.mrb[0].mxu0 %v2264
    %v2300 = vpop.f32.mrb[0].mxu0
    %v2301 = vadd.f32 0.0, %v2300
    %v2302 = vpop.f32.mrb[0].mxu0
    %v2303 = vadd.f32 0.0, %v2302
    %v2304 = vpop.f32.mrb[0].mxu0
    %v2305 = vpop.f32.mrb[0].mxu0
    %2306 = vdwg.mxu0
    %v2307 = vld [vmem:[#allocation2 + $0x70] sm:$0xff]
    %v2308 = vld [vmem:[#allocation2 + $0x8] sm:$0xff]
    %v2309 = vadd.f32 %v2307, %v2301
    %v2310 = vadd.f32 %v2308, %v2303
    %v2311 = vxor.u32 %v2309, 2147483648
    %v2312 = vxor.u32 %v2310, 2147483648
    %v2313 = vmul.f32 %v2311, 1.442695
    %v2314 = vpow.pop %v2313
    %v2315 = vmul.f32 %v2312, 1.442695
    %v2316 = vpow.pop %v2315
    %v2317 = vadd.f32 %v2314, 1.0
    %v2318 = vadd.f32 %v2316, 1.0
    %v2319 = vrcp.pop %v2317
    %v2320 = vmul.f32 1.0, %v2319
    %v2321 = vrcp.pop %v2318
    %v2322 = vmul.f32 1.0, %v2321
    %v2323 = vtanh.pop %v2309
    %v2324 = vtanh.pop %v2310
    %v2325 = vmul.f32 %v2320, %v2216
    %2327 = vrot.lane.b32.xlu0 %v2323, 64
    %v2328 = vpop.permute.xlu0 %2327
    %v2330 = vmul.f32 %v2320, %v2328
    %2332 = vrot.lane.b32.xlu0 %v2330, 32
    %v2333 = vpop.permute.xlu0 %2332
    %v2335 = vadd.f32 %v2325, %v2333
    %v2336 = vmul.f32 %v2322, %v2227
    %2338 = vrot.lane.b32.xlu0 %v2324, 64
    %v2339 = vpop.permute.xlu0 %2338
    %v2341 = vmul.f32 %v2322, %v2339
    %2343 = vrot.lane.b32.xlu0 %v2341, 32
    %v2344 = vpop.permute.xlu0 %2343
    %v2346 = vadd.f32 %v2336, %v2344
    %v2347 = vtanh.pop %v2335
    %2349 = vrot.lane.b32.xlu0 %v2347, 64
    %v2350 = vpop.permute.xlu0 %2349
    %v2352 = vmul.f32 %v2320, %v2350
    %v2353 = vtanh.pop %v2346
    %2355 = vrot.lane.b32.xlu0 %v2353, 64
    %v2356 = vpop.permute.xlu0 %2355
    %v2358 = vmul.f32 %v2322, %v2356
    %v2359 = vpack.c.bf16 %v2352, %v2352
    %v2361 = vrot.slane %v2359, 4
    %2362 = vrot.lane.b32.xlu0 %v2361, 32
    %v2363 = vpop.permute.xlu0 %2362
    %2365 = vst.msk [vmem:[#allocation3 + $0x18] sm:$0xf0] %vm506, %v2363
    %v2366 = vpack.c.bf16 %v2358, %v2358
    %2368 = vrot.lane.b32.xlu0 %v2366, 64
    %v2369 = vpop.permute.xlu0 %2368
    %2371 = vst.msk [vmem:[#allocation3] sm:$0xf] %vm513, %v2369
    %2373 = vrot.lane.b32.xlu0 %v2358, 32
    %v2374 = vpop.permute.xlu0 %2373
    %2377 = vrot.lane.b32.xlu0 %v2352, 64
    %v2378 = vpop.permute.xlu0 %2377
    %v2380 = vsel %vm123, %v2374, %v2378
    %v2381 = vld [vmem:[#allocation3] sm:$0xf]
    %v2382 = vunpack.c.l.bf16 %v2381
    %v2383 = vmul.f32 %v2382, %v2380
    %v2384 = vsel %vm273, %v2383, 0.0
    %2385 = vadd.xlane.f32.xlu0 %v2384
    %v2386 = vpop.xlane.xlu0 %2385
    %v2387 = vld [vmem:[#allocation3] sm:$0xf0]
    %v2389 = vrot.slane %v2387, 4
    %v2391 = vunpack.c.l.bf16 %v2389
    %v2392 = vmul.f32 %v2391, %v2380
    %v2393 = vsel %vm273, %v2392, 0.0
    %2394 = vadd.xlane.f32.xlu0 %v2393
    %v2395 = vpop.xlane.xlu0 %2394
    %v2396 = vld [vmem:[#allocation3 + $0x8] sm:$0xf]
    %v2397 = vunpack.c.l.bf16 %v2396
    %v2398 = vmul.f32 %v2397, %v2380
    %v2399 = vsel %vm273, %v2398, 0.0
    %2400 = vadd.xlane.f32.xlu0 %v2399
    %v2401 = vpop.xlane.xlu0 %2400
    %v2402 = vld [vmem:[#allocation3 + $0x8] sm:$0xf0]
    %v2404 = vrot.slane %v2402, 4
    %v2406 = vunpack.c.l.bf16 %v2404
    %v2407 = vmul.f32 %v2406, %v2380
    %v2408 = vsel %vm273, %v2407, 0.0
    %2409 = vadd.xlane.f32.xlu0 %v2408
    %v2410 = vpop.xlane.xlu0 %2409
    %v2411 = vld [vmem:[#allocation3 + $0x10] sm:$0xf]
    %v2412 = vunpack.c.l.bf16 %v2411
    %v2413 = vmul.f32 %v2412, %v2380
    %v2414 = vsel %vm273, %v2413, 0.0
    %2415 = vadd.xlane.f32.xlu0 %v2414
    %v2416 = vpop.xlane.xlu0 %2415
    %v2417 = vld [vmem:[#allocation3 + $0x10] sm:$0xf0]
    %v2419 = vrot.slane %v2417, 4
    %v2421 = vunpack.c.l.bf16 %v2419
    %v2422 = vmul.f32 %v2421, %v2380
    %v2423 = vsel %vm273, %v2422, 0.0
    %2424 = vadd.xlane.f32.xlu0 %v2423
    %v2425 = vpop.xlane.xlu0 %2424
    %v2426 = vld [vmem:[#allocation3 + $0x18] sm:$0xf]
    %v2427 = vunpack.c.l.bf16 %v2426
    %v2428 = vmul.f32 %v2427, %v2380
    %v2429 = vsel %vm273, %v2428, 0.0
    %2430 = vadd.xlane.f32.xlu0 %v2429
    %v2431 = vpop.xlane.xlu0 %2430
    %v2432 = vld [vmem:[#allocation3 + $0x18] sm:$0xf0]
    %v2434 = vrot.slane %v2432, 4
    %v2436 = vunpack.c.l.bf16 %v2434
    %v2437 = vmul.f32 %v2436, %v2380
    %v2438 = vsel %vm273, %v2437, 0.0
    %2439 = vadd.xlane.f32.xlu0 %v2438
    %v2440 = vpop.xlane.xlu0 %2439
    %vm2441 = vcmask 7168
    %v2442 = vsel %vm2441, %v2386, %v2395
    %vm2443 = vcmask 15360
    %v2444 = vsel %vm2443, %v2442, %v2401
    %vm2445 = vcmask 23552
    %v2446 = vsel %vm2445, %v2444, %v2410
    %vm2447 = vcmask 31744
    %v2448 = vsel %vm2447, %v2446, %v2416
    %vm2449 = vcmask 39936
    %v2450 = vsel %vm2449, %v2448, %v2425
    %vm2451 = vcmask 48128
    %v2452 = vsel %vm2451, %v2450, %v2431
    %vm2453 = vcmask 56320
    %v2454 = vsel %vm2453, %v2452, %v2440
    %vm2455 = vcmask 64512
    %v2456 = vsel %vm2455, %v2454, -inf
    %2457 = vmax.xlane.f32.xlu0 %v2456
    %v2458 = vpop.xlane.xlu0 %2457
    %v2459 = vsub.f32 %v2454, %v2458
    %v2460 = vmul.f32 %v2459, 1.442695
    %v2461 = vpow.pop %v2460
    %v2462 = vsel %vm2455, %v2461, 0.0
    %2463 = vadd.xlane.f32.xlu0 %v2462
    %v2464 = vpop.xlane.xlu0 %2463
    %v2465 = vrcp.pop %v2464
    %v2466 = vmul.f32 %v2461, %v2465
    %2468 = vset.pattern.permute.xlu0 0
    %2469 = vperm.xlu0 %2468, %v2466
    %v2470 = vpop.permute.xlu0 %2469
    %v2472 = vmul.f32 %v2382, %v2470
    %v2473 = vadd.f32 %v2472, 0.0
    %2474 = vset.pattern.permute.xlu0 1
    %2475 = vperm.xlu0 %2474, %v2466
    %v2476 = vpop.permute.xlu0 %2475
    %v2478 = vmul.f32 %v2391, %v2476
    %v2479 = vadd.f32 %v2473, %v2478
    %2480 = vset.pattern.permute.xlu0 2
    %2481 = vperm.xlu0 %2480, %v2466
    %v2482 = vpop.permute.xlu0 %2481
    %v2484 = vmul.f32 %v2397, %v2482
    %v2485 = vadd.f32 %v2479, %v2484
    %2486 = vset.pattern.permute.xlu0 3
    %2487 = vperm.xlu0 %2486, %v2466
    %v2488 = vpop.permute.xlu0 %2487
    %v2490 = vmul.f32 %v2406, %v2488
    %v2491 = vadd.f32 %v2485, %v2490
    %2492 = vset.pattern.permute.xlu0 4
    %2493 = vperm.xlu0 %2492, %v2466
    %v2494 = vpop.permute.xlu0 %2493
    %v2496 = vmul.f32 %v2412, %v2494
    %v2497 = vadd.f32 %v2491, %v2496
    %2498 = vset.pattern.permute.xlu0 5
    %2499 = vperm.xlu0 %2498, %v2466
    %v2500 = vpop.permute.xlu0 %2499
    %v2502 = vmul.f32 %v2421, %v2500
    %v2503 = vadd.f32 %v2497, %v2502
    %2504 = vset.pattern.permute.xlu0 6
    %2505 = vperm.xlu0 %2504, %v2466
    %v2506 = vpop.permute.xlu0 %2505
    %v2508 = vmul.f32 %v2427, %v2506
    %v2509 = vadd.f32 %v2503, %v2508
    %2510 = vset.pattern.permute.xlu0 7
    %2511 = vperm.xlu0 %2510, %v2466
    %v2512 = vpop.permute.xlu0 %2511
    %v2514 = vmul.f32 %v2436, %v2512
    %v2515 = vadd.f32 %v2509, %v2514
    %v2516 = vpack.c.bf16 %v2515, %v2515
    %v2517 = vld [vmem:[#allocation6] sm:$0xf]
    %v2518 = vld [vmem:[#allocation6 + $0x4] sm:$0xf]
    %v2519 = vld [vmem:[#allocation6 + $0x8] sm:$0xf]
    %v2520 = vld [vmem:[#allocation6 + $0xc] sm:$0xf]
    %v2521 = vld [vmem:[#allocation6 + $0x10] sm:$0xf]
    %v2522 = vld [vmem:[#allocation6 + $0x14] sm:$0xf]
    %v2523 = vld [vmem:[#allocation6 + $0x18] sm:$0xf]
    %v2524 = vld [vmem:[#allocation6 + $0x1c] sm:$0xf]
    %v2525 = vld [vmem:[%s8] sm:$0x1]
    %v2527 = vlaneseq
    %v2528 = vshrl.u32 %v2527, 7
    %v2529 = vsub.s32 0, %v2528
    %v2530 = vrot.slane %v2525, %v2529
    %v2540 = vunpack.c.l.b16 %v2517
    %v2541 = vunpack.c.l.b16 %v2518
    %v2542 = vunpack.c.l.b16 %v2519
    %v2543 = vunpack.c.l.b16 %v2520
    %v2544 = vunpack.c.l.b16 %v2521
    %v2545 = vunpack.c.l.b16 %v2522
    %v2546 = vunpack.c.l.b16 %v2523
    %v2547 = vunpack.c.l.b16 %v2524
    %v2548 = vpack.c.b16 %v2541, %v2540
    %v2549 = vpack.c.b16 %v2543, %v2542
    %v2550 = vpack.c.b16 %v2545, %v2544
    %v2551 = vpack.c.b16 %v2547, %v2546
    %v2557 = vsel %vm273, %v2516, 0
    %2559 = vmatprep.subr.bf16.mxu0 0
    %2560 = vmatpush1.bf16.msra.mxu0 %v2548
    %2561 = vmatprep.subr.bf16.mxu0 0
    %2562 = vmatpush1.bf16.msra.mxu0 %v2549
    %2563 = vmatprep.subr.bf16.mxu0 0
    %2564 = vmatpush1.bf16.msra.mxu0 %v2550
    %2565 = vmatprep.subr.bf16.mxu0 0
    %2566 = vmatpush1.bf16.msra.mxu0 %v2551
    %2567 = vmatprep.subr.bf16.mxu0 0
    %2568 = vmatpush1.bf16.msra.mxu0 0
    %2569 = vmatprep.subr.bf16.mxu0 0
    %2570 = vmatpush1.bf16.msra.mxu0 0
    %2571 = vmatprep.subr.bf16.mxu0 0
    %2572 = vmatpush1.bf16.msra.mxu0 0
    %2573 = vmatprep.subr.bf16.mxu0 0
    %2574 = vmatpush1.bf16.msra.mxu0 0
    %2575 = vmatprep.subr.bf16.mxu0 0
    %2576 = vmatpush1.bf16.msra.mxu0 0
    %2577 = vmatprep.subr.bf16.mxu0 0
    %2578 = vmatpush1.bf16.msra.mxu0 0
    %2579 = vmatprep.subr.bf16.mxu0 0
    %2580 = vmatpush1.bf16.msra.mxu0 0
    %2581 = vmatprep.subr.bf16.mxu0 0
    %2582 = vmatpush1.bf16.msra.mxu0 0
    %2583 = vmatprep.subr.bf16.mxu0 0
    %2584 = vmatpush1.bf16.msra.mxu0 0
    %2585 = vmatprep.subr.bf16.mxu0 0
    %2586 = vmatpush1.bf16.msra.mxu0 0
    %2587 = vmatprep.subr.bf16.mxu0 0
    %2588 = vmatpush1.bf16.msra.mxu0 0
    %2589 = vmatprep.subr.bf16.mxu0 0
    %2590 = vmatpush1.bf16.msra.mxu0 0
    %2591 = vmatprep.mubr.bf16.mxu0 0
    %2592 = vmatmul.mubr.bf16.gmra.mrb[0].mxu0 %v2557
    %v2593 = vpop.f32.mrb[0].mxu0
    %v2594 = vadd.f32 %v2530, %v2593
    %v2595 = vpop.f32.mrb[0].mxu0
    %v2596 = vpop.f32.mrb[0].mxu0
    %v2597 = vpop.f32.mrb[0].mxu0
    %2598 = vdwg.mxu0
    %v2599 = vxor.u32 %v2594, 2147483648
    %v2600 = vmul.f32 %v2599, 1.442695
    %v2601 = vpow.pop %v2600
    %v2602 = vadd.f32 %v2601, 1.0
    %v2603 = vrcp.pop %v2602
    %v2604 = vmul.f32 1.0, %v2603
    %2605 = vst [vmem:[%s9] sm:$0xff] %v2604
    // Predicated region
    $region46: #{nn_forward.1} parent=1 // pred_check
      _
    $region47: #{nn_forward.1} parent=1 // pred_check_branch
      %2607 = sbr.rel (0) target = $region49
    $region48: #{nn_forward.1} parent=1 // pred_region
      _
    $region49: #{nn_forward.1} parent=1 // pred_fallthru
      _
    // Predicated region
    $region50: #{nn_forward.1} parent=1 // pred_check
      _
    $region51: #{nn_forward.1} parent=1 // pred_check_branch
      %2609 = sbr.rel (0) target = $region53
    $region52: #{nn_forward.1} parent=1 // pred_region
      _
    $region53: #{nn_forward.1} parent=1 // pred_fallthru
      _
    %2610 = vsyncpa [#allocation5], 1
    %2611 = vsyncpa [#allocation7], 1

</llo_original>
